<compile_context>
chip_gen: v7x
topology: tpu7x:2x2x1
jax: 0.10.0
libtpu: 0.0.40
codegen_flags: <defaults>
</compile_context>

<pallas_src>
import functools

import jax
import jax.numpy as jnp
from jax.experimental import pallas as pl
from jax.experimental.pallas import tpu as pltpu


# ----------------------------------------------------------------------------
# Fused Bottleneck kernel (one grid step = one image)
# ----------------------------------------------------------------------------
def _bottleneck_kernel(x_ref, w1_ref, s1_ref, b1_ref, w2_ref, s2_ref, b2_ref,
                       o_ref, g_scr):
    _, H, W, C = x_ref.shape
    HW = H * W

    # ---- conv1 (1x1) + bn1 + relu  (1x1 conv == channel matmul) -------------
    x2d = x_ref[0].reshape(HW, C)                       # f32; clean reshape (W % 8 == 0)
    acc1 = jnp.dot(x2d.astype(jnp.bfloat16), w1_ref[...],
                   preferred_element_type=jnp.float32)
    h = jnp.maximum(acc1 * s1_ref[...] + b1_ref[...], 0.0)        # (HW, C) f32
    h3 = h.reshape(H, W, C)

    # ---- build three width-shifted copies of h ------------------------------
    # g_dj[r, c, :] = h[r, c + dj - 1, :]  (zero outside), dj in {0, 1, 2}.
    # One XLU roll + one VPU mask per copy (done once, not once per tap).
    col = jax.lax.broadcasted_iota(jnp.int32, (H, W, C), 1)
    g0 = jnp.where(col == 0, 0.0, pltpu.roll(h3, shift=1, axis=1))
    g2 = jnp.where(col == W - 1, 0.0, pltpu.roll(h3, shift=W - 1, axis=1))

    zrow = jnp.zeros((W, C), jnp.bfloat16)
    for dj, g in enumerate((g0, h3, g2)):
        g_scr[dj, 0] = zrow                              # top halo row (zero pad)
        g_scr[dj, H + 1] = zrow                          # bottom halo row
        g_scr[dj, pl.ds(1, H)] = g.astype(jnp.bfloat16)  # interior

    # ---- conv2 (3x3, pad=1) as 9 bf16 tap matmuls on the MXU ----------------
    # Each tap: row slice along a non-tiled major axis + layout-clean reshape.
    acc2 = jnp.zeros((HW, C), jnp.float32)
    for di in range(3):
        for dj in range(3):
            patch = g_scr[dj, pl.ds(di, H)].reshape(HW, C)        # bf16
            acc2 = acc2 + jnp.dot(patch, w2_ref[di, dj],
                                  preferred_element_type=jnp.float32)

    # ---- bn2 + residual add + relu ------------------------------------------
    res = x2d = x_ref[0].reshape(HW, C)    # re-read residual from the VMEM block
    y = jnp.maximum(acc2 * s2_ref[...] + b2_ref[...] + res, 0.0)
    o_ref[...] = y.reshape(1, H, W, C)


def bottleneck_forward_nhwc(x, params):
    """x: (N, H, W, C) float32 NHWC."""
    N, H, W, C = x.shape
    assert W % 8 == 0, "W must be a multiple of 8 for layout-clean reshapes"

    def const_spec(shape):
        return pl.BlockSpec(shape, lambda n, _s=shape: (0,) * len(_s))

    return pl.pallas_call(
        _bottleneck_kernel,
        out_shape=jax.ShapeDtypeStruct((N, H, W, C), jnp.float32),
        grid=(N,),
        in_specs=[
            pl.BlockSpec((1, H, W, C), lambda n: (n, 0, 0, 0)),   # x (also residual)
            const_spec((C, C)),                                   # w1  (bf16)
            const_spec((1, C)), const_spec((1, C)),               # bn1 scale / bias
            const_spec((3, 3, C, C)),                             # w2  (bf16)
            const_spec((1, C)), const_spec((1, C)),               # bn2 scale / bias
        ],
        out_specs=pl.BlockSpec((1, H, W, C), lambda n: (n, 0, 0, 0)),
        scratch_shapes=[pltpu.VMEM((3, H + 2, W, C), jnp.bfloat16)],
        compiler_params=pltpu.CompilerParams(
            dimension_semantics=("parallel",)),
    )(x, params['w1'], params['s1'], params['b1'],
      params['w2'], params['s2'], params['b2'])


def bottleneck_forward(x_nchw, params):
    """Public entry: NCHW in / NCHW out, like the PyTorch module."""
    x = jnp.transpose(x_nchw, (0, 2, 3, 1)).astype(jnp.float32)
    y = bottleneck_forward_nhwc(x, params)
    return jnp.transpose(y, (0, 3, 1, 2))


# ----------------------------------------------------------------------------
# Deterministic parameter construction (conv weights + biases + folded BN)
# ----------------------------------------------------------------------------
def init_bottleneck_params(key, c, eps=1e-5):
    k = jax.random.split(key, 8)
    w1 = jax.random.normal(k[0], (c, c), jnp.float32) / jnp.sqrt(c)           # 1x1, (Cin,Cout)
    b1c = 0.05 * jax.random.normal(k[1], (c,), jnp.float32)
    w2 = jax.random.normal(k[2], (3, 3, c, c), jnp.float32) / jnp.sqrt(9 * c)  # HWIO
    b2c = 0.05 * jax.random.normal(k[3], (c,), jnp.float32)
    g1 = 1.0 + 0.1 * jax.random.normal(k[4], (c,), jnp.float32)
    beta1 = 0.1 * jax.random.normal(k[5], (c,), jnp.float32)
    g2 = 1.0 + 0.1 * jax.random.normal(k[6], (c,), jnp.float32)
    beta2 = 0.1 * jax.random.normal(k[7], (c,), jnp.float32)

    # Inference-mode BN (mean=0, var=1) + conv bias folded into a per-channel affine.
    s1 = g1 / jnp.sqrt(1.0 + eps)
    bias1 = beta1 + b1c * s1
    s2 = g2 / jnp.sqrt(1.0 + eps)
    bias2 = beta2 + b2c * s2

    return {
        'w1': w1.astype(jnp.bfloat16),
        'w2': w2.astype(jnp.bfloat16),
        's1': s1.reshape(1, c), 'b1': bias1.reshape(1, c),
        's2': s2.reshape(1, c), 'b2': bias2.reshape(1, c),
        # full-precision copies for the pure-JAX reference check
        'w1_f32': w1, 'w2_f32': w2,
    }


# ----------------------------------------------------------------------------
# Pure-JAX reference (for a correctness check against the fused kernel)
# ----------------------------------------------------------------------------
def bottleneck_reference(x_nchw, p):
    x = jnp.transpose(x_nchw, (0, 2, 3, 1)).astype(jnp.float32)   # NHWC
    h = jnp.einsum('nhwc,cd->nhwd', x, p['w1_f32'],
                   precision=jax.lax.Precision.HIGHEST)
    h = jnp.maximum(h * p['s1'][0] + p['b1'][0], 0.0)
    y = jax.lax.conv_general_dilated(
        h, p['w2_f32'], window_strides=(1, 1), padding=((1, 1), (1, 1)),
        dimension_numbers=('NHWC', 'HWIO', 'NHWC'),
        precision=jax.lax.Precision.HIGHEST)
    y = jnp.maximum(y * p['s2'][0] + p['b2'][0] + x, 0.0)
    return jnp.transpose(y, (0, 3, 1, 2))


if __name__ == "__main__":
    key = jax.random.PRNGKey(0)
    k_param, k_x = jax.random.split(key)

    N, C, H, W = 2, 64, 16, 16              # small demo shapes (input_dim = 64)
    params = init_bottleneck_params(k_param, C)
    x = jax.random.normal(k_x, (N, C, H, W), jnp.float32)   # NCHW like PyTorch

    fwd = jax.jit(functools.partial(bottleneck_forward, params=params))
    out = jax.block_until_ready(fwd(x))

    assert out.shape == (N, C, H, W), out.shape
    assert out.dtype == jnp.float32

    ref = jax.block_until_ready(bottleneck_reference(x, params))
    err = float(jnp.max(jnp.abs(out - ref)))
    assert err < 0.2, f"max abs error vs reference: {err}"

    print("KERNEL_OK")
</pallas_src>

<mosaic_0001>
module attributes {stable_mosaic.version = 11 : i64} {
  func.func @_bottleneck_kernel(%arg0: i32, %arg1: memref<1x16x16x64xf32, #tpu.memory_space<vmem>>, %arg2: memref<64x64xbf16, #tpu.memory_space<vmem>>, %arg3: memref<1x64xf32, #tpu.memory_space<vmem>>, %arg4: memref<1x64xf32, #tpu.memory_space<vmem>>, %arg5: memref<3x3x64x64xbf16, #tpu.memory_space<vmem>>, %arg6: memref<1x64xf32, #tpu.memory_space<vmem>>, %arg7: memref<1x64xf32, #tpu.memory_space<vmem>>, %arg8: memref<1x16x16x64xf32, #tpu.memory_space<vmem>>, %arg9: memref<3x18x16x64xbf16, #tpu.memory_space<vmem>>) attributes {dimension_semantics = [#tpu.dimension_semantics<parallel>], iteration_bounds = array<i64: 2>, scalar_prefetch = 0 : i64, scratch_operands = 1 : i64, tpu.core_type = #tpu.core_type<tc>, window_params = [{transform_indices = @transform_0, window_bounds = array<i64: 1, 16, 16, 64>}, {pipeline_mode = #tpu.pipeline_mode<synchronous>, transform_indices = @transform_1, window_bounds = array<i64: 64, 64>}, {pipeline_mode = #tpu.pipeline_mode<synchronous>, transform_indices = @transform_2, window_bounds = array<i64: 1, 64>}, {pipeline_mode = #tpu.pipeline_mode<synchronous>, transform_indices = @transform_3, window_bounds = array<i64: 1, 64>}, {pipeline_mode = #tpu.pipeline_mode<synchronous>, transform_indices = @transform_4, window_bounds = array<i64: 3, 3, 64, 64>}, {pipeline_mode = #tpu.pipeline_mode<synchronous>, transform_indices = @transform_5, window_bounds = array<i64: 1, 64>}, {pipeline_mode = #tpu.pipeline_mode<synchronous>, transform_indices = @transform_6, window_bounds = array<i64: 1, 64>}, {transform_indices = @transform_7, window_bounds = array<i64: 1, 16, 16, 64>}]} {
    %c0 = arith.constant 0 : index
    %c0_0 = arith.constant 0 : index
    %c0_1 = arith.constant 0 : index
    %c0_2 = arith.constant 0 : index
    %0 = vector.load %arg1[%c0, %c0_0, %c0_1, %c0_2] : memref<1x16x16x64xf32, #tpu.memory_space<vmem>>, vector<1x16x16x64xf32>
    %1 = vector.shape_cast %0 : vector<1x16x16x64xf32> to vector<16x16x64xf32>
    %2 = vector.shape_cast %1 : vector<16x16x64xf32> to vector<256x64xf32>
    %3 = arith.truncf %2 : vector<256x64xf32> to vector<256x64xbf16>
    %c0_3 = arith.constant 0 : index
    %c0_4 = arith.constant 0 : index
    %4 = vector.load %arg2[%c0_3, %c0_4] : memref<64x64xbf16, #tpu.memory_space<vmem>>, vector<64x64xbf16>
    %cst = arith.constant dense<0.000000e+00> : vector<256x64xf32>
    %5 = tpu.matmul %3, %4, %cst {dimension_numbers = #tpu.dot_dimension_numbers<[1], [0], [0], [1], [0, 0, 1, 1], [], []>} : vector<256x64xbf16>, vector<64x64xbf16>, vector<256x64xf32> -> vector<256x64xf32>
    %c0_5 = arith.constant 0 : index
    %c0_6 = arith.constant 0 : index
    %6 = vector.load %arg3[%c0_5, %c0_6] : memref<1x64xf32, #tpu.memory_space<vmem>>, vector<1x64xf32>
    %7 = vector.broadcast %6 : vector<1x64xf32> to vector<256x64xf32>
    %8 = arith.mulf %5, %7 : vector<256x64xf32>
    %c0_7 = arith.constant 0 : index
    %c0_8 = arith.constant 0 : index
    %9 = vector.load %arg4[%c0_7, %c0_8] : memref<1x64xf32, #tpu.memory_space<vmem>>, vector<1x64xf32>
    %10 = vector.broadcast %9 : vector<1x64xf32> to vector<256x64xf32>
    %11 = arith.addf %8, %10 : vector<256x64xf32>
    %cst_9 = arith.constant 0.000000e+00 : f32
    %12 = vector.broadcast %cst_9 : f32 to vector<256x64xf32>
    %13 = arith.maximumf %11, %12 : vector<256x64xf32>
    %14 = vector.shape_cast %13 : vector<256x64xf32> to vector<16x16x64xf32>
    %15 = tpu.iota {dimensions = array<i32: 1>} : vector<16x16x64xi32>
    %c0_i32 = arith.constant 0 : i32
    %16 = vector.broadcast %c0_i32 : i32 to vector<16x16x64xi32>
    %17 = arith.cmpi eq, %15, %16 : vector<16x16x64xi32>
    %c1_i32 = arith.constant 1 : i32
    %18 = tpu.dynamic_rotate %14 by %c1_i32 dim 1 : vector<16x16x64xf32>, i32 -> vector<16x16x64xf32>
    %cst_10 = arith.constant 0.000000e+00 : f32
    %19 = vector.broadcast %cst_10 : f32 to vector<16x16x64xf32>
    %20 = arith.select %17, %19, %18 : vector<16x16x64xi1>, vector<16x16x64xf32>
    %c15_i32 = arith.constant 15 : i32
    %21 = vector.broadcast %c15_i32 : i32 to vector<16x16x64xi32>
    %22 = arith.cmpi eq, %15, %21 : vector<16x16x64xi32>
    %c15_i32_11 = arith.constant 15 : i32
    %23 = tpu.dynamic_rotate %14 by %c15_i32_11 dim 1 : vector<16x16x64xf32>, i32 -> vector<16x16x64xf32>
    %cst_12 = arith.constant 0.000000e+00 : f32
    %24 = vector.broadcast %cst_12 : f32 to vector<16x16x64xf32>
    %25 = arith.select %22, %24, %23 : vector<16x16x64xi1>, vector<16x16x64xf32>
    %cst_13 = arith.constant 0.000000e+00 : bf16
    %26 = vector.broadcast %cst_13 : bf16 to vector<16x64xbf16>
    %c0_14 = arith.constant 0 : index
    %c0_15 = arith.constant 0 : index
    %c0_16 = arith.constant 0 : index
    %c0_17 = arith.constant 0 : index
    %27 = vector.load %arg9[%c0_14, %c0_15, %c0_16, %c0_17] : memref<3x18x16x64xbf16, #tpu.memory_space<vmem>>, vector<1x1x16x64xbf16>
    %28 = vector.shape_cast %27 : vector<1x1x16x64xbf16> to vector<16x64xbf16>
    %29 = vector.shape_cast %26 : vector<16x64xbf16> to vector<1x1x16x64xbf16>
    tpu.vector_store %arg9[%c0_14, %c0_15, %c0_16, %c0_17], %29 {strides = array<i32>} : memref<3x18x16x64xbf16, #tpu.memory_space<vmem>>, vector<1x1x16x64xbf16>,
    %c0_18 = arith.constant 0 : index
    %c17 = arith.constant 17 : index
    %c0_19 = arith.constant 0 : index
    %c0_20 = arith.constant 0 : index
    %30 = vector.load %arg9[%c0_18, %c17, %c0_19, %c0_20] : memref<3x18x16x64xbf16, #tpu.memory_space<vmem>>, vector<1x1x16x64xbf16>
    %31 = vector.shape_cast %30 : vector<1x1x16x64xbf16> to vector<16x64xbf16>
    %32 = vector.shape_cast %26 : vector<16x64xbf16> to vector<1x1x16x64xbf16>
    tpu.vector_store %arg9[%c0_18, %c17, %c0_19, %c0_20], %32 {strides = array<i32>} : memref<3x18x16x64xbf16, #tpu.memory_space<vmem>>, vector<1x1x16x64xbf16>,
    %33 = arith.truncf %20 : vector<16x16x64xf32> to vector<16x16x64xbf16>
    %c0_21 = arith.constant 0 : index
    %c1 = arith.constant 1 : index
    %c0_22 = arith.constant 0 : index
    %c0_23 = arith.constant 0 : index
    %34 = vector.load %arg9[%c0_21, %c1, %c0_22, %c0_23] : memref<3x18x16x64xbf16, #tpu.memory_space<vmem>>, vector<1x16x16x64xbf16>
    %35 = vector.shape_cast %34 : vector<1x16x16x64xbf16> to vector<16x16x64xbf16>
    %36 = vector.shape_cast %33 : vector<16x16x64xbf16> to vector<1x16x16x64xbf16>
    tpu.vector_store %arg9[%c0_21, %c1, %c0_22, %c0_23], %36 {strides = array<i32>} : memref<3x18x16x64xbf16, #tpu.memory_space<vmem>>, vector<1x16x16x64xbf16>,
    %c1_24 = arith.constant 1 : index
    %c0_25 = arith.constant 0 : index
    %c0_26 = arith.constant 0 : index
    %c0_27 = arith.constant 0 : index
    %37 = vector.load %arg9[%c1_24, %c0_25, %c0_26, %c0_27] : memref<3x18x16x64xbf16, #tpu.memory_space<vmem>>, vector<1x1x16x64xbf16>
    %38 = vector.shape_cast %37 : vector<1x1x16x64xbf16> to vector<16x64xbf16>
    %39 = vector.shape_cast %26 : vector<16x64xbf16> to vector<1x1x16x64xbf16>
    tpu.vector_store %arg9[%c1_24, %c0_25, %c0_26, %c0_27], %39 {strides = array<i32>} : memref<3x18x16x64xbf16, #tpu.memory_space<vmem>>, vector<1x1x16x64xbf16>,
    %c1_28 = arith.constant 1 : index
    %c17_29 = arith.constant 17 : index
    %c0_30 = arith.constant 0 : index
    %c0_31 = arith.constant 0 : index
    %40 = vector.load %arg9[%c1_28, %c17_29, %c0_30, %c0_31] : memref<3x18x16x64xbf16, #tpu.memory_space<vmem>>, vector<1x1x16x64xbf16>
    %41 = vector.shape_cast %40 : vector<1x1x16x64xbf16> to vector<16x64xbf16>
    %42 = vector.shape_cast %26 : vector<16x64xbf16> to vector<1x1x16x64xbf16>
    tpu.vector_store %arg9[%c1_28, %c17_29, %c0_30, %c0_31], %42 {strides = array<i32>} : memref<3x18x16x64xbf16, #tpu.memory_space<vmem>>, vector<1x1x16x64xbf16>,
    %43 = arith.truncf %14 : vector<16x16x64xf32> to vector<16x16x64xbf16>
    %c1_32 = arith.constant 1 : index
    %c1_33 = arith.constant 1 : index
    %c0_34 = arith.constant 0 : index
    %c0_35 = arith.constant 0 : index
    %44 = vector.load %arg9[%c1_32, %c1_33, %c0_34, %c0_35] : memref<3x18x16x64xbf16, #tpu.memory_space<vmem>>, vector<1x16x16x64xbf16>
    %45 = vector.shape_cast %44 : vector<1x16x16x64xbf16> to vector<16x16x64xbf16>
    %46 = vector.shape_cast %43 : vector<16x16x64xbf16> to vector<1x16x16x64xbf16>
    tpu.vector_store %arg9[%c1_32, %c1_33, %c0_34, %c0_35], %46 {strides = array<i32>} : memref<3x18x16x64xbf16, #tpu.memory_space<vmem>>, vector<1x16x16x64xbf16>,
    %c2 = arith.constant 2 : index
    %c0_36 = arith.constant 0 : index
    %c0_37 = arith.constant 0 : index
    %c0_38 = arith.constant 0 : index
    %47 = vector.load %arg9[%c2, %c0_36, %c0_37, %c0_38] : memref<3x18x16x64xbf16, #tpu.memory_space<vmem>>, vector<1x1x16x64xbf16>
    %48 = vector.shape_cast %47 : vector<1x1x16x64xbf16> to vector<16x64xbf16>
    %49 = vector.shape_cast %26 : vector<16x64xbf16> to vector<1x1x16x64xbf16>
    tpu.vector_store %arg9[%c2, %c0_36, %c0_37, %c0_38], %49 {strides = array<i32>} : memref<3x18x16x64xbf16, #tpu.memory_space<vmem>>, vector<1x1x16x64xbf16>,
    %c2_39 = arith.constant 2 : index
    %c17_40 = arith.constant 17 : index
    %c0_41 = arith.constant 0 : index
    %c0_42 = arith.constant 0 : index
    %50 = vector.load %arg9[%c2_39, %c17_40, %c0_41, %c0_42] : memref<3x18x16x64xbf16, #tpu.memory_space<vmem>>, vector<1x1x16x64xbf16>
    %51 = vector.shape_cast %50 : vector<1x1x16x64xbf16> to vector<16x64xbf16>
    %52 = vector.shape_cast %26 : vector<16x64xbf16> to vector<1x1x16x64xbf16>
    tpu.vector_store %arg9[%c2_39, %c17_40, %c0_41, %c0_42], %52 {strides = array<i32>} : memref<3x18x16x64xbf16, #tpu.memory_space<vmem>>, vector<1x1x16x64xbf16>,
    %53 = arith.truncf %25 : vector<16x16x64xf32> to vector<16x16x64xbf16>
    %c2_43 = arith.constant 2 : index
    %c1_44 = arith.constant 1 : index
    %c0_45 = arith.constant 0 : index
    %c0_46 = arith.constant 0 : index
    %54 = vector.load %arg9[%c2_43, %c1_44, %c0_45, %c0_46] : memref<3x18x16x64xbf16, #tpu.memory_space<vmem>>, vector<1x16x16x64xbf16>
    %55 = vector.shape_cast %54 : vector<1x16x16x64xbf16> to vector<16x16x64xbf16>
    %56 = vector.shape_cast %53 : vector<16x16x64xbf16> to vector<1x16x16x64xbf16>
    tpu.vector_store %arg9[%c2_43, %c1_44, %c0_45, %c0_46], %56 {strides = array<i32>} : memref<3x18x16x64xbf16, #tpu.memory_space<vmem>>, vector<1x16x16x64xbf16>,
    %cst_47 = arith.constant 0.000000e+00 : f32
    %57 = vector.broadcast %cst_47 : f32 to vector<256x64xf32>
    %c0_48 = arith.constant 0 : index
    %c0_49 = arith.constant 0 : index
    %c0_50 = arith.constant 0 : index
    %c0_51 = arith.constant 0 : index
    %58 = vector.load %arg9[%c0_48, %c0_49, %c0_50, %c0_51] : memref<3x18x16x64xbf16, #tpu.memory_space<vmem>>, vector<1x16x16x64xbf16>
    %59 = vector.shape_cast %58 : vector<1x16x16x64xbf16> to vector<16x16x64xbf16>
    %60 = vector.shape_cast %59 : vector<16x16x64xbf16> to vector<256x64xbf16>
    %c0_52 = arith.constant 0 : index
    %c0_53 = arith.constant 0 : index
    %c0_54 = arith.constant 0 : index
    %c0_55 = arith.constant 0 : index
    %61 = vector.load %arg5[%c0_52, %c0_53, %c0_54, %c0_55] : memref<3x3x64x64xbf16, #tpu.memory_space<vmem>>, vector<1x1x64x64xbf16>
    %62 = vector.shape_cast %61 : vector<1x1x64x64xbf16> to vector<64x64xbf16>
    %cst_56 = arith.constant dense<0.000000e+00> : vector<256x64xf32>
    %63 = tpu.matmul %60, %62, %cst_56 {dimension_numbers = #tpu.dot_dimension_numbers<[1], [0], [0], [1], [0, 0, 1, 1], [], []>} : vector<256x64xbf16>, vector<64x64xbf16>, vector<256x64xf32> -> vector<256x64xf32>
    %64 = arith.addf %57, %63 : vector<256x64xf32>
    %c1_57 = arith.constant 1 : index
    %c0_58 = arith.constant 0 : index
    %c0_59 = arith.constant 0 : index
    %c0_60 = arith.constant 0 : index
    %65 = vector.load %arg9[%c1_57, %c0_58, %c0_59, %c0_60] : memref<3x18x16x64xbf16, #tpu.memory_space<vmem>>, vector<1x16x16x64xbf16>
    %66 = vector.shape_cast %65 : vector<1x16x16x64xbf16> to vector<16x16x64xbf16>
    %67 = vector.shape_cast %66 : vector<16x16x64xbf16> to vector<256x64xbf16>
    %c0_61 = arith.constant 0 : index
    %c1_62 = arith.constant 1 : index
    %c0_63 = arith.constant 0 : index
    %c0_64 = arith.constant 0 : index
    %68 = vector.load %arg5[%c0_61, %c1_62, %c0_63, %c0_64] : memref<3x3x64x64xbf16, #tpu.memory_space<vmem>>, vector<1x1x64x64xbf16>
    %69 = vector.shape_cast %68 : vector<1x1x64x64xbf16> to vector<64x64xbf16>
    %cst_65 = arith.constant dense<0.000000e+00> : vector<256x64xf32>
    %70 = tpu.matmul %67, %69, %cst_65 {dimension_numbers = #tpu.dot_dimension_numbers<[1], [0], [0], [1], [0, 0, 1, 1], [], []>} : vector<256x64xbf16>, vector<64x64xbf16>, vector<256x64xf32> -> vector<256x64xf32>
    %71 = arith.addf %64, %70 : vector<256x64xf32>
    %c2_66 = arith.constant 2 : index
    %c0_67 = arith.constant 0 : index
    %c0_68 = arith.constant 0 : index
    %c0_69 = arith.constant 0 : index
    %72 = vector.load %arg9[%c2_66, %c0_67, %c0_68, %c0_69] : memref<3x18x16x64xbf16, #tpu.memory_space<vmem>>, vector<1x16x16x64xbf16>
    %73 = vector.shape_cast %72 : vector<1x16x16x64xbf16> to vector<16x16x64xbf16>
    %74 = vector.shape_cast %73 : vector<16x16x64xbf16> to vector<256x64xbf16>
    %c0_70 = arith.constant 0 : index
    %c2_71 = arith.constant 2 : index
    %c0_72 = arith.constant 0 : index
    %c0_73 = arith.constant 0 : index
    %75 = vector.load %arg5[%c0_70, %c2_71, %c0_72, %c0_73] : memref<3x3x64x64xbf16, #tpu.memory_space<vmem>>, vector<1x1x64x64xbf16>
    %76 = vector.shape_cast %75 : vector<1x1x64x64xbf16> to vector<64x64xbf16>
    %cst_74 = arith.constant dense<0.000000e+00> : vector<256x64xf32>
    %77 = tpu.matmul %74, %76, %cst_74 {dimension_numbers = #tpu.dot_dimension_numbers<[1], [0], [0], [1], [0, 0, 1, 1], [], []>} : vector<256x64xbf16>, vector<64x64xbf16>, vector<256x64xf32> -> vector<256x64xf32>
    %78 = arith.addf %71, %77 : vector<256x64xf32>
    %c0_75 = arith.constant 0 : index
    %c1_76 = arith.constant 1 : index
    %c0_77 = arith.constant 0 : index
    %c0_78 = arith.constant 0 : index
    %79 = vector.load %arg9[%c0_75, %c1_76, %c0_77, %c0_78] : memref<3x18x16x64xbf16, #tpu.memory_space<vmem>>, vector<1x16x16x64xbf16>
    %80 = vector.shape_cast %79 : vector<1x16x16x64xbf16> to vector<16x16x64xbf16>
    %81 = vector.shape_cast %80 : vector<16x16x64xbf16> to vector<256x64xbf16>
    %c1_79 = arith.constant 1 : index
    %c0_80 = arith.constant 0 : index
    %c0_81 = arith.constant 0 : index
    %c0_82 = arith.constant 0 : index
    %82 = vector.load %arg5[%c1_79, %c0_80, %c0_81, %c0_82] : memref<3x3x64x64xbf16, #tpu.memory_space<vmem>>, vector<1x1x64x64xbf16>
    %83 = vector.shape_cast %82 : vector<1x1x64x64xbf16> to vector<64x64xbf16>
    %cst_83 = arith.constant dense<0.000000e+00> : vector<256x64xf32>
    %84 = tpu.matmul %81, %83, %cst_83 {dimension_numbers = #tpu.dot_dimension_numbers<[1], [0], [0], [1], [0, 0, 1, 1], [], []>} : vector<256x64xbf16>, vector<64x64xbf16>, vector<256x64xf32> -> vector<256x64xf32>
    %85 = arith.addf %78, %84 : vector<256x64xf32>
    %c1_84 = arith.constant 1 : index
    %c1_85 = arith.constant 1 : index
    %c0_86 = arith.constant 0 : index
    %c0_87 = arith.constant 0 : index
    %86 = vector.load %arg9[%c1_84, %c1_85, %c0_86, %c0_87] : memref<3x18x16x64xbf16, #tpu.memory_space<vmem>>, vector<1x16x16x64xbf16>
    %87 = vector.shape_cast %86 : vector<1x16x16x64xbf16> to vector<16x16x64xbf16>
    %88 = vector.shape_cast %87 : vector<16x16x64xbf16> to vector<256x64xbf16>
    %c1_88 = arith.constant 1 : index
    %c1_89 = arith.constant 1 : index
    %c0_90 = arith.constant 0 : index
    %c0_91 = arith.constant 0 : index
    %89 = vector.load %arg5[%c1_88, %c1_89, %c0_90, %c0_91] : memref<3x3x64x64xbf16, #tpu.memory_space<vmem>>, vector<1x1x64x64xbf16>
    %90 = vector.shape_cast %89 : vector<1x1x64x64xbf16> to vector<64x64xbf16>
    %cst_92 = arith.constant dense<0.000000e+00> : vector<256x64xf32>
    %91 = tpu.matmul %88, %90, %cst_92 {dimension_numbers = #tpu.dot_dimension_numbers<[1], [0], [0], [1], [0, 0, 1, 1], [], []>} : vector<256x64xbf16>, vector<64x64xbf16>, vector<256x64xf32> -> vector<256x64xf32>
    %92 = arith.addf %85, %91 : vector<256x64xf32>
    %c2_93 = arith.constant 2 : index
    %c1_94 = arith.constant 1 : index
    %c0_95 = arith.constant 0 : index
    %c0_96 = arith.constant 0 : index
    %93 = vector.load %arg9[%c2_93, %c1_94, %c0_95, %c0_96] : memref<3x18x16x64xbf16, #tpu.memory_space<vmem>>, vector<1x16x16x64xbf16>
    %94 = vector.shape_cast %93 : vector<1x16x16x64xbf16> to vector<16x16x64xbf16>
    %95 = vector.shape_cast %94 : vector<16x16x64xbf16> to vector<256x64xbf16>
    %c1_97 = arith.constant 1 : index
    %c2_98 = arith.constant 2 : index
    %c0_99 = arith.constant 0 : index
    %c0_100 = arith.constant 0 : index
    %96 = vector.load %arg5[%c1_97, %c2_98, %c0_99, %c0_100] : memref<3x3x64x64xbf16, #tpu.memory_space<vmem>>, vector<1x1x64x64xbf16>
    %97 = vector.shape_cast %96 : vector<1x1x64x64xbf16> to vector<64x64xbf16>
    %cst_101 = arith.constant dense<0.000000e+00> : vector<256x64xf32>
    %98 = tpu.matmul %95, %97, %cst_101 {dimension_numbers = #tpu.dot_dimension_numbers<[1], [0], [0], [1], [0, 0, 1, 1], [], []>} : vector<256x64xbf16>, vector<64x64xbf16>, vector<256x64xf32> -> vector<256x64xf32>
    %99 = arith.addf %92, %98 : vector<256x64xf32>
    %c0_102 = arith.constant 0 : index
    %c2_103 = arith.constant 2 : index
    %c0_104 = arith.constant 0 : index
    %c0_105 = arith.constant 0 : index
    %100 = vector.load %arg9[%c0_102, %c2_103, %c0_104, %c0_105] : memref<3x18x16x64xbf16, #tpu.memory_space<vmem>>, vector<1x16x16x64xbf16>
    %101 = vector.shape_cast %100 : vector<1x16x16x64xbf16> to vector<16x16x64xbf16>
    %102 = vector.shape_cast %101 : vector<16x16x64xbf16> to vector<256x64xbf16>
    %c2_106 = arith.constant 2 : index
    %c0_107 = arith.constant 0 : index
    %c0_108 = arith.constant 0 : index
    %c0_109 = arith.constant 0 : index
    %103 = vector.load %arg5[%c2_106, %c0_107, %c0_108, %c0_109] : memref<3x3x64x64xbf16, #tpu.memory_space<vmem>>, vector<1x1x64x64xbf16>
    %104 = vector.shape_cast %103 : vector<1x1x64x64xbf16> to vector<64x64xbf16>
    %cst_110 = arith.constant dense<0.000000e+00> : vector<256x64xf32>
    %105 = tpu.matmul %102, %104, %cst_110 {dimension_numbers = #tpu.dot_dimension_numbers<[1], [0], [0], [1], [0, 0, 1, 1], [], []>} : vector<256x64xbf16>, vector<64x64xbf16>, vector<256x64xf32> -> vector<256x64xf32>
    %106 = arith.addf %99, %105 : vector<256x64xf32>
    %c1_111 = arith.constant 1 : index
    %c2_112 = arith.constant 2 : index
    %c0_113 = arith.constant 0 : index
    %c0_114 = arith.constant 0 : index
    %107 = vector.load %arg9[%c1_111, %c2_112, %c0_113, %c0_114] : memref<3x18x16x64xbf16, #tpu.memory_space<vmem>>, vector<1x16x16x64xbf16>
    %108 = vector.shape_cast %107 : vector<1x16x16x64xbf16> to vector<16x16x64xbf16>
    %109 = vector.shape_cast %108 : vector<16x16x64xbf16> to vector<256x64xbf16>
    %c2_115 = arith.constant 2 : index
    %c1_116 = arith.constant 1 : index
    %c0_117 = arith.constant 0 : index
    %c0_118 = arith.constant 0 : index
    %110 = vector.load %arg5[%c2_115, %c1_116, %c0_117, %c0_118] : memref<3x3x64x64xbf16, #tpu.memory_space<vmem>>, vector<1x1x64x64xbf16>
    %111 = vector.shape_cast %110 : vector<1x1x64x64xbf16> to vector<64x64xbf16>
    %cst_119 = arith.constant dense<0.000000e+00> : vector<256x64xf32>
    %112 = tpu.matmul %109, %111, %cst_119 {dimension_numbers = #tpu.dot_dimension_numbers<[1], [0], [0], [1], [0, 0, 1, 1], [], []>} : vector<256x64xbf16>, vector<64x64xbf16>, vector<256x64xf32> -> vector<256x64xf32>
    %113 = arith.addf %106, %112 : vector<256x64xf32>
    %c2_120 = arith.constant 2 : index
    %c2_121 = arith.constant 2 : index
    %c0_122 = arith.constant 0 : index
    %c0_123 = arith.constant 0 : index
    %114 = vector.load %arg9[%c2_120, %c2_121, %c0_122, %c0_123] : memref<3x18x16x64xbf16, #tpu.memory_space<vmem>>, vector<1x16x16x64xbf16>
    %115 = vector.shape_cast %114 : vector<1x16x16x64xbf16> to vector<16x16x64xbf16>
    %116 = vector.shape_cast %115 : vector<16x16x64xbf16> to vector<256x64xbf16>
    %c2_124 = arith.constant 2 : index
    %c2_125 = arith.constant 2 : index
    %c0_126 = arith.constant 0 : index
    %c0_127 = arith.constant 0 : index
    %117 = vector.load %arg5[%c2_124, %c2_125, %c0_126, %c0_127] : memref<3x3x64x64xbf16, #tpu.memory_space<vmem>>, vector<1x1x64x64xbf16>
    %118 = vector.shape_cast %117 : vector<1x1x64x64xbf16> to vector<64x64xbf16>
    %cst_128 = arith.constant dense<0.000000e+00> : vector<256x64xf32>
    %119 = tpu.matmul %116, %118, %cst_128 {dimension_numbers = #tpu.dot_dimension_numbers<[1], [0], [0], [1], [0, 0, 1, 1], [], []>} : vector<256x64xbf16>, vector<64x64xbf16>, vector<256x64xf32> -> vector<256x64xf32>
    %120 = arith.addf %113, %119 : vector<256x64xf32>
    %c0_129 = arith.constant 0 : index
    %c0_130 = arith.constant 0 : index
    %c0_131 = arith.constant 0 : index
    %c0_132 = arith.constant 0 : index
    %121 = vector.load %arg1[%c0_129, %c0_130, %c0_131, %c0_132] : memref<1x16x16x64xf32, #tpu.memory_space<vmem>>, vector<1x16x16x64xf32>
    %122 = vector.shape_cast %121 : vector<1x16x16x64xf32> to vector<16x16x64xf32>
    %123 = vector.shape_cast %122 : vector<16x16x64xf32> to vector<256x64xf32>
    %c0_133 = arith.constant 0 : index
    %c0_134 = arith.constant 0 : index
    %124 = vector.load %arg6[%c0_133, %c0_134] : memref<1x64xf32, #tpu.memory_space<vmem>>, vector<1x64xf32>
    %125 = vector.broadcast %124 : vector<1x64xf32> to vector<256x64xf32>
    %126 = arith.mulf %120, %125 : vector<256x64xf32>
    %c0_135 = arith.constant 0 : index
    %c0_136 = arith.constant 0 : index
    %127 = vector.load %arg7[%c0_135, %c0_136] : memref<1x64xf32, #tpu.memory_space<vmem>>, vector<1x64xf32>
    %128 = vector.broadcast %127 : vector<1x64xf32> to vector<256x64xf32>
    %129 = arith.addf %126, %128 : vector<256x64xf32>
    %130 = arith.addf %129, %123 : vector<256x64xf32>
    %cst_137 = arith.constant 0.000000e+00 : f32
    %131 = vector.broadcast %cst_137 : f32 to vector<256x64xf32>
    %132 = arith.maximumf %130, %131 : vector<256x64xf32>
    %133 = vector.shape_cast %132 : vector<256x64xf32> to vector<1x16x16x64xf32>
    %c0_138 = arith.constant 0 : index
    %c0_139 = arith.constant 0 : index
    %c0_140 = arith.constant 0 : index
    %c0_141 = arith.constant 0 : index
    %134 = vector.load %arg8[%c0_138, %c0_139, %c0_140, %c0_141] : memref<1x16x16x64xf32, #tpu.memory_space<vmem>>, vector<1x16x16x64xf32>
    tpu.vector_store %arg8[%c0_138, %c0_139, %c0_140, %c0_141], %133 {strides = array<i32>} : memref<1x16x16x64xf32, #tpu.memory_space<vmem>>, vector<1x16x16x64xf32>,
    return
  }
  func.func @transform_0(%arg0: i32) -> (i32, i32, i32, i32) {
    %c0_i32 = arith.constant 0 : i32
    %c0_i32_0 = arith.constant 0 : i32
    %c0_i32_1 = arith.constant 0 : i32
    %c0_i32_2 = arith.constant 0 : i32
    return %arg0, %c0_i32, %c0_i32_0, %c0_i32_1 : i32, i32, i32, i32
  }
  func.func @transform_1(%arg0: i32) -> (i32, i32) {
    %c0_i32 = arith.constant 0 : i32
    %c0_i32_0 = arith.constant 0 : i32
    %c0_i32_1 = arith.constant 0 : i32
    return %c0_i32, %c0_i32_0 : i32, i32
  }
  func.func @transform_2(%arg0: i32) -> (i32, i32) {
    %c0_i32 = arith.constant 0 : i32
    %c0_i32_0 = arith.constant 0 : i32
    %c0_i32_1 = arith.constant 0 : i32
    return %c0_i32, %c0_i32_0 : i32, i32
  }
  func.func @transform_3(%arg0: i32) -> (i32, i32) {
    %c0_i32 = arith.constant 0 : i32
    %c0_i32_0 = arith.constant 0 : i32
    %c0_i32_1 = arith.constant 0 : i32
    return %c0_i32, %c0_i32_0 : i32, i32
  }
  func.func @transform_4(%arg0: i32) -> (i32, i32, i32, i32) {
    %c0_i32 = arith.constant 0 : i32
    %c0_i32_0 = arith.constant 0 : i32
    %c0_i32_1 = arith.constant 0 : i32
    %c0_i32_2 = arith.constant 0 : i32
    %c0_i32_3 = arith.constant 0 : i32
    return %c0_i32, %c0_i32_0, %c0_i32_1, %c0_i32_2 : i32, i32, i32, i32
  }
  func.func @transform_5(%arg0: i32) -> (i32, i32) {
    %c0_i32 = arith.constant 0 : i32
    %c0_i32_0 = arith.constant 0 : i32
    %c0_i32_1 = arith.constant 0 : i32
    return %c0_i32, %c0_i32_0 : i32, i32
  }
  func.func @transform_6(%arg0: i32) -> (i32, i32) {
    %c0_i32 = arith.constant 0 : i32
    %c0_i32_0 = arith.constant 0 : i32
    %c0_i32_1 = arith.constant 0 : i32
    return %c0_i32, %c0_i32_0 : i32, i32
  }
  func.func @transform_7(%arg0: i32) -> (i32, i32, i32, i32) {
    %c0_i32 = arith.constant 0 : i32
    %c0_i32_0 = arith.constant 0 : i32
    %c0_i32_1 = arith.constant 0 : i32
    %c0_i32_2 = arith.constant 0 : i32
    return %arg0, %c0_i32, %c0_i32_0, %c0_i32_1 : i32, i32, i32, i32
  }
}

</mosaic_0001>

<llo_original>
// kernel: bottleneck_forward.1
$region0: #{bottleneck_forward.1}
  #allocation0 [shape = 'u32[]', space=smem, size = 0x4, offset = 0x4, fixed_abs, tag = 'smem constant byte address 0x4 - core index']
  #allocation1 [shape = 'u32[144,128]{1,0:T(1,128)}', space=vmem, size = 0x12000, scoped, tag = 'internal scratch']
  #allocation2 [shape = 'bf16[3,18,16,64]{3,2,1,0:T(16,128)(2,1)}', space=vmem, size = 0x36000, scoped, tag = 'scratch operand']
  %s0 = inlined_call_operand.hbm [shape: f32[2,16,16,64], index: 0, kind: input, shape index: {}]
  %s1 = inlined_call_operand.hbm [shape: bf16[64,64], index: 1, kind: input, shape index: {}]
  %s2 = inlined_call_operand.vmem [shape: f32[1,64], index: 2, kind: input, shape index: {}]
  %s3 = inlined_call_operand.vmem [shape: f32[1,64], index: 3, kind: input, shape index: {}]
  %s4 = inlined_call_operand.hbm [shape: bf16[3,3,64,64], index: 4, kind: input, shape index: {}]
  %s5 = inlined_call_operand.vmem [shape: f32[1,64], index: 5, kind: input, shape index: {}]
  %s6 = inlined_call_operand.vmem [shape: f32[1,64], index: 6, kind: input, shape index: {}]
  %s7 = inlined_call_operand.hbm [shape: f32[2,16,16,64], index: 7, kind: output, shape index: {}]
  %s8 = sld [smem:[#allocation0]]
  $region73: #{bottleneck_forward.1} parent=0
    _
  %s10 = ssub.s32 1, %s8
  %s11 = scalar_select 0, %s10, %s8
  $region1: #{bottleneck_forward.1} parent=0
    #allocation3 [shape = 'u8[262144]{0}', space=vmem, size = 0x40000, scoped, tag = 'input window, operand 0']
    #allocation4 [shape = 's32[2]{0}', space=sflag, size = 0x8, scoped, tag = 'scoped memory for bottleneck_forward.1']
    #allocation5 [shape = 's32[2]{0}', space=sflag, size = 0x8, scoped, tag = 'scoped memory for bottleneck_forward.1']
    #allocation6 [shape = 'u8[16384]{0}', space=vmem, size = 0x4000, scoped, tag = 'input window, operand 1, single buffered']
    #allocation7 [shape = 's32[1]{0}', space=sflag, size = 0x4, scoped, tag = 'scoped memory for bottleneck_forward.1']
    #allocation8 [shape = 'u8[147456]{0}', space=vmem, size = 0x24000, scoped, tag = 'input window, operand 4, single buffered']
    #allocation9 [shape = 'u8[262144]{0}', space=vmem, size = 0x40000, scoped, tag = 'output window, operand 0']
    %12 = vsyncpa [#allocation4], 0
    %s13 = scalar_lea.sflag [#allocation4], 1
    %14 = vsyncpa %s13, 0
    %15 = vsyncpa [#allocation7], 0
    %16 = vsyncpa [#allocation5], 0
    %s17 = scalar_lea.sflag [#allocation5], 1
    %18 = vsyncpa %s17, 0
    loop: start=0, step=1, limit=4
    $region2: #{bottleneck_forward.1} parent=1 // loop_pre_header
      _
    $region3: #{bottleneck_forward.1} parent=1 // loop_header
      %s20 = sphi 0, %s24
      %p21 = scmp.ge.s32.totalorder %s20, 4
      %s30 = sphi 0, %s32
      %s33 = sphi 0, %s30
      %s34 = sphi 0, %s33
      %s50 = sphi 0, %s34
      %s54 = sphi 0, %s54
      %s56 = sphi 0, %s54
      %s57 = sphi 0, %s56
      %s71 = sphi 0, %s57
      %s75 = sphi 0, %s75
      %s77 = sphi 0, %s75
      %s78 = sphi 0, %s77
      %s92 = sphi 0, %s78
      %s96 = sphi 0, %s96
      %s98 = sphi 0, %s96
      %s99 = sphi 0, %s98
      %s113 = sphi 0, %s99
      %s117 = sphi 0, %s117
      %s119 = sphi 0, %s117
      %s120 = sphi 0, %s119
      %s134 = sphi 0, %s120
      %s138 = sphi 0, %s138
      %s140 = sphi 0, %s138
      %s141 = sphi 0, %s140
      %s155 = sphi 0, %s141
      %s159 = sphi 0, %s159
      %s161 = sphi 0, %s159
      %s162 = sphi 0, %s161
      %s176 = sphi 0, %s162
      %s182 = sphi 0, %s184
      %s185 = sphi 0, %s182
      %s186 = sphi 0, %s185
      %s202 = sphi 0, %s186
    $region4: #{bottleneck_forward.1} parent=1 // loop_header_branch
      %23 = sbr.rel (%p21) target = $region8
    $region5: #{bottleneck_forward.1} parent=1 // loop_body
      %s25 = ssub.s32 %s20, 1
      %s26 = ssub.s32 %s20, 2
      %s27 = sadd.s32 %s20, 1
      %s28 = ssub.s32 %s20, %s27
      %p29 = scmp.eq.s32.totalorder %s28, 0
      %s31 = sadd.s32 %s30, 1
      %s32 = scalar_select %p29, %s30, %s31
      %p35 = pneg %p29
      %p36 = scmp.eq.s32.totalorder %s20, 1
      %p37 = por %p35, %p36
      %p38 = scmp.ne.s32.totalorder %s30, %s33
      %p39 = scmp.eq.s32.totalorder %s20, 0
      %p40 = por %p38, %p39
      %p41 = scmp.ne.s32.totalorder %s30, %s33
      %p42 = scmp.eq.s32.totalorder %s25, 1
      %p43 = por %p41, %p42
      %p44 = scmp.ne.s32.totalorder %s33, %s34
      %p45 = scmp.eq.s32.totalorder %s25, 0
      %p46 = por %p44, %p45
      %p47 = scmp.ne.s32.totalorder %s33, %s34
      %p48 = scmp.eq.s32.totalorder %s26, 1
      %p49 = por %p47, %p48
      %p51 = scmp.ne.s32.totalorder %s34, %s50
      %p52 = scmp.eq.s32.totalorder %s26, 0
      %p53 = por %p51, %p52
      %s55 = sadd.s32 %s54, 1
      %p58 = scmp.eq.s32.totalorder %s20, 1
      %p59 = scmp.ne.s32.totalorder %s54, %s56
      %p60 = scmp.eq.s32.totalorder %s20, 0
      %p61 = por %p59, %p60
      %p62 = scmp.ne.s32.totalorder %s54, %s56
      %p63 = scmp.eq.s32.totalorder %s25, 1
      %p64 = por %p62, %p63
      %p65 = scmp.ne.s32.totalorder %s56, %s57
      %p66 = scmp.eq.s32.totalorder %s25, 0
      %p67 = por %p65, %p66
      %p68 = scmp.ne.s32.totalorder %s56, %s57
      %p69 = scmp.eq.s32.totalorder %s26, 1
      %p70 = por %p68, %p69
      %p72 = scmp.ne.s32.totalorder %s57, %s71
      %p73 = scmp.eq.s32.totalorder %s26, 0
      %p74 = por %p72, %p73
      %s76 = sadd.s32 %s75, 1
      %p79 = scmp.eq.s32.totalorder %s20, 1
      %p80 = scmp.ne.s32.totalorder %s75, %s77
      %p81 = scmp.eq.s32.totalorder %s20, 0
      %p82 = por %p80, %p81
      %p83 = scmp.ne.s32.totalorder %s75, %s77
      %p84 = scmp.eq.s32.totalorder %s25, 1
      %p85 = por %p83, %p84
      %p86 = scmp.ne.s32.totalorder %s77, %s78
      %p87 = scmp.eq.s32.totalorder %s25, 0
      %p88 = por %p86, %p87
      %p89 = scmp.ne.s32.totalorder %s77, %s78
      %p90 = scmp.eq.s32.totalorder %s26, 1
      %p91 = por %p89, %p90
      %p93 = scmp.ne.s32.totalorder %s78, %s92
      %p94 = scmp.eq.s32.totalorder %s26, 0
      %p95 = por %p93, %p94
      %s97 = sadd.s32 %s96, 1
      %p100 = scmp.eq.s32.totalorder %s20, 1
      %p101 = scmp.ne.s32.totalorder %s96, %s98
      %p102 = scmp.eq.s32.totalorder %s20, 0
      %p103 = por %p101, %p102
      %p104 = scmp.ne.s32.totalorder %s96, %s98
      %p105 = scmp.eq.s32.totalorder %s25, 1
      %p106 = por %p104, %p105
      %p107 = scmp.ne.s32.totalorder %s98, %s99
      %p108 = scmp.eq.s32.totalorder %s25, 0
      %p109 = por %p107, %p108
      %p110 = scmp.ne.s32.totalorder %s98, %s99
      %p111 = scmp.eq.s32.totalorder %s26, 1
      %p112 = por %p110, %p111
      %p114 = scmp.ne.s32.totalorder %s99, %s113
      %p115 = scmp.eq.s32.totalorder %s26, 0
      %p116 = por %p114, %p115
      %s118 = sadd.s32 %s117, 1
      %p121 = scmp.eq.s32.totalorder %s20, 1
      %p122 = scmp.ne.s32.totalorder %s117, %s119
      %p123 = scmp.eq.s32.totalorder %s20, 0
      %p124 = por %p122, %p123
      %p125 = scmp.ne.s32.totalorder %s117, %s119
      %p126 = scmp.eq.s32.totalorder %s25, 1
      %p127 = por %p125, %p126
      %p128 = scmp.ne.s32.totalorder %s119, %s120
      %p129 = scmp.eq.s32.totalorder %s25, 0
      %p130 = por %p128, %p129
      %p131 = scmp.ne.s32.totalorder %s119, %s120
      %p132 = scmp.eq.s32.totalorder %s26, 1
      %p133 = por %p131, %p132
      %p135 = scmp.ne.s32.totalorder %s120, %s134
      %p136 = scmp.eq.s32.totalorder %s26, 0
      %p137 = por %p135, %p136
      %s139 = sadd.s32 %s138, 1
      %p142 = scmp.eq.s32.totalorder %s20, 1
      %p143 = scmp.ne.s32.totalorder %s138, %s140
      %p144 = scmp.eq.s32.totalorder %s20, 0
      %p145 = por %p143, %p144
      %p146 = scmp.ne.s32.totalorder %s138, %s140
      %p147 = scmp.eq.s32.totalorder %s25, 1
      %p148 = por %p146, %p147
      %p149 = scmp.ne.s32.totalorder %s140, %s141
      %p150 = scmp.eq.s32.totalorder %s25, 0
      %p151 = por %p149, %p150
      %p152 = scmp.ne.s32.totalorder %s140, %s141
      %p153 = scmp.eq.s32.totalorder %s26, 1
      %p154 = por %p152, %p153
      %p156 = scmp.ne.s32.totalorder %s141, %s155
      %p157 = scmp.eq.s32.totalorder %s26, 0
      %p158 = por %p156, %p157
      %s160 = sadd.s32 %s159, 1
      %p163 = scmp.eq.s32.totalorder %s20, 1
      %p164 = scmp.ne.s32.totalorder %s159, %s161
      %p165 = scmp.eq.s32.totalorder %s20, 0
      %p166 = por %p164, %p165
      %p167 = scmp.ne.s32.totalorder %s159, %s161
      %p168 = scmp.eq.s32.totalorder %s25, 1
      %p169 = por %p167, %p168
      %p170 = scmp.ne.s32.totalorder %s161, %s162
      %p171 = scmp.eq.s32.totalorder %s25, 0
      %p172 = por %p170, %p171
      %p173 = scmp.ne.s32.totalorder %s161, %s162
      %p174 = scmp.eq.s32.totalorder %s26, 1
      %p175 = por %p173, %p174
      %p177 = scmp.ne.s32.totalorder %s162, %s176
      %p178 = scmp.eq.s32.totalorder %s26, 0
      %p179 = por %p177, %p178
      %s180 = ssub.s32 %s20, %s27
      %p181 = scmp.eq.s32.totalorder %s180, 0
      %s183 = sadd.s32 %s182, 1
      %s184 = scalar_select %p181, %s182, %s183
      %p187 = pneg %p181
      %p188 = scmp.eq.s32.totalorder %s20, 1
      %p189 = por %p187, %p188
      %p190 = scmp.ne.s32.totalorder %s182, %s185
      %p191 = scmp.eq.s32.totalorder %s20, 0
      %p192 = por %p190, %p191
      %p193 = scmp.ne.s32.totalorder %s182, %s185
      %p194 = scmp.eq.s32.totalorder %s25, 1
      %p195 = por %p193, %p194
      %p196 = scmp.ne.s32.totalorder %s185, %s186
      %p197 = scmp.eq.s32.totalorder %s25, 0
      %p198 = por %p196, %p197
      %p199 = scmp.ne.s32.totalorder %s185, %s186
      %p200 = scmp.eq.s32.totalorder %s26, 1
      %p201 = por %p199, %p200
      %p203 = scmp.ne.s32.totalorder %s186, %s202
      %p204 = scmp.eq.s32.totalorder %s26, 0
      %p205 = por %p203, %p204
      %p206 = scmp.le.s32.totalorder 1, %s20
      %p207 = scmp.lt.s32.totalorder %s20, 3
      %p208 = pnand %p206, %p207
      %p209 = pneg %p208
      // Predicated region
      $region9: #{bottleneck_forward.1} parent=5 // pred_check
        _
      $region10: #{bottleneck_forward.1} parent=5 // pred_check_branch
        %211 = sbr.rel (%p208) target = $region12
      $region11: #{bottleneck_forward.1} parent=5 // pred_region
        %s212 = ssub.s32 %s20, 1
        // Predicated region
        $region13: #{bottleneck_forward.1} parent=11 // pred_check
          %p213 = pneg %p67
        $region14: #{bottleneck_forward.1} parent=11 // pred_check_branch
          %215 = sbr.rel (%p213) target = $region16
        $region15: #{bottleneck_forward.1} parent=11 // pred_region
          %s217 = ssub.s32 512, 512
          %218 = vsyncadd [#allocation7], %s217
          %s219 = sshll.u32 [#allocation6], 4
          %s220 = int_to_ptr.vmem [resolvable:$true] %s219
          %225 = dma.hbm_to_vmem [thread:$0]  %s1, 512, %s220, [#allocation7], 64, 64, 4
        $region16: #{bottleneck_forward.1} parent=11 // pred_fallthru
          _
        // Predicated region
        $region17: #{bottleneck_forward.1} parent=11 // pred_check
          %p226 = pneg %p88
        $region18: #{bottleneck_forward.1} parent=11 // pred_check_branch
          %228 = sbr.rel (%p226) target = $region20
        $region19: #{bottleneck_forward.1} parent=11 // pred_region
          _
        $region20: #{bottleneck_forward.1} parent=11 // pred_fallthru
          _
        // Predicated region
        $region21: #{bottleneck_forward.1} parent=11 // pred_check
          %p229 = pneg %p109
        $region22: #{bottleneck_forward.1} parent=11 // pred_check_branch
          %231 = sbr.rel (%p229) target = $region24
        $region23: #{bottleneck_forward.1} parent=11 // pred_region
          _
        $region24: #{bottleneck_forward.1} parent=11 // pred_fallthru
          _
        // Predicated region
        $region25: #{bottleneck_forward.1} parent=11 // pred_check
          %p232 = pneg %p130
        $region26: #{bottleneck_forward.1} parent=11 // pred_check_branch
          %234 = sbr.rel (%p232) target = $region28
        $region27: #{bottleneck_forward.1} parent=11 // pred_region
          %s236 = ssub.s32 4608, 4608
          %237 = vsyncadd [#allocation7], %s236
          %s238 = sshll.u32 [#allocation8], 4
          %s239 = int_to_ptr.vmem [resolvable:$true] %s238
          %244 = dma.hbm_to_vmem [thread:$0]  %s4, 4608, %s239, [#allocation7], 64, 64, 4
        $region28: #{bottleneck_forward.1} parent=11 // pred_fallthru
          _
        // Predicated region
        $region29: #{bottleneck_forward.1} parent=11 // pred_check
          %p245 = pneg %p151
        $region30: #{bottleneck_forward.1} parent=11 // pred_check_branch
          %247 = sbr.rel (%p245) target = $region32
        $region31: #{bottleneck_forward.1} parent=11 // pred_region
          _
        $region32: #{bottleneck_forward.1} parent=11 // pred_fallthru
          _
        // Predicated region
        $region33: #{bottleneck_forward.1} parent=11 // pred_check
          %p248 = pneg %p172
        $region34: #{bottleneck_forward.1} parent=11 // pred_check_branch
          %250 = sbr.rel (%p248) target = $region36
        $region35: #{bottleneck_forward.1} parent=11 // pred_region
          _
        $region36: #{bottleneck_forward.1} parent=11 // pred_fallthru
          _
      $region12: #{bottleneck_forward.1} parent=5 // pred_fallthru
        _
      %p251 = scmp.lt.s32.totalorder %s20, 2
      // Predicated region
      $region37: #{bottleneck_forward.1} parent=5 // pred_check
        %p252 = pneg %p251
      $region38: #{bottleneck_forward.1} parent=5 // pred_check_branch
        %254 = sbr.rel (%p252) target = $region40
      $region39: #{bottleneck_forward.1} parent=5 // pred_region
        // Predicated region
        $region41: #{bottleneck_forward.1} parent=39 // pred_check
          %p255 = pneg %p40
        $region42: #{bottleneck_forward.1} parent=39 // pred_check_branch
          %257 = sbr.rel (%p255) target = $region44
        $region43: #{bottleneck_forward.1} parent=39 // pred_region
          %s258 = sand.u32 %s30, 1
          %s259 = scalar_lea.sflag [#allocation4], %s258
          %s260 = sand.u32 %s30, 1
          %s261 = smul.addr %s260, 256
          %s262 = scalar_lea.vmem [#allocation3], %s261
          %s264 = ssub.s32 4096, 4096
          %265 = vsyncadd %s259, %s264
          %s266 = smul.addr %s20, 32
          %s267 = smul.addr %s266, 128
          %s268 = scalar_lea.hbm %s0, %s267
          %s269 = sshll.u32 %s262, 4
          %s270 = int_to_ptr.vmem [resolvable:$true] %s269
          %275 = dma.hbm_to_vmem [thread:$0]  %s268, 4096, %s270, %s259, 128, 128, 8
        $region44: #{bottleneck_forward.1} parent=39 // pred_fallthru
          _
      $region40: #{bottleneck_forward.1} parent=5 // pred_fallthru
        _
      %p276 = scmp.le.s32.totalorder 1, %s20
      %p277 = scmp.lt.s32.totalorder %s20, 3
      %p278 = pnand %p276, %p277
      %p279 = pneg %p278
      // Predicated region
      $region45: #{bottleneck_forward.1} parent=5 // pred_check
        _
      $region46: #{bottleneck_forward.1} parent=5 // pred_check_branch
        %281 = sbr.rel (%p278) target = $region48
      $region47: #{bottleneck_forward.1} parent=5 // pred_region
        %s282 = ssub.s32 %s20, 1
        %s283 = sand.u32 %s33, 1
        %s284 = scalar_lea.sflag [#allocation4], %s283
        %s285 = sand.u32 %s33, 1
        %s286 = smul.addr %s285, 256
        %s287 = scalar_lea.vmem [#allocation3], %s286
        // Predicated region
        $region49: #{bottleneck_forward.1} parent=47 // pred_check
          %p288 = pneg %p46
        $region50: #{bottleneck_forward.1} parent=47 // pred_check_branch
          %290 = sbr.rel (%p288) target = $region52
        $region51: #{bottleneck_forward.1} parent=47 // pred_region
          %291 = dma.done %s284, 4096
        $region52: #{bottleneck_forward.1} parent=47 // pred_fallthru
          _
        // Predicated region
        $region53: #{bottleneck_forward.1} parent=47 // pred_check
          %p292 = pneg %p67
        $region54: #{bottleneck_forward.1} parent=47 // pred_check_branch
          %294 = sbr.rel (%p292) target = $region56
        $region55: #{bottleneck_forward.1} parent=47 // pred_region
          %295 = dma.done [#allocation7], 512
        $region56: #{bottleneck_forward.1} parent=47 // pred_fallthru
          _
        // Predicated region
        $region57: #{bottleneck_forward.1} parent=47 // pred_check
          %p296 = pneg %p130
        $region58: #{bottleneck_forward.1} parent=47 // pred_check_branch
          %298 = sbr.rel (%p296) target = $region60
        $region59: #{bottleneck_forward.1} parent=47 // pred_region
          %299 = dma.done [#allocation7], 4608
        $region60: #{bottleneck_forward.1} parent=47 // pred_fallthru
          _
        %s300 = sand.u32 %s33, 1
        %s301 = scalar_lea.sflag [#allocation4], %s300
        %s302 = sand.u32 %s33, 1
        %s303 = smul.addr %s302, 256
        %s304 = scalar_lea.vmem [#allocation3], %s303
        %p305 = pneg %p46
        %p306 = pneg %p43
        %p307 = pneg %p67
        %p308 = pneg %p64
        %p309 = pneg %p88
        %p310 = pneg %p85
        %p311 = pneg %p109
        %p312 = pneg %p106
        %p313 = pneg %p130
        %p314 = pneg %p127
        %p315 = pneg %p151
        %p316 = pneg %p148
        %p317 = pneg %p172
        %p318 = pneg %p169
        %p319 = pneg %p198
        %p320 = pneg %p195
        %s321 = sand.u32 %s185, 1
        %s322 = scalar_lea.sflag [#allocation5], %s321
        %s323 = sand.u32 %s185, 1
        %s324 = smul.addr %s323, 256
        %s325 = scalar_lea.vmem [#allocation9], %s324
        %v327 = vld [vmem:[%s287] sm:$0xff]
        %v328 = vld [vmem:[%s287 + $0x8] sm:$0xff]
        %v329 = vld [vmem:[%s287 + $0x10] sm:$0xff]
        %v330 = vld [vmem:[%s287 + $0x18] sm:$0xff]
        %v331 = vld [vmem:[%s287 + $0x20] sm:$0xff]
        %v332 = vld [vmem:[%s287 + $0x28] sm:$0xff]
        %v333 = vld [vmem:[%s287 + $0x30] sm:$0xff]
        %v334 = vld [vmem:[%s287 + $0x38] sm:$0xff]
        %v335 = vld [vmem:[%s287 + $0x40] sm:$0xff]
        %v336 = vld [vmem:[%s287 + $0x48] sm:$0xff]
        %v337 = vld [vmem:[%s287 + $0x50] sm:$0xff]
        %v338 = vld [vmem:[%s287 + $0x58] sm:$0xff]
        %v339 = vld [vmem:[%s287 + $0x60] sm:$0xff]
        %v340 = vld [vmem:[%s287 + $0x68] sm:$0xff]
        %v341 = vld [vmem:[%s287 + $0x70] sm:$0xff]
        %v342 = vld [vmem:[%s287 + $0x78] sm:$0xff]
        %v343 = vld [vmem:[%s287 + $0x80] sm:$0xff]
        %v344 = vld [vmem:[%s287 + $0x88] sm:$0xff]
        %v345 = vld [vmem:[%s287 + $0x90] sm:$0xff]
        %v346 = vld [vmem:[%s287 + $0x98] sm:$0xff]
        %v347 = vld [vmem:[%s287 + $0xa0] sm:$0xff]
        %v348 = vld [vmem:[%s287 + $0xa8] sm:$0xff]
        %v349 = vld [vmem:[%s287 + $0xb0] sm:$0xff]
        %v350 = vld [vmem:[%s287 + $0xb8] sm:$0xff]
        %v351 = vld [vmem:[%s287 + $0xc0] sm:$0xff]
        %v352 = vld [vmem:[%s287 + $0xc8] sm:$0xff]
        %v353 = vld [vmem:[%s287 + $0xd0] sm:$0xff]
        %v354 = vld [vmem:[%s287 + $0xd8] sm:$0xff]
        %v355 = vld [vmem:[%s287 + $0xe0] sm:$0xff]
        %v356 = vld [vmem:[%s287 + $0xe8] sm:$0xff]
        %v357 = vld [vmem:[%s287 + $0xf0] sm:$0xff]
        %v358 = vld [vmem:[%s287 + $0xf8] sm:$0xff]
        %v359 = vpack.c.bf16 %v328, %v327
        %v360 = vpack.c.bf16 %v330, %v329
        %v361 = vpack.c.bf16 %v332, %v331
        %v362 = vpack.c.bf16 %v334, %v333
        %v363 = vpack.c.bf16 %v336, %v335
        %v364 = vpack.c.bf16 %v338, %v337
        %v365 = vpack.c.bf16 %v340, %v339
        %v366 = vpack.c.bf16 %v342, %v341
        %v367 = vpack.c.bf16 %v344, %v343
        %v368 = vpack.c.bf16 %v346, %v345
        %v369 = vpack.c.bf16 %v348, %v347
        %v370 = vpack.c.bf16 %v350, %v349
        %v371 = vpack.c.bf16 %v352, %v351
        %v372 = vpack.c.bf16 %v354, %v353
        %v373 = vpack.c.bf16 %v356, %v355
        %v374 = vpack.c.bf16 %v358, %v357
        %v375 = vld [vmem:[#allocation6] sm:$0xf]
        %v376 = vld [vmem:[#allocation6 + $0x4] sm:$0xf]
        %v377 = vld [vmem:[#allocation6 + $0x8] sm:$0xf]
        %v378 = vld [vmem:[#allocation6 + $0xc] sm:$0xf]
        %v379 = vld [vmem:[#allocation6 + $0x10] sm:$0xf]
        %v380 = vld [vmem:[#allocation6 + $0x14] sm:$0xf]
        %v381 = vld [vmem:[#allocation6 + $0x18] sm:$0xf]
        %v382 = vld [vmem:[#allocation6 + $0x1c] sm:$0xf]
        %v391 = vunpack.c.l.b16 %v375
        %v392 = vunpack.c.l.b16 %v376
        %v393 = vunpack.c.l.b16 %v377
        %v394 = vunpack.c.l.b16 %v378
        %v395 = vunpack.c.l.b16 %v379
        %v396 = vunpack.c.l.b16 %v380
        %v397 = vunpack.c.l.b16 %v381
        %v398 = vunpack.c.l.b16 %v382
        %v399 = vpack.c.b16 %v392, %v391
        %v400 = vpack.c.b16 %v394, %v393
        %v401 = vpack.c.b16 %v396, %v395
        %v402 = vpack.c.b16 %v398, %v397
        %vm407 = vcmask 523264
        %v409 = vsel %vm407, %v359, 0
        %v412 = vsel %vm407, %v360, 0
        %v415 = vsel %vm407, %v361, 0
        %v418 = vsel %vm407, %v362, 0
        %v421 = vsel %vm407, %v363, 0
        %v424 = vsel %vm407, %v364, 0
        %v427 = vsel %vm407, %v365, 0
        %v430 = vsel %vm407, %v366, 0
        %v433 = vsel %vm407, %v367, 0
        %v436 = vsel %vm407, %v368, 0
        %v439 = vsel %vm407, %v369, 0
        %v442 = vsel %vm407, %v370, 0
        %v445 = vsel %vm407, %v371, 0
        %v448 = vsel %vm407, %v372, 0
        %v451 = vsel %vm407, %v373, 0
        %v454 = vsel %vm407, %v374, 0
        %456 = vmatprep.subr.bf16.mxu0 0
        %457 = vmatpush1.bf16.msra.mxu0 %v399
        %458 = vmatprep.subr.bf16.mxu0 0
        %459 = vmatpush1.bf16.msra.mxu0 %v400
        %460 = vmatprep.subr.bf16.mxu0 0
        %461 = vmatpush1.bf16.msra.mxu0 %v401
        %462 = vmatprep.subr.bf16.mxu0 0
        %463 = vmatpush1.bf16.msra.mxu0 %v402
        %464 = vmatprep.subr.bf16.mxu0 0
        %465 = vmatpush1.bf16.msra.mxu0 0
        %466 = vmatprep.subr.bf16.mxu0 0
        %467 = vmatpush1.bf16.msra.mxu0 0
        %468 = vmatprep.subr.bf16.mxu0 0
        %469 = vmatpush1.bf16.msra.mxu0 0
        %470 = vmatprep.subr.bf16.mxu0 0
        %471 = vmatpush1.bf16.msra.mxu0 0
        %472 = vmatprep.subr.bf16.mxu0 0
        %473 = vmatpush1.bf16.msra.mxu0 0
        %474 = vmatprep.subr.bf16.mxu0 0
        %475 = vmatpush1.bf16.msra.mxu0 0
        %476 = vmatprep.subr.bf16.mxu0 0
        %477 = vmatpush1.bf16.msra.mxu0 0
        %478 = vmatprep.subr.bf16.mxu0 0
        %479 = vmatpush1.bf16.msra.mxu0 0
        %480 = vmatprep.subr.bf16.mxu0 0
        %481 = vmatpush1.bf16.msra.mxu0 0
        %482 = vmatprep.subr.bf16.mxu0 0
        %483 = vmatpush1.bf16.msra.mxu0 0
        %484 = vmatprep.subr.bf16.mxu0 0
        %485 = vmatpush1.bf16.msra.mxu0 0
        %486 = vmatprep.subr.bf16.mxu0 0
        %487 = vmatpush1.bf16.msra.mxu0 0
        %488 = vmatprep.mubr.bf16.mxu0 0
        %489 = vmatmul.mubr.bf16.gmra.mrb[0].mxu0 %v409
        %v490 = vpop.f32.mrb[0].mxu0
        %v491 = vadd.f32 0.0, %v490
        %v492 = vpop.f32.mrb[0].mxu0
        %v493 = vpop.f32.mrb[0].mxu0
        %v494 = vadd.f32 0.0, %v493
        %v495 = vpop.f32.mrb[0].mxu0
        %496 = vmatprep.mubr.bf16.mxu0 0
        %497 = vmatmul.mubr.bf16.gmra.mrb[0].mxu0 %v412
        %v498 = vpop.f32.mrb[0].mxu0
        %v499 = vadd.f32 0.0, %v498
        %v500 = vpop.f32.mrb[0].mxu0
        %v501 = vpop.f32.mrb[0].mxu0
        %v502 = vadd.f32 0.0, %v501
        %v503 = vpop.f32.mrb[0].mxu0
        %504 = vmatprep.mubr.bf16.mxu0 0
        %505 = vmatmul.mubr.bf16.gmra.mrb[0].mxu0 %v415
        %v506 = vpop.f32.mrb[0].mxu0
        %v507 = vadd.f32 0.0, %v506
        %v508 = vpop.f32.mrb[0].mxu0
        %v509 = vpop.f32.mrb[0].mxu0
        %v510 = vadd.f32 0.0, %v509
        %v511 = vpop.f32.mrb[0].mxu0
        %512 = vmatprep.mubr.bf16.mxu0 0
        %513 = vmatmul.mubr.bf16.gmra.mrb[0].mxu0 %v418
        %v514 = vpop.f32.mrb[0].mxu0
        %v515 = vadd.f32 0.0, %v514
        %v516 = vpop.f32.mrb[0].mxu0
        %v517 = vpop.f32.mrb[0].mxu0
        %v518 = vadd.f32 0.0, %v517
        %v519 = vpop.f32.mrb[0].mxu0
        %520 = vmatprep.mubr.bf16.mxu0 0
        %521 = vmatmul.mubr.bf16.gmra.mrb[0].mxu0 %v421
        %v522 = vpop.f32.mrb[0].mxu0
        %v523 = vadd.f32 0.0, %v522
        %v524 = vpop.f32.mrb[0].mxu0
        %v525 = vpop.f32.mrb[0].mxu0
        %v526 = vadd.f32 0.0, %v525
        %v527 = vpop.f32.mrb[0].mxu0
        %528 = vmatprep.mubr.bf16.mxu0 0
        %529 = vmatmul.mubr.bf16.gmra.mrb[0].mxu0 %v424
        %v530 = vpop.f32.mrb[0].mxu0
        %v531 = vadd.f32 0.0, %v530
        %v532 = vpop.f32.mrb[0].mxu0
        %v533 = vpop.f32.mrb[0].mxu0
        %v534 = vadd.f32 0.0, %v533
        %v535 = vpop.f32.mrb[0].mxu0
        %536 = vmatprep.mubr.bf16.mxu0 0
        %537 = vmatmul.mubr.bf16.gmra.mrb[0].mxu0 %v427
        %v538 = vpop.f32.mrb[0].mxu0
        %v539 = vadd.f32 0.0, %v538
        %v540 = vpop.f32.mrb[0].mxu0
        %v541 = vpop.f32.mrb[0].mxu0
        %v542 = vadd.f32 0.0, %v541
        %v543 = vpop.f32.mrb[0].mxu0
        %544 = vmatprep.mubr.bf16.mxu0 0
        %545 = vmatmul.mubr.bf16.gmra.mrb[0].mxu0 %v430
        %v546 = vpop.f32.mrb[0].mxu0
        %v547 = vadd.f32 0.0, %v546
        %v548 = vpop.f32.mrb[0].mxu0
        %v549 = vpop.f32.mrb[0].mxu0
        %v550 = vadd.f32 0.0, %v549
        %v551 = vpop.f32.mrb[0].mxu0
        %552 = vmatprep.mubr.bf16.mxu0 0
        %553 = vmatmul.mubr.bf16.gmra.mrb[0].mxu0 %v433
        %v554 = vpop.f32.mrb[0].mxu0
        %v555 = vadd.f32 0.0, %v554
        %v556 = vpop.f32.mrb[0].mxu0
        %v557 = vpop.f32.mrb[0].mxu0
        %v558 = vadd.f32 0.0, %v557
        %v559 = vpop.f32.mrb[0].mxu0
        %560 = vmatprep.mubr.bf16.mxu0 0
        %561 = vmatmul.mubr.bf16.gmra.mrb[0].mxu0 %v436
        %v562 = vpop.f32.mrb[0].mxu0
        %v563 = vadd.f32 0.0, %v562
        %v564 = vpop.f32.mrb[0].mxu0
        %v565 = vpop.f32.mrb[0].mxu0
        %v566 = vadd.f32 0.0, %v565
        %v567 = vpop.f32.mrb[0].mxu0
        %568 = vmatprep.mubr.bf16.mxu0 0
        %569 = vmatmul.mubr.bf16.gmra.mrb[0].mxu0 %v439
        %v570 = vpop.f32.mrb[0].mxu0
        %v571 = vadd.f32 0.0, %v570
        %v572 = vpop.f32.mrb[0].mxu0
        %v573 = vpop.f32.mrb[0].mxu0
        %v574 = vadd.f32 0.0, %v573
        %v575 = vpop.f32.mrb[0].mxu0
        %576 = vmatprep.mubr.bf16.mxu0 0
        %577 = vmatmul.mubr.bf16.gmra.mrb[0].mxu0 %v442
        %v578 = vpop.f32.mrb[0].mxu0
        %v579 = vadd.f32 0.0, %v578
        %v580 = vpop.f32.mrb[0].mxu0
        %v581 = vpop.f32.mrb[0].mxu0
        %v582 = vadd.f32 0.0, %v581
        %v583 = vpop.f32.mrb[0].mxu0
        %584 = vmatprep.mubr.bf16.mxu0 0
        %585 = vmatmul.mubr.bf16.gmra.mrb[0].mxu0 %v445
        %v586 = vpop.f32.mrb[0].mxu0
        %v587 = vadd.f32 0.0, %v586
        %v588 = vpop.f32.mrb[0].mxu0
        %v589 = vpop.f32.mrb[0].mxu0
        %v590 = vadd.f32 0.0, %v589
        %v591 = vpop.f32.mrb[0].mxu0
        %592 = vmatprep.mubr.bf16.mxu0 0
        %593 = vmatmul.mubr.bf16.gmra.mrb[0].mxu0 %v448
        %v594 = vpop.f32.mrb[0].mxu0
        %v595 = vadd.f32 0.0, %v594
        %v596 = vpop.f32.mrb[0].mxu0
        %v597 = vpop.f32.mrb[0].mxu0
        %v598 = vadd.f32 0.0, %v597
        %v599 = vpop.f32.mrb[0].mxu0
        %600 = vmatprep.mubr.bf16.mxu0 0
        %601 = vmatmul.mubr.bf16.gmra.mrb[0].mxu0 %v451
        %v602 = vpop.f32.mrb[0].mxu0
        %v603 = vadd.f32 0.0, %v602
        %v604 = vpop.f32.mrb[0].mxu0
        %v605 = vpop.f32.mrb[0].mxu0
        %v606 = vadd.f32 0.0, %v605
        %v607 = vpop.f32.mrb[0].mxu0
        %608 = vmatprep.mubr.bf16.mxu0 0
        %609 = vmatmul.mubr.bf16.gmra.mrb[0].mxu0 %v454
        %v610 = vpop.f32.mrb[0].mxu0
        %v611 = vadd.f32 0.0, %v610
        %v612 = vpop.f32.mrb[0].mxu0
        %v613 = vpop.f32.mrb[0].mxu0
        %v614 = vadd.f32 0.0, %v613
        %v615 = vpop.f32.mrb[0].mxu0
        %616 = vdwg.mxu0
        %v617 = vld [vmem:[%s2] sm:$0x1]
        %v619 = vlaneseq
        %v620 = vshrl.u32 %v619, 7
        %v621 = vsub.s32 0, %v620
        %v622 = vrot.slane %v617, %v621
        %v624 = vmul.f32 %v491, %v622
        %v625 = vmul.f32 %v494, %v622
        %v626 = vmul.f32 %v499, %v622
        %v627 = vmul.f32 %v502, %v622
        %v628 = vmul.f32 %v507, %v622
        %v629 = vmul.f32 %v510, %v622
        %v630 = vmul.f32 %v515, %v622
        %v631 = vmul.f32 %v518, %v622
        %v632 = vmul.f32 %v523, %v622
        %v633 = vmul.f32 %v526, %v622
        %v634 = vmul.f32 %v531, %v622
        %v635 = vmul.f32 %v534, %v622
        %v636 = vmul.f32 %v539, %v622
        %v637 = vmul.f32 %v542, %v622
        %v638 = vmul.f32 %v547, %v622
        %v639 = vmul.f32 %v550, %v622
        %v640 = vmul.f32 %v555, %v622
        %v641 = vmul.f32 %v558, %v622
        %v642 = vmul.f32 %v563, %v622
        %v643 = vmul.f32 %v566, %v622
        %v644 = vmul.f32 %v571, %v622
        %v645 = vmul.f32 %v574, %v622
        %v646 = vmul.f32 %v579, %v622
        %v647 = vmul.f32 %v582, %v622
        %v648 = vmul.f32 %v587, %v622
        %v649 = vmul.f32 %v590, %v622
        %v650 = vmul.f32 %v595, %v622
        %v651 = vmul.f32 %v598, %v622
        %v652 = vmul.f32 %v603, %v622
        %v653 = vmul.f32 %v606, %v622
        %v654 = vmul.f32 %v611, %v622
        %v655 = vmul.f32 %v614, %v622
        %v656 = vld [vmem:[%s3] sm:$0x1]
        %v658 = vlaneseq
        %v659 = vshrl.u32 %v658, 7
        %v660 = vsub.s32 0, %v659
        %v661 = vrot.slane %v656, %v660
        %v663 = vadd.f32 %v624, %v661
        %v664 = vadd.f32 %v625, %v661
        %v665 = vadd.f32 %v626, %v661
        %v666 = vadd.f32 %v627, %v661
        %v667 = vadd.f32 %v628, %v661
        %v668 = vadd.f32 %v629, %v661
        %v669 = vadd.f32 %v630, %v661
        %v670 = vadd.f32 %v631, %v661
        %v671 = vadd.f32 %v632, %v661
        %v672 = vadd.f32 %v633, %v661
        %v673 = vadd.f32 %v634, %v661
        %v674 = vadd.f32 %v635, %v661
        %v675 = vadd.f32 %v636, %v661
        %v676 = vadd.f32 %v637, %v661
        %v677 = vadd.f32 %v638, %v661
        %v678 = vadd.f32 %v639, %v661
        %v679 = vadd.f32 %v640, %v661
        %v680 = vadd.f32 %v641, %v661
        %v681 = vadd.f32 %v642, %v661
        %v682 = vadd.f32 %v643, %v661
        %v683 = vadd.f32 %v644, %v661
        %v684 = vadd.f32 %v645, %v661
        %v685 = vadd.f32 %v646, %v661
        %v686 = vadd.f32 %v647, %v661
        %v687 = vadd.f32 %v648, %v661
        %v688 = vadd.f32 %v649, %v661
        %v689 = vadd.f32 %v650, %v661
        %v690 = vadd.f32 %v651, %v661
        %v691 = vadd.f32 %v652, %v661
        %v692 = vadd.f32 %v653, %v661
        %v693 = vadd.f32 %v654, %v661
        %v694 = vadd.f32 %v655, %v661
        %v695 = vmax.f32 %v663, 0.0
        %v696 = vmax.f32 %v664, 0.0
        %v697 = vmax.f32 %v665, 0.0
        %v698 = vmax.f32 %v666, 0.0
        %v699 = vmax.f32 %v667, 0.0
        %v700 = vmax.f32 %v668, 0.0
        %v701 = vmax.f32 %v669, 0.0
        %v702 = vmax.f32 %v670, 0.0
        %v703 = vmax.f32 %v671, 0.0
        %v704 = vmax.f32 %v672, 0.0
        %v705 = vmax.f32 %v673, 0.0
        %v706 = vmax.f32 %v674, 0.0
        %v707 = vmax.f32 %v675, 0.0
        %v708 = vmax.f32 %v676, 0.0
        %v709 = vmax.f32 %v677, 0.0
        %v710 = vmax.f32 %v678, 0.0
        %v711 = vmax.f32 %v679, 0.0
        %v712 = vmax.f32 %v680, 0.0
        %v713 = vmax.f32 %v681, 0.0
        %v714 = vmax.f32 %v682, 0.0
        %v715 = vmax.f32 %v683, 0.0
        %v716 = vmax.f32 %v684, 0.0
        %v717 = vmax.f32 %v685, 0.0
        %v718 = vmax.f32 %v686, 0.0
        %v719 = vmax.f32 %v687, 0.0
        %v720 = vmax.f32 %v688, 0.0
        %v721 = vmax.f32 %v689, 0.0
        %v722 = vmax.f32 %v690, 0.0
        %v723 = vmax.f32 %v691, 0.0
        %v724 = vmax.f32 %v692, 0.0
        %v725 = vmax.f32 %v693, 0.0
        %v726 = vmax.f32 %v694, 0.0
        %v727 = vlaneseq
        %v728 = vshrl.u32 %v727, 7
        %v729 = vadd.s32 %v728, 8
        %vm730 = vcmp.eq.s32.totalorder %v728, 0
        %vm731 = vcmp.eq.s32.totalorder %v729, 0
        %v732 = vrot.slane %v695, 7
        %v733 = vrot.slane %v697, 7
        %v734 = vrot.slane %v699, 7
        %v735 = vrot.slane %v701, 7
        %v736 = vrot.slane %v703, 7
        %v737 = vrot.slane %v705, 7
        %v738 = vrot.slane %v707, 7
        %v739 = vrot.slane %v709, 7
        %v740 = vrot.slane %v711, 7
        %v741 = vrot.slane %v713, 7
        %v742 = vrot.slane %v715, 7
        %v743 = vrot.slane %v717, 7
        %v744 = vrot.slane %v719, 7
        %v745 = vrot.slane %v721, 7
        %v746 = vrot.slane %v723, 7
        %v747 = vrot.slane %v725, 7
        %v748 = vrot.slane %v696, 7
        %v749 = vrot.slane %v698, 7
        %v750 = vrot.slane %v700, 7
        %v751 = vrot.slane %v702, 7
        %v752 = vrot.slane %v704, 7
        %v753 = vrot.slane %v706, 7
        %v754 = vrot.slane %v708, 7
        %v755 = vrot.slane %v710, 7
        %v756 = vrot.slane %v712, 7
        %v757 = vrot.slane %v714, 7
        %v758 = vrot.slane %v716, 7
        %v759 = vrot.slane %v718, 7
        %v760 = vrot.slane %v720, 7
        %v761 = vrot.slane %v722, 7
        %v762 = vrot.slane %v724, 7
        %v763 = vrot.slane %v726, 7
        %vm764 = vcmp.lt.s32.totalorder %v728, 1
        %v765 = vsel %vm764, %v732, %v748
        %v766 = vsel %vm764, %v733, %v749
        %v767 = vsel %vm764, %v734, %v750
        %v768 = vsel %vm764, %v735, %v751
        %v769 = vsel %vm764, %v736, %v752
        %v770 = vsel %vm764, %v737, %v753
        %v771 = vsel %vm764, %v738, %v754
        %v772 = vsel %vm764, %v739, %v755
        %v773 = vsel %vm764, %v740, %v756
        %v774 = vsel %vm764, %v741, %v757
        %v775 = vsel %vm764, %v742, %v758
        %v776 = vsel %vm764, %v743, %v759
        %v777 = vsel %vm764, %v744, %v760
        %v778 = vsel %vm764, %v745, %v761
        %v779 = vsel %vm764, %v746, %v762
        %v780 = vsel %vm764, %v747, %v763
        %v781 = vsel %vm764, %v748, %v732
        %v782 = vsel %vm764, %v749, %v733
        %v783 = vsel %vm764, %v750, %v734
        %v784 = vsel %vm764, %v751, %v735
        %v785 = vsel %vm764, %v752, %v736
        %v786 = vsel %vm764, %v753, %v737
        %v787 = vsel %vm764, %v754, %v738
        %v788 = vsel %vm764, %v755, %v739
        %v789 = vsel %vm764, %v756, %v740
        %v790 = vsel %vm764, %v757, %v741
        %v791 = vsel %vm764, %v758, %v742
        %v792 = vsel %vm764, %v759, %v743
        %v793 = vsel %vm764, %v760, %v744
        %v794 = vsel %vm764, %v761, %v745
        %v795 = vsel %vm764, %v762, %v746
        %v796 = vsel %vm764, %v763, %v747
        %v797 = vsel %vm730, 0.0, %v781
        %v798 = vsel %vm731, 0.0, %v765
        %v799 = vsel %vm730, 0.0, %v782
        %v800 = vsel %vm731, 0.0, %v766
        %v801 = vsel %vm730, 0.0, %v783
        %v802 = vsel %vm731, 0.0, %v767
        %v803 = vsel %vm730, 0.0, %v784
        %v804 = vsel %vm731, 0.0, %v768
        %v805 = vsel %vm730, 0.0, %v785
        %v806 = vsel %vm731, 0.0, %v769
        %v807 = vsel %vm730, 0.0, %v786
        %v808 = vsel %vm731, 0.0, %v770
        %v809 = vsel %vm730, 0.0, %v787
        %v810 = vsel %vm731, 0.0, %v771
        %v811 = vsel %vm730, 0.0, %v788
        %v812 = vsel %vm731, 0.0, %v772
        %v813 = vsel %vm730, 0.0, %v789
        %v814 = vsel %vm731, 0.0, %v773
        %v815 = vsel %vm730, 0.0, %v790
        %v816 = vsel %vm731, 0.0, %v774
        %v817 = vsel %vm730, 0.0, %v791
        %v818 = vsel %vm731, 0.0, %v775
        %v819 = vsel %vm730, 0.0, %v792
        %v820 = vsel %vm731, 0.0, %v776
        %v821 = vsel %vm730, 0.0, %v793
        %v822 = vsel %vm731, 0.0, %v777
        %v823 = vsel %vm730, 0.0, %v794
        %v824 = vsel %vm731, 0.0, %v778
        %v825 = vsel %vm730, 0.0, %v795
        %v826 = vsel %vm731, 0.0, %v779
        %v827 = vsel %vm730, 0.0, %v796
        %v828 = vsel %vm731, 0.0, %v780
        %vm829 = vcmp.eq.s32.totalorder %v728, 15
        %vm830 = vcmp.eq.s32.totalorder %v729, 15
        %v831 = vrot.slane %v695, 1
        %v832 = vrot.slane %v697, 1
        %v833 = vrot.slane %v699, 1
        %v834 = vrot.slane %v701, 1
        %v835 = vrot.slane %v703, 1
        %v836 = vrot.slane %v705, 1
        %v837 = vrot.slane %v707, 1
        %v838 = vrot.slane %v709, 1
        %v839 = vrot.slane %v711, 1
        %v840 = vrot.slane %v713, 1
        %v841 = vrot.slane %v715, 1
        %v842 = vrot.slane %v717, 1
        %v843 = vrot.slane %v719, 1
        %v844 = vrot.slane %v721, 1
        %v845 = vrot.slane %v723, 1
        %v846 = vrot.slane %v725, 1
        %v847 = vrot.slane %v696, 1
        %v848 = vrot.slane %v698, 1
        %v849 = vrot.slane %v700, 1
        %v850 = vrot.slane %v702, 1
        %v851 = vrot.slane %v704, 1
        %v852 = vrot.slane %v706, 1
        %v853 = vrot.slane %v708, 1
        %v854 = vrot.slane %v710, 1
        %v855 = vrot.slane %v712, 1
        %v856 = vrot.slane %v714, 1
        %v857 = vrot.slane %v716, 1
        %v858 = vrot.slane %v718, 1
        %v859 = vrot.slane %v720, 1
        %v860 = vrot.slane %v722, 1
        %v861 = vrot.slane %v724, 1
        %v862 = vrot.slane %v726, 1
        %vm863 = vcmp.lt.s32.totalorder %v728, 7
        %v864 = vsel %vm863, %v831, %v847
        %v865 = vsel %vm863, %v832, %v848
        %v866 = vsel %vm863, %v833, %v849
        %v867 = vsel %vm863, %v834, %v850
        %v868 = vsel %vm863, %v835, %v851
        %v869 = vsel %vm863, %v836, %v852
        %v870 = vsel %vm863, %v837, %v853
        %v871 = vsel %vm863, %v838, %v854
        %v872 = vsel %vm863, %v839, %v855
        %v873 = vsel %vm863, %v840, %v856
        %v874 = vsel %vm863, %v841, %v857
        %v875 = vsel %vm863, %v842, %v858
        %v876 = vsel %vm863, %v843, %v859
        %v877 = vsel %vm863, %v844, %v860
        %v878 = vsel %vm863, %v845, %v861
        %v879 = vsel %vm863, %v846, %v862
        %v880 = vsel %vm863, %v847, %v831
        %v881 = vsel %vm863, %v848, %v832
        %v882 = vsel %vm863, %v849, %v833
        %v883 = vsel %vm863, %v850, %v834
        %v884 = vsel %vm863, %v851, %v835
        %v885 = vsel %vm863, %v852, %v836
        %v886 = vsel %vm863, %v853, %v837
        %v887 = vsel %vm863, %v854, %v838
        %v888 = vsel %vm863, %v855, %v839
        %v889 = vsel %vm863, %v856, %v840
        %v890 = vsel %vm863, %v857, %v841
        %v891 = vsel %vm863, %v858, %v842
        %v892 = vsel %vm863, %v859, %v843
        %v893 = vsel %vm863, %v860, %v844
        %v894 = vsel %vm863, %v861, %v845
        %v895 = vsel %vm863, %v862, %v846
        %v896 = vsel %vm829, 0.0, %v864
        %v897 = vsel %vm830, 0.0, %v880
        %v898 = vsel %vm829, 0.0, %v865
        %v899 = vsel %vm830, 0.0, %v881
        %v900 = vsel %vm829, 0.0, %v866
        %v901 = vsel %vm830, 0.0, %v882
        %v902 = vsel %vm829, 0.0, %v867
        %v903 = vsel %vm830, 0.0, %v883
        %v904 = vsel %vm829, 0.0, %v868
        %v905 = vsel %vm830, 0.0, %v884
        %v906 = vsel %vm829, 0.0, %v869
        %v907 = vsel %vm830, 0.0, %v885
        %v908 = vsel %vm829, 0.0, %v870
        %v909 = vsel %vm830, 0.0, %v886
        %v910 = vsel %vm829, 0.0, %v871
        %v911 = vsel %vm830, 0.0, %v887
        %v912 = vsel %vm829, 0.0, %v872
        %v913 = vsel %vm830, 0.0, %v888
        %v914 = vsel %vm829, 0.0, %v873
        %v915 = vsel %vm830, 0.0, %v889
        %v916 = vsel %vm829, 0.0, %v874
        %v917 = vsel %vm830, 0.0, %v890
        %v918 = vsel %vm829, 0.0, %v875
        %v919 = vsel %vm830, 0.0, %v891
        %v920 = vsel %vm829, 0.0, %v876
        %v921 = vsel %vm830, 0.0, %v892
        %v922 = vsel %vm829, 0.0, %v877
        %v923 = vsel %vm830, 0.0, %v893
        %v924 = vsel %vm829, 0.0, %v878
        %v925 = vsel %vm830, 0.0, %v894
        %v926 = vsel %vm829, 0.0, %v879
        %v927 = vsel %vm830, 0.0, %v895
        %928 = vst.msk [vmem:[#allocation2] sm:$0xff] %vm407, 0
        %s929 = scalar_lea.vmem [#allocation2], 136
        %930 = vst.msk [vmem:[%s929] sm:$0xff] %vm407, 0
        %v931 = vpack.c.bf16 %v798, %v797
        %v932 = vpack.c.bf16 %v800, %v799
        %v933 = vpack.c.bf16 %v802, %v801
        %v934 = vpack.c.bf16 %v804, %v803
        %v935 = vpack.c.bf16 %v806, %v805
        %v936 = vpack.c.bf16 %v808, %v807
        %v937 = vpack.c.bf16 %v810, %v809
        %v938 = vpack.c.bf16 %v812, %v811
        %v939 = vpack.c.bf16 %v814, %v813
        %v940 = vpack.c.bf16 %v816, %v815
        %v941 = vpack.c.bf16 %v818, %v817
        %v942 = vpack.c.bf16 %v820, %v819
        %v943 = vpack.c.bf16 %v822, %v821
        %v944 = vpack.c.bf16 %v824, %v823
        %v945 = vpack.c.bf16 %v826, %v825
        %v946 = vpack.c.bf16 %v828, %v827
        %s947 = scalar_lea.vmem [#allocation2], 8
        %948 = vst.msk [vmem:[%s947] sm:$0xff] %vm407, %v931
        %949 = vst.msk [vmem:[%s947 + $0x8] sm:$0xff] %vm407, %v932
        %950 = vst.msk [vmem:[%s947 + $0x10] sm:$0xff] %vm407, %v933
        %951 = vst.msk [vmem:[%s947 + $0x18] sm:$0xff] %vm407, %v934
        %952 = vst.msk [vmem:[%s947 + $0x20] sm:$0xff] %vm407, %v935
        %953 = vst.msk [vmem:[%s947 + $0x28] sm:$0xff] %vm407, %v936
        %954 = vst.msk [vmem:[%s947 + $0x30] sm:$0xff] %vm407, %v937
        %955 = vst.msk [vmem:[%s947 + $0x38] sm:$0xff] %vm407, %v938
        %956 = vst.msk [vmem:[%s947 + $0x40] sm:$0xff] %vm407, %v939
        %957 = vst.msk [vmem:[%s947 + $0x48] sm:$0xff] %vm407, %v940
        %958 = vst.msk [vmem:[%s947 + $0x50] sm:$0xff] %vm407, %v941
        %959 = vst.msk [vmem:[%s947 + $0x58] sm:$0xff] %vm407, %v942
        %960 = vst.msk [vmem:[%s947 + $0x60] sm:$0xff] %vm407, %v943
        %961 = vst.msk [vmem:[%s947 + $0x68] sm:$0xff] %vm407, %v944
        %962 = vst.msk [vmem:[%s947 + $0x70] sm:$0xff] %vm407, %v945
        %963 = vst.msk [vmem:[%s947 + $0x78] sm:$0xff] %vm407, %v946
        %s964 = scalar_lea.vmem [#allocation2], 144
        %965 = vst.msk [vmem:[%s964] sm:$0xff] %vm407, 0
        %s966 = scalar_lea.vmem [#allocation2], 280
        %967 = vst.msk [vmem:[%s966] sm:$0xff] %vm407, 0
        %v968 = vpack.c.bf16 %v696, %v695
        %v969 = vpack.c.bf16 %v698, %v697
        %v970 = vpack.c.bf16 %v700, %v699
        %v971 = vpack.c.bf16 %v702, %v701
        %v972 = vpack.c.bf16 %v704, %v703
        %v973 = vpack.c.bf16 %v706, %v705
        %v974 = vpack.c.bf16 %v708, %v707
        %v975 = vpack.c.bf16 %v710, %v709
        %v976 = vpack.c.bf16 %v712, %v711
        %v977 = vpack.c.bf16 %v714, %v713
        %v978 = vpack.c.bf16 %v716, %v715
        %v979 = vpack.c.bf16 %v718, %v717
        %v980 = vpack.c.bf16 %v720, %v719
        %v981 = vpack.c.bf16 %v722, %v721
        %v982 = vpack.c.bf16 %v724, %v723
        %v983 = vpack.c.bf16 %v726, %v725
        %s984 = scalar_lea.vmem [#allocation2], 152
        %985 = vst.msk [vmem:[%s984] sm:$0xff] %vm407, %v968
        %986 = vst.msk [vmem:[%s984 + $0x8] sm:$0xff] %vm407, %v969
        %987 = vst.msk [vmem:[%s984 + $0x10] sm:$0xff] %vm407, %v970
        %988 = vst.msk [vmem:[%s984 + $0x18] sm:$0xff] %vm407, %v971
        %989 = vst.msk [vmem:[%s984 + $0x20] sm:$0xff] %vm407, %v972
        %990 = vst.msk [vmem:[%s984 + $0x28] sm:$0xff] %vm407, %v973
        %991 = vst.msk [vmem:[%s984 + $0x30] sm:$0xff] %vm407, %v974
        %992 = vst.msk [vmem:[%s984 + $0x38] sm:$0xff] %vm407, %v975
        %993 = vst.msk [vmem:[%s984 + $0x40] sm:$0xff] %vm407, %v976
        %994 = vst.msk [vmem:[%s984 + $0x48] sm:$0xff] %vm407, %v977
        %995 = vst.msk [vmem:[%s984 + $0x50] sm:$0xff] %vm407, %v978
        %996 = vst.msk [vmem:[%s984 + $0x58] sm:$0xff] %vm407, %v979
        %997 = vst.msk [vmem:[%s984 + $0x60] sm:$0xff] %vm407, %v980
        %998 = vst.msk [vmem:[%s984 + $0x68] sm:$0xff] %vm407, %v981
        %999 = vst.msk [vmem:[%s984 + $0x70] sm:$0xff] %vm407, %v982
        %1000 = vst.msk [vmem:[%s984 + $0x78] sm:$0xff] %vm407, %v983
        %s1001 = scalar_lea.vmem [#allocation2], 288
        %1002 = vst.msk [vmem:[%s1001] sm:$0xff] %vm407, 0
        %s1003 = scalar_lea.vmem [#allocation2], 424
        %1004 = vst.msk [vmem:[%s1003] sm:$0xff] %vm407, 0
        %v1005 = vpack.c.bf16 %v897, %v896
        %v1006 = vpack.c.bf16 %v899, %v898
        %v1007 = vpack.c.bf16 %v901, %v900
        %v1008 = vpack.c.bf16 %v903, %v902
        %v1009 = vpack.c.bf16 %v905, %v904
        %v1010 = vpack.c.bf16 %v907, %v906
        %v1011 = vpack.c.bf16 %v909, %v908
        %v1012 = vpack.c.bf16 %v911, %v910
        %v1013 = vpack.c.bf16 %v913, %v912
        %v1014 = vpack.c.bf16 %v915, %v914
        %v1015 = vpack.c.bf16 %v917, %v916
        %v1016 = vpack.c.bf16 %v919, %v918
        %v1017 = vpack.c.bf16 %v921, %v920
        %v1018 = vpack.c.bf16 %v923, %v922
        %v1019 = vpack.c.bf16 %v925, %v924
        %v1020 = vpack.c.bf16 %v927, %v926
        %s1021 = scalar_lea.vmem [#allocation2], 296
        %1022 = vst.msk [vmem:[%s1021] sm:$0xff] %vm407, %v1005
        %1023 = vst.msk [vmem:[%s1021 + $0x8] sm:$0xff] %vm407, %v1006
        %1024 = vst.msk [vmem:[%s1021 + $0x10] sm:$0xff] %vm407, %v1007
        %1025 = vst.msk [vmem:[%s1021 + $0x18] sm:$0xff] %vm407, %v1008
        %1026 = vst.msk [vmem:[%s1021 + $0x20] sm:$0xff] %vm407, %v1009
        %1027 = vst.msk [vmem:[%s1021 + $0x28] sm:$0xff] %vm407, %v1010
        %1028 = vst.msk [vmem:[%s1021 + $0x30] sm:$0xff] %vm407, %v1011
        %1029 = vst.msk [vmem:[%s1021 + $0x38] sm:$0xff] %vm407, %v1012
        %1030 = vst.msk [vmem:[%s1021 + $0x40] sm:$0xff] %vm407, %v1013
        %1031 = vst.msk [vmem:[%s1021 + $0x48] sm:$0xff] %vm407, %v1014
        %1032 = vst.msk [vmem:[%s1021 + $0x50] sm:$0xff] %vm407, %v1015
        %1033 = vst.msk [vmem:[%s1021 + $0x58] sm:$0xff] %vm407, %v1016
        %1034 = vst.msk [vmem:[%s1021 + $0x60] sm:$0xff] %vm407, %v1017
        %1035 = vst.msk [vmem:[%s1021 + $0x68] sm:$0xff] %vm407, %v1018
        %1036 = vst.msk [vmem:[%s1021 + $0x70] sm:$0xff] %vm407, %v1019
        %1037 = vst.msk [vmem:[%s1021 + $0x78] sm:$0xff] %vm407, %v1020
        %v1038 = vld [vmem:[#allocation2] sm:$0xff]
        %v1039 = vld [vmem:[#allocation2 + $0x8] sm:$0xff]
        %v1040 = vld [vmem:[#allocation2 + $0x10] sm:$0xff]
        %v1041 = vld [vmem:[#allocation2 + $0x18] sm:$0xff]
        %v1042 = vld [vmem:[#allocation2 + $0x20] sm:$0xff]
        %v1043 = vld [vmem:[#allocation2 + $0x28] sm:$0xff]
        %v1044 = vld [vmem:[#allocation2 + $0x30] sm:$0xff]
        %v1045 = vld [vmem:[#allocation2 + $0x38] sm:$0xff]
        %v1046 = vld [vmem:[#allocation2 + $0x40] sm:$0xff]
        %v1047 = vld [vmem:[#allocation2 + $0x48] sm:$0xff]
        %v1048 = vld [vmem:[#allocation2 + $0x50] sm:$0xff]
        %v1049 = vld [vmem:[#allocation2 + $0x58] sm:$0xff]
        %v1050 = vld [vmem:[#allocation2 + $0x60] sm:$0xff]
        %v1051 = vld [vmem:[#allocation2 + $0x68] sm:$0xff]
        %v1052 = vld [vmem:[#allocation2 + $0x70] sm:$0xff]
        %v1053 = vld [vmem:[#allocation2 + $0x78] sm:$0xff]
        %v1054 = vld [vmem:[#allocation8] sm:$0xf]
        %v1055 = vld [vmem:[#allocation8 + $0x4] sm:$0xf]
        %v1056 = vld [vmem:[#allocation8 + $0x8] sm:$0xf]
        %v1057 = vld [vmem:[#allocation8 + $0xc] sm:$0xf]
        %v1058 = vld [vmem:[#allocation8 + $0x10] sm:$0xf]
        %v1059 = vld [vmem:[#allocation8 + $0x14] sm:$0xf]
        %v1060 = vld [vmem:[#allocation8 + $0x18] sm:$0xf]
        %v1061 = vld [vmem:[#allocation8 + $0x1c] sm:$0xf]
        %v1062 = vld [vmem:[%s964] sm:$0xff]
        %v1063 = vld [vmem:[%s964 + $0x8] sm:$0xff]
        %v1064 = vld [vmem:[%s964 + $0x10] sm:$0xff]
        %v1065 = vld [vmem:[%s964 + $0x18] sm:$0xff]
        %v1066 = vld [vmem:[%s964 + $0x20] sm:$0xff]
        %v1067 = vld [vmem:[%s964 + $0x28] sm:$0xff]
        %v1068 = vld [vmem:[%s964 + $0x30] sm:$0xff]
        %v1069 = vld [vmem:[%s964 + $0x38] sm:$0xff]
        %v1070 = vld [vmem:[%s964 + $0x40] sm:$0xff]
        %v1071 = vld [vmem:[%s964 + $0x48] sm:$0xff]
        %v1072 = vld [vmem:[%s964 + $0x50] sm:$0xff]
        %v1073 = vld [vmem:[%s964 + $0x58] sm:$0xff]
        %v1074 = vld [vmem:[%s964 + $0x60] sm:$0xff]
        %v1075 = vld [vmem:[%s964 + $0x68] sm:$0xff]
        %v1076 = vld [vmem:[%s964 + $0x70] sm:$0xff]
        %v1077 = vld [vmem:[%s964 + $0x78] sm:$0xff]
        %s1078 = scalar_lea.vmem [#allocation8], 32
        %v1079 = vld [vmem:[%s1078] sm:$0xf]
        %v1080 = vld [vmem:[%s1078 + $0x4] sm:$0xf]
        %v1081 = vld [vmem:[%s1078 + $0x8] sm:$0xf]
        %v1082 = vld [vmem:[%s1078 + $0xc] sm:$0xf]
        %v1083 = vld [vmem:[%s1078 + $0x10] sm:$0xf]
        %v1084 = vld [vmem:[%s1078 + $0x14] sm:$0xf]
        %v1085 = vld [vmem:[%s1078 + $0x18] sm:$0xf]
        %v1086 = vld [vmem:[%s1078 + $0x1c] sm:$0xf]
        %v1095 = vunpack.c.l.b16 %v1079
        %v1096 = vunpack.c.l.b16 %v1080
        %v1097 = vunpack.c.l.b16 %v1081
        %v1098 = vunpack.c.l.b16 %v1082
        %v1099 = vunpack.c.l.b16 %v1083
        %v1100 = vunpack.c.l.b16 %v1084
        %v1101 = vunpack.c.l.b16 %v1085
        %v1102 = vunpack.c.l.b16 %v1086
        %v1103 = vpack.c.b16 %v1096, %v1095
        %v1104 = vpack.c.b16 %v1098, %v1097
        %v1105 = vpack.c.b16 %v1100, %v1099
        %v1106 = vpack.c.b16 %v1102, %v1101
        %v1112 = vsel %vm407, %v1062, 0
        %v1115 = vsel %vm407, %v1063, 0
        %v1118 = vsel %vm407, %v1064, 0
        %v1121 = vsel %vm407, %v1065, 0
        %v1124 = vsel %vm407, %v1066, 0
        %v1127 = vsel %vm407, %v1067, 0
        %v1130 = vsel %vm407, %v1068, 0
        %v1133 = vsel %vm407, %v1069, 0
        %v1136 = vsel %vm407, %v1070, 0
        %v1139 = vsel %vm407, %v1071, 0
        %v1142 = vsel %vm407, %v1072, 0
        %v1145 = vsel %vm407, %v1073, 0
        %v1148 = vsel %vm407, %v1074, 0
        %v1151 = vsel %vm407, %v1075, 0
        %v1154 = vsel %vm407, %v1076, 0
        %v1157 = vsel %vm407, %v1077, 0
        %1159 = vmatprep.subr.bf16.mxu0 0
        %1160 = vmatpush1.bf16.msra.mxu0 %v1103
        %1161 = vmatprep.subr.bf16.mxu0 0
        %1162 = vmatpush1.bf16.msra.mxu0 %v1104
        %1163 = vmatprep.subr.bf16.mxu0 0
        %1164 = vmatpush1.bf16.msra.mxu0 %v1105
        %1165 = vmatprep.subr.bf16.mxu0 0
        %1166 = vmatpush1.bf16.msra.mxu0 %v1106
        %1167 = vmatprep.subr.bf16.mxu0 0
        %1168 = vmatpush1.bf16.msra.mxu0 0
        %1169 = vmatprep.subr.bf16.mxu0 0
        %1170 = vmatpush1.bf16.msra.mxu0 0
        %1171 = vmatprep.subr.bf16.mxu0 0
        %1172 = vmatpush1.bf16.msra.mxu0 0
        %1173 = vmatprep.subr.bf16.mxu0 0
        %1174 = vmatpush1.bf16.msra.mxu0 0
        %1175 = vmatprep.subr.bf16.mxu0 0
        %1176 = vmatpush1.bf16.msra.mxu0 0
        %1177 = vmatprep.subr.bf16.mxu0 0
        %1178 = vmatpush1.bf16.msra.mxu0 0
        %1179 = vmatprep.subr.bf16.mxu0 0
        %1180 = vmatpush1.bf16.msra.mxu0 0
        %1181 = vmatprep.subr.bf16.mxu0 0
        %1182 = vmatpush1.bf16.msra.mxu0 0
        %1183 = vmatprep.subr.bf16.mxu0 0
        %1184 = vmatpush1.bf16.msra.mxu0 0
        %1185 = vmatprep.subr.bf16.mxu0 0
        %1186 = vmatpush1.bf16.msra.mxu0 0
        %1187 = vmatprep.subr.bf16.mxu0 0
        %1188 = vmatpush1.bf16.msra.mxu0 0
        %1189 = vmatprep.subr.bf16.mxu0 0
        %1190 = vmatpush1.bf16.msra.mxu0 0
        %1191 = vmatprep.mubr.bf16.mxu0 0
        %1192 = vmatmul.mubr.bf16.gmra.mrb[0].mxu0 %v1112
        %v1193 = vpop.f32.mrb[0].mxu0
        %v1194 = vadd.f32 0.0, %v1193
        %v1195 = vpop.f32.mrb[0].mxu0
        %v1196 = vpop.f32.mrb[0].mxu0
        %v1197 = vadd.f32 0.0, %v1196
        %v1198 = vpop.f32.mrb[0].mxu0
        %1199 = vmatprep.mubr.bf16.mxu0 0
        %1200 = vmatmul.mubr.bf16.gmra.mrb[0].mxu0 %v1115
        %v1201 = vpop.f32.mrb[0].mxu0
        %v1202 = vadd.f32 0.0, %v1201
        %v1203 = vpop.f32.mrb[0].mxu0
        %v1204 = vpop.f32.mrb[0].mxu0
        %v1205 = vadd.f32 0.0, %v1204
        %v1206 = vpop.f32.mrb[0].mxu0
        %1207 = vmatprep.mubr.bf16.mxu0 0
        %1208 = vmatmul.mubr.bf16.gmra.mrb[0].mxu0 %v1118
        %v1209 = vpop.f32.mrb[0].mxu0
        %v1210 = vadd.f32 0.0, %v1209
        %v1211 = vpop.f32.mrb[0].mxu0
        %v1212 = vpop.f32.mrb[0].mxu0
        %v1213 = vadd.f32 0.0, %v1212
        %v1214 = vpop.f32.mrb[0].mxu0
        %1215 = vmatprep.mubr.bf16.mxu0 0
        %1216 = vmatmul.mubr.bf16.gmra.mrb[0].mxu0 %v1121
        %v1217 = vpop.f32.mrb[0].mxu0
        %v1218 = vadd.f32 0.0, %v1217
        %v1219 = vpop.f32.mrb[0].mxu0
        %v1220 = vpop.f32.mrb[0].mxu0
        %v1221 = vadd.f32 0.0, %v1220
        %v1222 = vpop.f32.mrb[0].mxu0
        %1223 = vmatprep.mubr.bf16.mxu0 0
        %1224 = vmatmul.mubr.bf16.gmra.mrb[0].mxu0 %v1124
        %v1225 = vpop.f32.mrb[0].mxu0
        %v1226 = vadd.f32 0.0, %v1225
        %v1227 = vpop.f32.mrb[0].mxu0
        %v1228 = vpop.f32.mrb[0].mxu0
        %v1229 = vadd.f32 0.0, %v1228
        %v1230 = vpop.f32.mrb[0].mxu0
        %1231 = vmatprep.mubr.bf16.mxu0 0
        %1232 = vmatmul.mubr.bf16.gmra.mrb[0].mxu0 %v1127
        %v1233 = vpop.f32.mrb[0].mxu0
        %v1234 = vadd.f32 0.0, %v1233
        %v1235 = vpop.f32.mrb[0].mxu0
        %v1236 = vpop.f32.mrb[0].mxu0
        %v1237 = vadd.f32 0.0, %v1236
        %v1238 = vpop.f32.mrb[0].mxu0
        %1239 = vmatprep.mubr.bf16.mxu0 0
        %1240 = vmatmul.mubr.bf16.gmra.mrb[0].mxu0 %v1130
        %v1241 = vpop.f32.mrb[0].mxu0
        %v1242 = vadd.f32 0.0, %v1241
        %v1243 = vpop.f32.mrb[0].mxu0
        %v1244 = vpop.f32.mrb[0].mxu0
        %v1245 = vadd.f32 0.0, %v1244
        %v1246 = vpop.f32.mrb[0].mxu0
        %1247 = vmatprep.mubr.bf16.mxu0 0
        %1248 = vmatmul.mubr.bf16.gmra.mrb[0].mxu0 %v1133
        %v1249 = vpop.f32.mrb[0].mxu0
        %v1250 = vadd.f32 0.0, %v1249
        %v1251 = vpop.f32.mrb[0].mxu0
        %v1252 = vpop.f32.mrb[0].mxu0
        %v1253 = vadd.f32 0.0, %v1252
        %v1254 = vpop.f32.mrb[0].mxu0
        %1255 = vmatprep.mubr.bf16.mxu0 0
        %1256 = vmatmul.mubr.bf16.gmra.mrb[0].mxu0 %v1136
        %v1257 = vpop.f32.mrb[0].mxu0
        %v1258 = vadd.f32 0.0, %v1257
        %v1259 = vpop.f32.mrb[0].mxu0
        %v1260 = vpop.f32.mrb[0].mxu0
        %v1261 = vadd.f32 0.0, %v1260
        %v1262 = vpop.f32.mrb[0].mxu0
        %1263 = vmatprep.mubr.bf16.mxu0 0
        %1264 = vmatmul.mubr.bf16.gmra.mrb[0].mxu0 %v1139
        %v1265 = vpop.f32.mrb[0].mxu0
        %v1266 = vadd.f32 0.0, %v1265
        %v1267 = vpop.f32.mrb[0].mxu0
        %v1268 = vpop.f32.mrb[0].mxu0
        %v1269 = vadd.f32 0.0, %v1268
        %v1270 = vpop.f32.mrb[0].mxu0
        %1271 = vmatprep.mubr.bf16.mxu0 0
        %1272 = vmatmul.mubr.bf16.gmra.mrb[0].mxu0 %v1142
        %v1273 = vpop.f32.mrb[0].mxu0
        %v1274 = vadd.f32 0.0, %v1273
        %v1275 = vpop.f32.mrb[0].mxu0
        %v1276 = vpop.f32.mrb[0].mxu0
        %v1277 = vadd.f32 0.0, %v1276
        %v1278 = vpop.f32.mrb[0].mxu0
        %1279 = vmatprep.mubr.bf16.mxu0 0
        %1280 = vmatmul.mubr.bf16.gmra.mrb[0].mxu0 %v1145
        %v1281 = vpop.f32.mrb[0].mxu0
        %v1282 = vadd.f32 0.0, %v1281
        %v1283 = vpop.f32.mrb[0].mxu0
        %v1284 = vpop.f32.mrb[0].mxu0
        %v1285 = vadd.f32 0.0, %v1284
        %v1286 = vpop.f32.mrb[0].mxu0
        %1287 = vmatprep.mubr.bf16.mxu0 0
        %1288 = vmatmul.mubr.bf16.gmra.mrb[0].mxu0 %v1148
        %v1289 = vpop.f32.mrb[0].mxu0
        %v1290 = vadd.f32 0.0, %v1289
        %v1291 = vpop.f32.mrb[0].mxu0
        %v1292 = vpop.f32.mrb[0].mxu0
        %v1293 = vadd.f32 0.0, %v1292
        %v1294 = vpop.f32.mrb[0].mxu0
        %1295 = vmatprep.mubr.bf16.mxu0 0
        %1296 = vmatmul.mubr.bf16.gmra.mrb[0].mxu0 %v1151
        %v1297 = vpop.f32.mrb[0].mxu0
        %v1298 = vadd.f32 0.0, %v1297
        %v1299 = vpop.f32.mrb[0].mxu0
        %v1300 = vpop.f32.mrb[0].mxu0
        %v1301 = vadd.f32 0.0, %v1300
        %v1302 = vpop.f32.mrb[0].mxu0
        %1303 = vmatprep.mubr.bf16.mxu0 0
        %1304 = vmatmul.mubr.bf16.gmra.mrb[0].mxu0 %v1154
        %v1305 = vpop.f32.mrb[0].mxu0
        %v1306 = vadd.f32 0.0, %v1305
        %v1307 = vpop.f32.mrb[0].mxu0
        %v1308 = vpop.f32.mrb[0].mxu0
        %v1309 = vadd.f32 0.0, %v1308
        %v1310 = vpop.f32.mrb[0].mxu0
        %1311 = vmatprep.mubr.bf16.mxu0 0
        %1312 = vmatmul.mubr.bf16.gmra.mrb[0].mxu0 %v1157
        %v1313 = vpop.f32.mrb[0].mxu0
        %v1314 = vadd.f32 0.0, %v1313
        %v1315 = vpop.f32.mrb[0].mxu0
        %v1316 = vpop.f32.mrb[0].mxu0
        %v1317 = vadd.f32 0.0, %v1316
        %v1318 = vpop.f32.mrb[0].mxu0
        %1319 = vdwg.mxu0
        %v1328 = vunpack.c.l.b16 %v1054
        %v1329 = vunpack.c.l.b16 %v1055
        %v1330 = vunpack.c.l.b16 %v1056
        %v1331 = vunpack.c.l.b16 %v1057
        %v1332 = vunpack.c.l.b16 %v1058
        %v1333 = vunpack.c.l.b16 %v1059
        %v1334 = vunpack.c.l.b16 %v1060
        %v1335 = vunpack.c.l.b16 %v1061
        %v1336 = vpack.c.b16 %v1329, %v1328
        %v1337 = vpack.c.b16 %v1331, %v1330
        %v1338 = vpack.c.b16 %v1333, %v1332
        %v1339 = vpack.c.b16 %v1335, %v1334
        %v1345 = vsel %vm407, %v1038, 0
        %v1348 = vsel %vm407, %v1039, 0
        %v1351 = vsel %vm407, %v1040, 0
        %v1354 = vsel %vm407, %v1041, 0
        %v1357 = vsel %vm407, %v1042, 0
        %v1360 = vsel %vm407, %v1043, 0
        %v1363 = vsel %vm407, %v1044, 0
        %v1366 = vsel %vm407, %v1045, 0
        %v1369 = vsel %vm407, %v1046, 0
        %v1372 = vsel %vm407, %v1047, 0
        %v1375 = vsel %vm407, %v1048, 0
        %v1378 = vsel %vm407, %v1049, 0
        %v1381 = vsel %vm407, %v1050, 0
        %v1384 = vsel %vm407, %v1051, 0
        %v1387 = vsel %vm407, %v1052, 0
        %v1390 = vsel %vm407, %v1053, 0
        %1392 = vmatprep.subr.bf16.mxu0 0
        %1393 = vmatpush1.bf16.msra.mxu0 %v1336
        %1394 = vmatprep.subr.bf16.mxu0 0
        %1395 = vmatpush1.bf16.msra.mxu0 %v1337
        %1396 = vmatprep.subr.bf16.mxu0 0
        %1397 = vmatpush1.bf16.msra.mxu0 %v1338
        %1398 = vmatprep.subr.bf16.mxu0 0
        %1399 = vmatpush1.bf16.msra.mxu0 %v1339
        %1400 = vmatprep.subr.bf16.mxu0 0
        %1401 = vmatpush1.bf16.msra.mxu0 0
        %1402 = vmatprep.subr.bf16.mxu0 0
        %1403 = vmatpush1.bf16.msra.mxu0 0
        %1404 = vmatprep.subr.bf16.mxu0 0
        %1405 = vmatpush1.bf16.msra.mxu0 0
        %1406 = vmatprep.subr.bf16.mxu0 0
        %1407 = vmatpush1.bf16.msra.mxu0 0
        %1408 = vmatprep.subr.bf16.mxu0 0
        %1409 = vmatpush1.bf16.msra.mxu0 0
        %1410 = vmatprep.subr.bf16.mxu0 0
        %1411 = vmatpush1.bf16.msra.mxu0 0
        %1412 = vmatprep.subr.bf16.mxu0 0
        %1413 = vmatpush1.bf16.msra.mxu0 0
        %1414 = vmatprep.subr.bf16.mxu0 0
        %1415 = vmatpush1.bf16.msra.mxu0 0
        %1416 = vmatprep.subr.bf16.mxu0 0
        %1417 = vmatpush1.bf16.msra.mxu0 0
        %1418 = vmatprep.subr.bf16.mxu0 0
        %1419 = vmatpush1.bf16.msra.mxu0 0
        %1420 = vmatprep.subr.bf16.mxu0 0
        %1421 = vmatpush1.bf16.msra.mxu0 0
        %1422 = vmatprep.subr.bf16.mxu0 0
        %1423 = vmatpush1.bf16.msra.mxu0 0
        %1424 = vmatprep.mubr.bf16.mxu0 0
        %1425 = vmatmul.mubr.bf16.gmra.mrb[0].mxu0 %v1345
        %v1426 = vpop.f32.mrb[0].mxu0
        %v1427 = vadd.f32 %v1194, %v1426
        %v1428 = vpop.f32.mrb[0].mxu0
        %v1429 = vpop.f32.mrb[0].mxu0
        %v1430 = vadd.f32 %v1197, %v1429
        %v1431 = vpop.f32.mrb[0].mxu0
        %1432 = vmatprep.mubr.bf16.mxu0 0
        %1433 = vmatmul.mubr.bf16.gmra.mrb[0].mxu0 %v1348
        %v1434 = vpop.f32.mrb[0].mxu0
        %v1435 = vadd.f32 %v1202, %v1434
        %v1436 = vpop.f32.mrb[0].mxu0
        %v1437 = vpop.f32.mrb[0].mxu0
        %v1438 = vadd.f32 %v1205, %v1437
        %v1439 = vpop.f32.mrb[0].mxu0
        %1440 = vmatprep.mubr.bf16.mxu0 0
        %1441 = vmatmul.mubr.bf16.gmra.mrb[0].mxu0 %v1351
        %v1442 = vpop.f32.mrb[0].mxu0
        %v1443 = vadd.f32 %v1210, %v1442
        %v1444 = vpop.f32.mrb[0].mxu0
        %v1445 = vpop.f32.mrb[0].mxu0
        %v1446 = vadd.f32 %v1213, %v1445
        %v1447 = vpop.f32.mrb[0].mxu0
        %1448 = vmatprep.mubr.bf16.mxu0 0
        %1449 = vmatmul.mubr.bf16.gmra.mrb[0].mxu0 %v1354
        %v1450 = vpop.f32.mrb[0].mxu0
        %v1451 = vadd.f32 %v1218, %v1450
        %v1452 = vpop.f32.mrb[0].mxu0
        %v1453 = vpop.f32.mrb[0].mxu0
        %v1454 = vadd.f32 %v1221, %v1453
        %v1455 = vpop.f32.mrb[0].mxu0
        %1456 = vmatprep.mubr.bf16.mxu0 0
        %1457 = vmatmul.mubr.bf16.gmra.mrb[0].mxu0 %v1357
        %v1458 = vpop.f32.mrb[0].mxu0
        %v1459 = vadd.f32 %v1226, %v1458
        %v1460 = vpop.f32.mrb[0].mxu0
        %v1461 = vpop.f32.mrb[0].mxu0
        %v1462 = vadd.f32 %v1229, %v1461
        %v1463 = vpop.f32.mrb[0].mxu0
        %1464 = vmatprep.mubr.bf16.mxu0 0
        %1465 = vmatmul.mubr.bf16.gmra.mrb[0].mxu0 %v1360
        %v1466 = vpop.f32.mrb[0].mxu0
        %v1467 = vadd.f32 %v1234, %v1466
        %v1468 = vpop.f32.mrb[0].mxu0
        %v1469 = vpop.f32.mrb[0].mxu0
        %v1470 = vadd.f32 %v1237, %v1469
        %v1471 = vpop.f32.mrb[0].mxu0
        %1472 = vmatprep.mubr.bf16.mxu0 0
        %1473 = vmatmul.mubr.bf16.gmra.mrb[0].mxu0 %v1363
        %v1474 = vpop.f32.mrb[0].mxu0
        %v1475 = vadd.f32 %v1242, %v1474
        %v1476 = vpop.f32.mrb[0].mxu0
        %v1477 = vpop.f32.mrb[0].mxu0
        %v1478 = vadd.f32 %v1245, %v1477
        %v1479 = vpop.f32.mrb[0].mxu0
        %1480 = vmatprep.mubr.bf16.mxu0 0
        %1481 = vmatmul.mubr.bf16.gmra.mrb[0].mxu0 %v1366
        %v1482 = vpop.f32.mrb[0].mxu0
        %v1483 = vadd.f32 %v1250, %v1482
        %v1484 = vpop.f32.mrb[0].mxu0
        %v1485 = vpop.f32.mrb[0].mxu0
        %v1486 = vadd.f32 %v1253, %v1485
        %v1487 = vpop.f32.mrb[0].mxu0
        %1488 = vmatprep.mubr.bf16.mxu0 0
        %1489 = vmatmul.mubr.bf16.gmra.mrb[0].mxu0 %v1369
        %v1490 = vpop.f32.mrb[0].mxu0
        %v1491 = vadd.f32 %v1258, %v1490
        %v1492 = vpop.f32.mrb[0].mxu0
        %v1493 = vpop.f32.mrb[0].mxu0
        %v1494 = vadd.f32 %v1261, %v1493
        %v1495 = vpop.f32.mrb[0].mxu0
        %1496 = vmatprep.mubr.bf16.mxu0 0
        %1497 = vmatmul.mubr.bf16.gmra.mrb[0].mxu0 %v1372
        %v1498 = vpop.f32.mrb[0].mxu0
        %v1499 = vadd.f32 %v1266, %v1498
        %v1500 = vpop.f32.mrb[0].mxu0
        %v1501 = vpop.f32.mrb[0].mxu0
        %v1502 = vadd.f32 %v1269, %v1501
        %v1503 = vpop.f32.mrb[0].mxu0
        %1504 = vmatprep.mubr.bf16.mxu0 0
        %1505 = vmatmul.mubr.bf16.gmra.mrb[0].mxu0 %v1375
        %v1506 = vpop.f32.mrb[0].mxu0
        %v1507 = vadd.f32 %v1274, %v1506
        %v1508 = vpop.f32.mrb[0].mxu0
        %v1509 = vpop.f32.mrb[0].mxu0
        %v1510 = vadd.f32 %v1277, %v1509
        %v1511 = vpop.f32.mrb[0].mxu0
        %1512 = vmatprep.mubr.bf16.mxu0 0
        %1513 = vmatmul.mubr.bf16.gmra.mrb[0].mxu0 %v1378
        %v1514 = vpop.f32.mrb[0].mxu0
        %v1515 = vadd.f32 %v1282, %v1514
        %v1516 = vpop.f32.mrb[0].mxu0
        %v1517 = vpop.f32.mrb[0].mxu0
        %v1518 = vadd.f32 %v1285, %v1517
        %v1519 = vpop.f32.mrb[0].mxu0
        %1520 = vmatprep.mubr.bf16.mxu0 0
        %1521 = vmatmul.mubr.bf16.gmra.mrb[0].mxu0 %v1381
        %v1522 = vpop.f32.mrb[0].mxu0
        %v1523 = vadd.f32 %v1290, %v1522
        %v1524 = vpop.f32.mrb[0].mxu0
        %v1525 = vpop.f32.mrb[0].mxu0
        %v1526 = vadd.f32 %v1293, %v1525
        %v1527 = vpop.f32.mrb[0].mxu0
        %1528 = vmatprep.mubr.bf16.mxu0 0
        %1529 = vmatmul.mubr.bf16.gmra.mrb[0].mxu0 %v1384
        %v1530 = vpop.f32.mrb[0].mxu0
        %v1531 = vadd.f32 %v1298, %v1530
        %v1532 = vpop.f32.mrb[0].mxu0
        %v1533 = vpop.f32.mrb[0].mxu0
        %v1534 = vadd.f32 %v1301, %v1533
        %v1535 = vpop.f32.mrb[0].mxu0
        %1536 = vmatprep.mubr.bf16.mxu0 0
        %1537 = vmatmul.mubr.bf16.gmra.mrb[0].mxu0 %v1387
        %v1538 = vpop.f32.mrb[0].mxu0
        %v1539 = vadd.f32 %v1306, %v1538
        %v1540 = vpop.f32.mrb[0].mxu0
        %v1541 = vpop.f32.mrb[0].mxu0
        %v1542 = vadd.f32 %v1309, %v1541
        %v1543 = vpop.f32.mrb[0].mxu0
        %1544 = vmatprep.mubr.bf16.mxu0 0
        %1545 = vmatmul.mubr.bf16.gmra.mrb[0].mxu0 %v1390
        %v1546 = vpop.f32.mrb[0].mxu0
        %v1547 = vadd.f32 %v1314, %v1546
        %v1548 = vpop.f32.mrb[0].mxu0
        %v1549 = vpop.f32.mrb[0].mxu0
        %v1550 = vadd.f32 %v1317, %v1549
        %v1551 = vpop.f32.mrb[0].mxu0
        %1552 = vdwg.mxu0
        %v1553 = vld [vmem:[%s1001] sm:$0xff]
        %v1554 = vld [vmem:[%s1001 + $0x8] sm:$0xff]
        %v1555 = vld [vmem:[%s1001 + $0x10] sm:$0xff]
        %v1556 = vld [vmem:[%s1001 + $0x18] sm:$0xff]
        %v1557 = vld [vmem:[%s1001 + $0x20] sm:$0xff]
        %v1558 = vld [vmem:[%s1001 + $0x28] sm:$0xff]
        %v1559 = vld [vmem:[%s1001 + $0x30] sm:$0xff]
        %v1560 = vld [vmem:[%s1001 + $0x38] sm:$0xff]
        %v1561 = vld [vmem:[%s1001 + $0x40] sm:$0xff]
        %v1562 = vld [vmem:[%s1001 + $0x48] sm:$0xff]
        %v1563 = vld [vmem:[%s1001 + $0x50] sm:$0xff]
        %v1564 = vld [vmem:[%s1001 + $0x58] sm:$0xff]
        %v1565 = vld [vmem:[%s1001 + $0x60] sm:$0xff]
        %v1566 = vld [vmem:[%s1001 + $0x68] sm:$0xff]
        %v1567 = vld [vmem:[%s1001 + $0x70] sm:$0xff]
        %v1568 = vld [vmem:[%s1001 + $0x78] sm:$0xff]
        %s1569 = scalar_lea.vmem [#allocation8], 64
        %v1570 = vld [vmem:[%s1569] sm:$0xf]
        %v1571 = vld [vmem:[%s1569 + $0x4] sm:$0xf]
        %v1572 = vld [vmem:[%s1569 + $0x8] sm:$0xf]
        %v1573 = vld [vmem:[%s1569 + $0xc] sm:$0xf]
        %v1574 = vld [vmem:[%s1569 + $0x10] sm:$0xf]
        %v1575 = vld [vmem:[%s1569 + $0x14] sm:$0xf]
        %v1576 = vld [vmem:[%s1569 + $0x18] sm:$0xf]
        %v1577 = vld [vmem:[%s1569 + $0x1c] sm:$0xf]
        %v1586 = vunpack.c.l.b16 %v1570
        %v1587 = vunpack.c.l.b16 %v1571
        %v1588 = vunpack.c.l.b16 %v1572
        %v1589 = vunpack.c.l.b16 %v1573
        %v1590 = vunpack.c.l.b16 %v1574
        %v1591 = vunpack.c.l.b16 %v1575
        %v1592 = vunpack.c.l.b16 %v1576
        %v1593 = vunpack.c.l.b16 %v1577
        %v1594 = vpack.c.b16 %v1587, %v1586
        %v1595 = vpack.c.b16 %v1589, %v1588
        %v1596 = vpack.c.b16 %v1591, %v1590
        %v1597 = vpack.c.b16 %v1593, %v1592
        %v1603 = vsel %vm407, %v1553, 0
        %v1606 = vsel %vm407, %v1554, 0
        %v1609 = vsel %vm407, %v1555, 0
        %v1612 = vsel %vm407, %v1556, 0
        %v1615 = vsel %vm407, %v1557, 0
        %v1618 = vsel %vm407, %v1558, 0
        %v1621 = vsel %vm407, %v1559, 0
        %v1624 = vsel %vm407, %v1560, 0
        %v1627 = vsel %vm407, %v1561, 0
        %v1630 = vsel %vm407, %v1562, 0
        %v1633 = vsel %vm407, %v1563, 0
        %v1636 = vsel %vm407, %v1564, 0
        %v1639 = vsel %vm407, %v1565, 0
        %v1642 = vsel %vm407, %v1566, 0
        %v1645 = vsel %vm407, %v1567, 0
        %v1648 = vsel %vm407, %v1568, 0
        %1650 = vmatprep.subr.bf16.mxu0 0
        %1651 = vmatpush1.bf16.msra.mxu0 %v1594
        %1652 = vmatprep.subr.bf16.mxu0 0
        %1653 = vmatpush1.bf16.msra.mxu0 %v1595
        %1654 = vmatprep.subr.bf16.mxu0 0
        %1655 = vmatpush1.bf16.msra.mxu0 %v1596
        %1656 = vmatprep.subr.bf16.mxu0 0
        %1657 = vmatpush1.bf16.msra.mxu0 %v1597
        %1658 = vmatprep.subr.bf16.mxu0 0
        %1659 = vmatpush1.bf16.msra.mxu0 0
        %1660 = vmatprep.subr.bf16.mxu0 0
        %1661 = vmatpush1.bf16.msra.mxu0 0
        %1662 = vmatprep.subr.bf16.mxu0 0
        %1663 = vmatpush1.bf16.msra.mxu0 0
        %1664 = vmatprep.subr.bf16.mxu0 0
        %1665 = vmatpush1.bf16.msra.mxu0 0
        %1666 = vmatprep.subr.bf16.mxu0 0
        %1667 = vmatpush1.bf16.msra.mxu0 0
        %1668 = vmatprep.subr.bf16.mxu0 0
        %1669 = vmatpush1.bf16.msra.mxu0 0
        %1670 = vmatprep.subr.bf16.mxu0 0
        %1671 = vmatpush1.bf16.msra.mxu0 0
        %1672 = vmatprep.subr.bf16.mxu0 0
        %1673 = vmatpush1.bf16.msra.mxu0 0
        %1674 = vmatprep.subr.bf16.mxu0 0
        %1675 = vmatpush1.bf16.msra.mxu0 0
        %1676 = vmatprep.subr.bf16.mxu0 0
        %1677 = vmatpush1.bf16.msra.mxu0 0
        %1678 = vmatprep.subr.bf16.mxu0 0
        %1679 = vmatpush1.bf16.msra.mxu0 0
        %1680 = vmatprep.subr.bf16.mxu0 0
        %1681 = vmatpush1.bf16.msra.mxu0 0
        %1682 = vmatprep.mubr.bf16.mxu0 0
        %1683 = vmatmul.mubr.bf16.gmra.mrb[0].mxu0 %v1603
        %v1684 = vpop.f32.mrb[0].mxu0
        %v1685 = vadd.f32 0.0, %v1684
        %v1686 = vpop.f32.mrb[0].mxu0
        %v1687 = vpop.f32.mrb[0].mxu0
        %v1688 = vadd.f32 0.0, %v1687
        %v1689 = vpop.f32.mrb[0].mxu0
        %1690 = vmatprep.mubr.bf16.mxu0 0
        %1691 = vmatmul.mubr.bf16.gmra.mrb[0].mxu0 %v1606
        %v1692 = vpop.f32.mrb[0].mxu0
        %v1693 = vadd.f32 0.0, %v1692
        %v1694 = vpop.f32.mrb[0].mxu0
        %v1695 = vpop.f32.mrb[0].mxu0
        %v1696 = vadd.f32 0.0, %v1695
        %v1697 = vpop.f32.mrb[0].mxu0
        %1698 = vmatprep.mubr.bf16.mxu0 0
        %1699 = vmatmul.mubr.bf16.gmra.mrb[0].mxu0 %v1609
        %v1700 = vpop.f32.mrb[0].mxu0
        %v1701 = vadd.f32 0.0, %v1700
        %v1702 = vpop.f32.mrb[0].mxu0
        %v1703 = vpop.f32.mrb[0].mxu0
        %v1704 = vadd.f32 0.0, %v1703
        %v1705 = vpop.f32.mrb[0].mxu0
        %1706 = vmatprep.mubr.bf16.mxu0 0
        %1707 = vmatmul.mubr.bf16.gmra.mrb[0].mxu0 %v1612
        %v1708 = vpop.f32.mrb[0].mxu0
        %v1709 = vadd.f32 0.0, %v1708
        %v1710 = vpop.f32.mrb[0].mxu0
        %v1711 = vpop.f32.mrb[0].mxu0
        %v1712 = vadd.f32 0.0, %v1711
        %v1713 = vpop.f32.mrb[0].mxu0
        %1714 = vmatprep.mubr.bf16.mxu0 0
        %1715 = vmatmul.mubr.bf16.gmra.mrb[0].mxu0 %v1615
        %v1716 = vpop.f32.mrb[0].mxu0
        %v1717 = vadd.f32 0.0, %v1716
        %v1718 = vpop.f32.mrb[0].mxu0
        %v1719 = vpop.f32.mrb[0].mxu0
        %v1720 = vadd.f32 0.0, %v1719
        %v1721 = vpop.f32.mrb[0].mxu0
        %1722 = vmatprep.mubr.bf16.mxu0 0
        %1723 = vmatmul.mubr.bf16.gmra.mrb[0].mxu0 %v1618
        %v1724 = vpop.f32.mrb[0].mxu0
        %v1725 = vadd.f32 0.0, %v1724
        %v1726 = vpop.f32.mrb[0].mxu0
        %v1727 = vpop.f32.mrb[0].mxu0
        %v1728 = vadd.f32 0.0, %v1727
        %v1729 = vpop.f32.mrb[0].mxu0
        %1730 = vmatprep.mubr.bf16.mxu0 0
        %1731 = vmatmul.mubr.bf16.gmra.mrb[0].mxu0 %v1621
        %v1732 = vpop.f32.mrb[0].mxu0
        %v1733 = vadd.f32 0.0, %v1732
        %v1734 = vpop.f32.mrb[0].mxu0
        %v1735 = vpop.f32.mrb[0].mxu0
        %v1736 = vadd.f32 0.0, %v1735
        %v1737 = vpop.f32.mrb[0].mxu0
        %1738 = vmatprep.mubr.bf16.mxu0 0
        %1739 = vmatmul.mubr.bf16.gmra.mrb[0].mxu0 %v1624
        %v1740 = vpop.f32.mrb[0].mxu0
        %v1741 = vadd.f32 0.0, %v1740
        %v1742 = vpop.f32.mrb[0].mxu0
        %v1743 = vpop.f32.mrb[0].mxu0
        %v1744 = vadd.f32 0.0, %v1743
        %v1745 = vpop.f32.mrb[0].mxu0
        %1746 = vmatprep.mubr.bf16.mxu0 0
        %1747 = vmatmul.mubr.bf16.gmra.mrb[0].mxu0 %v1627
        %v1748 = vpop.f32.mrb[0].mxu0
        %v1749 = vadd.f32 0.0, %v1748
        %v1750 = vpop.f32.mrb[0].mxu0
        %v1751 = vpop.f32.mrb[0].mxu0
        %v1752 = vadd.f32 0.0, %v1751
        %v1753 = vpop.f32.mrb[0].mxu0
        %1754 = vmatprep.mubr.bf16.mxu0 0
        %1755 = vmatmul.mubr.bf16.gmra.mrb[0].mxu0 %v1630
        %v1756 = vpop.f32.mrb[0].mxu0
        %v1757 = vadd.f32 0.0, %v1756
        %v1758 = vpop.f32.mrb[0].mxu0
        %v1759 = vpop.f32.mrb[0].mxu0
        %v1760 = vadd.f32 0.0, %v1759
        %v1761 = vpop.f32.mrb[0].mxu0
        %1762 = vmatprep.mubr.bf16.mxu0 0
        %1763 = vmatmul.mubr.bf16.gmra.mrb[0].mxu0 %v1633
        %v1764 = vpop.f32.mrb[0].mxu0
        %v1765 = vadd.f32 0.0, %v1764
        %v1766 = vpop.f32.mrb[0].mxu0
        %v1767 = vpop.f32.mrb[0].mxu0
        %v1768 = vadd.f32 0.0, %v1767
        %v1769 = vpop.f32.mrb[0].mxu0
        %1770 = vmatprep.mubr.bf16.mxu0 0
        %1771 = vmatmul.mubr.bf16.gmra.mrb[0].mxu0 %v1636
        %v1772 = vpop.f32.mrb[0].mxu0
        %v1773 = vadd.f32 0.0, %v1772
        %v1774 = vpop.f32.mrb[0].mxu0
        %v1775 = vpop.f32.mrb[0].mxu0
        %v1776 = vadd.f32 0.0, %v1775
        %v1777 = vpop.f32.mrb[0].mxu0
        %1778 = vmatprep.mubr.bf16.mxu0 0
        %1779 = vmatmul.mubr.bf16.gmra.mrb[0].mxu0 %v1639
        %v1780 = vpop.f32.mrb[0].mxu0
        %v1781 = vadd.f32 0.0, %v1780
        %v1782 = vpop.f32.mrb[0].mxu0
        %v1783 = vpop.f32.mrb[0].mxu0
        %v1784 = vadd.f32 0.0, %v1783
        %v1785 = vpop.f32.mrb[0].mxu0
        %1786 = vmatprep.mubr.bf16.mxu0 0
        %1787 = vmatmul.mubr.bf16.gmra.mrb[0].mxu0 %v1642
        %v1788 = vpop.f32.mrb[0].mxu0
        %v1789 = vadd.f32 0.0, %v1788
        %v1790 = vpop.f32.mrb[0].mxu0
        %v1791 = vpop.f32.mrb[0].mxu0
        %v1792 = vadd.f32 0.0, %v1791
        %v1793 = vpop.f32.mrb[0].mxu0
        %1794 = vmatprep.mubr.bf16.mxu0 0
        %1795 = vmatmul.mubr.bf16.gmra.mrb[0].mxu0 %v1645
        %v1796 = vpop.f32.mrb[0].mxu0
        %v1797 = vadd.f32 0.0, %v1796
        %v1798 = vpop.f32.mrb[0].mxu0
        %v1799 = vpop.f32.mrb[0].mxu0
        %v1800 = vadd.f32 0.0, %v1799
        %v1801 = vpop.f32.mrb[0].mxu0
        %1802 = vmatprep.mubr.bf16.mxu0 0
        %1803 = vmatmul.mubr.bf16.gmra.mrb[0].mxu0 %v1648
        %v1804 = vpop.f32.mrb[0].mxu0
        %v1805 = vadd.f32 0.0, %v1804
        %v1806 = vpop.f32.mrb[0].mxu0
        %v1807 = vpop.f32.mrb[0].mxu0
        %v1808 = vadd.f32 0.0, %v1807
        %v1809 = vpop.f32.mrb[0].mxu0
        %1810 = vdwg.mxu0
        %v1811 = vadd.f32 %v1427, %v1685
        %v1812 = vadd.f32 %v1430, %v1688
        %v1813 = vadd.f32 %v1435, %v1693
        %v1814 = vadd.f32 %v1438, %v1696
        %v1815 = vadd.f32 %v1443, %v1701
        %v1816 = vadd.f32 %v1446, %v1704
        %v1817 = vadd.f32 %v1451, %v1709
        %v1818 = vadd.f32 %v1454, %v1712
        %v1819 = vadd.f32 %v1459, %v1717
        %v1820 = vadd.f32 %v1462, %v1720
        %v1821 = vadd.f32 %v1467, %v1725
        %v1822 = vadd.f32 %v1470, %v1728
        %v1823 = vadd.f32 %v1475, %v1733
        %v1824 = vadd.f32 %v1478, %v1736
        %v1825 = vadd.f32 %v1483, %v1741
        %v1826 = vadd.f32 %v1486, %v1744
        %v1827 = vadd.f32 %v1491, %v1749
        %v1828 = vadd.f32 %v1494, %v1752
        %v1829 = vadd.f32 %v1499, %v1757
        %v1830 = vadd.f32 %v1502, %v1760
        %v1831 = vadd.f32 %v1507, %v1765
        %v1832 = vadd.f32 %v1510, %v1768
        %v1833 = vadd.f32 %v1515, %v1773
        %v1834 = vadd.f32 %v1518, %v1776
        %v1835 = vadd.f32 %v1523, %v1781
        %v1836 = vadd.f32 %v1526, %v1784
        %v1837 = vadd.f32 %v1531, %v1789
        %v1838 = vadd.f32 %v1534, %v1792
        %v1839 = vadd.f32 %v1539, %v1797
        %v1840 = vadd.f32 %v1542, %v1800
        %v1841 = vadd.f32 %v1547, %v1805
        %v1842 = vadd.f32 %v1550, %v1808
        %v1843 = vld [vmem:[%s947] sm:$0xff]
        %v1844 = vld [vmem:[%s947 + $0x8] sm:$0xff]
        %v1845 = vld [vmem:[%s947 + $0x10] sm:$0xff]
        %v1846 = vld [vmem:[%s947 + $0x18] sm:$0xff]
        %v1847 = vld [vmem:[%s947 + $0x20] sm:$0xff]
        %v1848 = vld [vmem:[%s947 + $0x28] sm:$0xff]
        %v1849 = vld [vmem:[%s947 + $0x30] sm:$0xff]
        %v1850 = vld [vmem:[%s947 + $0x38] sm:$0xff]
        %v1851 = vld [vmem:[%s947 + $0x40] sm:$0xff]
        %v1852 = vld [vmem:[%s947 + $0x48] sm:$0xff]
        %v1853 = vld [vmem:[%s947 + $0x50] sm:$0xff]
        %v1854 = vld [vmem:[%s947 + $0x58] sm:$0xff]
        %v1855 = vld [vmem:[%s947 + $0x60] sm:$0xff]
        %v1856 = vld [vmem:[%s947 + $0x68] sm:$0xff]
        %v1857 = vld [vmem:[%s947 + $0x70] sm:$0xff]
        %v1858 = vld [vmem:[%s947 + $0x78] sm:$0xff]
        %s1859 = scalar_lea.vmem [#allocation8], 96
        %v1860 = vld [vmem:[%s1859] sm:$0xf]
        %v1861 = vld [vmem:[%s1859 + $0x4] sm:$0xf]
        %v1862 = vld [vmem:[%s1859 + $0x8] sm:$0xf]
        %v1863 = vld [vmem:[%s1859 + $0xc] sm:$0xf]
        %v1864 = vld [vmem:[%s1859 + $0x10] sm:$0xf]
        %v1865 = vld [vmem:[%s1859 + $0x14] sm:$0xf]
        %v1866 = vld [vmem:[%s1859 + $0x18] sm:$0xf]
        %v1867 = vld [vmem:[%s1859 + $0x1c] sm:$0xf]
        %v1876 = vunpack.c.l.b16 %v1860
        %v1877 = vunpack.c.l.b16 %v1861
        %v1878 = vunpack.c.l.b16 %v1862
        %v1879 = vunpack.c.l.b16 %v1863
        %v1880 = vunpack.c.l.b16 %v1864
        %v1881 = vunpack.c.l.b16 %v1865
        %v1882 = vunpack.c.l.b16 %v1866
        %v1883 = vunpack.c.l.b16 %v1867
        %v1884 = vpack.c.b16 %v1877, %v1876
        %v1885 = vpack.c.b16 %v1879, %v1878
        %v1886 = vpack.c.b16 %v1881, %v1880
        %v1887 = vpack.c.b16 %v1883, %v1882
        %v1893 = vsel %vm407, %v1843, 0
        %v1896 = vsel %vm407, %v1844, 0
        %v1899 = vsel %vm407, %v1845, 0
        %v1902 = vsel %vm407, %v1846, 0
        %v1905 = vsel %vm407, %v1847, 0
        %v1908 = vsel %vm407, %v1848, 0
        %v1911 = vsel %vm407, %v1849, 0
        %v1914 = vsel %vm407, %v1850, 0
        %v1917 = vsel %vm407, %v1851, 0
        %v1920 = vsel %vm407, %v1852, 0
        %v1923 = vsel %vm407, %v1853, 0
        %v1926 = vsel %vm407, %v1854, 0
        %v1929 = vsel %vm407, %v1855, 0
        %v1932 = vsel %vm407, %v1856, 0
        %v1935 = vsel %vm407, %v1857, 0
        %v1938 = vsel %vm407, %v1858, 0
        %1940 = vmatprep.subr.bf16.mxu0 0
        %1941 = vmatpush1.bf16.msra.mxu0 %v1884
        %1942 = vmatprep.subr.bf16.mxu0 0
        %1943 = vmatpush1.bf16.msra.mxu0 %v1885
        %1944 = vmatprep.subr.bf16.mxu0 0
        %1945 = vmatpush1.bf16.msra.mxu0 %v1886
        %1946 = vmatprep.subr.bf16.mxu0 0
        %1947 = vmatpush1.bf16.msra.mxu0 %v1887
        %1948 = vmatprep.subr.bf16.mxu0 0
        %1949 = vmatpush1.bf16.msra.mxu0 0
        %1950 = vmatprep.subr.bf16.mxu0 0
        %1951 = vmatpush1.bf16.msra.mxu0 0
        %1952 = vmatprep.subr.bf16.mxu0 0
        %1953 = vmatpush1.bf16.msra.mxu0 0
        %1954 = vmatprep.subr.bf16.mxu0 0
        %1955 = vmatpush1.bf16.msra.mxu0 0
        %1956 = vmatprep.subr.bf16.mxu0 0
        %1957 = vmatpush1.bf16.msra.mxu0 0
        %1958 = vmatprep.subr.bf16.mxu0 0
        %1959 = vmatpush1.bf16.msra.mxu0 0
        %1960 = vmatprep.subr.bf16.mxu0 0
        %1961 = vmatpush1.bf16.msra.mxu0 0
        %1962 = vmatprep.subr.bf16.mxu0 0
        %1963 = vmatpush1.bf16.msra.mxu0 0
        %1964 = vmatprep.subr.bf16.mxu0 0
        %1965 = vmatpush1.bf16.msra.mxu0 0
        %1966 = vmatprep.subr.bf16.mxu0 0
        %1967 = vmatpush1.bf16.msra.mxu0 0
        %1968 = vmatprep.subr.bf16.mxu0 0
        %1969 = vmatpush1.bf16.msra.mxu0 0
        %1970 = vmatprep.subr.bf16.mxu0 0
        %1971 = vmatpush1.bf16.msra.mxu0 0
        %1972 = vmatprep.mubr.bf16.mxu0 0
        %1973 = vmatmul.mubr.bf16.gmra.mrb[0].mxu0 %v1893
        %v1974 = vpop.f32.mrb[0].mxu0
        %v1975 = vadd.f32 0.0, %v1974
        %v1976 = vpop.f32.mrb[0].mxu0
        %v1977 = vpop.f32.mrb[0].mxu0
        %v1978 = vadd.f32 0.0, %v1977
        %v1979 = vpop.f32.mrb[0].mxu0
        %1980 = vmatprep.mubr.bf16.mxu0 0
        %1981 = vmatmul.mubr.bf16.gmra.mrb[0].mxu0 %v1896
        %v1982 = vpop.f32.mrb[0].mxu0
        %v1983 = vadd.f32 0.0, %v1982
        %v1984 = vpop.f32.mrb[0].mxu0
        %v1985 = vpop.f32.mrb[0].mxu0
        %v1986 = vadd.f32 0.0, %v1985
        %v1987 = vpop.f32.mrb[0].mxu0
        %1988 = vmatprep.mubr.bf16.mxu0 0
        %1989 = vmatmul.mubr.bf16.gmra.mrb[0].mxu0 %v1899
        %v1990 = vpop.f32.mrb[0].mxu0
        %v1991 = vadd.f32 0.0, %v1990
        %v1992 = vpop.f32.mrb[0].mxu0
        %v1993 = vpop.f32.mrb[0].mxu0
        %v1994 = vadd.f32 0.0, %v1993
        %v1995 = vpop.f32.mrb[0].mxu0
        %1996 = vmatprep.mubr.bf16.mxu0 0
        %1997 = vmatmul.mubr.bf16.gmra.mrb[0].mxu0 %v1902
        %v1998 = vpop.f32.mrb[0].mxu0
        %v1999 = vadd.f32 0.0, %v1998
        %v2000 = vpop.f32.mrb[0].mxu0
        %v2001 = vpop.f32.mrb[0].mxu0
        %v2002 = vadd.f32 0.0, %v2001
        %v2003 = vpop.f32.mrb[0].mxu0
        %2004 = vmatprep.mubr.bf16.mxu0 0
        %2005 = vmatmul.mubr.bf16.gmra.mrb[0].mxu0 %v1905
        %v2006 = vpop.f32.mrb[0].mxu0
        %v2007 = vadd.f32 0.0, %v2006
        %v2008 = vpop.f32.mrb[0].mxu0
        %v2009 = vpop.f32.mrb[0].mxu0
        %v2010 = vadd.f32 0.0, %v2009
        %v2011 = vpop.f32.mrb[0].mxu0
        %2012 = vmatprep.mubr.bf16.mxu0 0
        %2013 = vmatmul.mubr.bf16.gmra.mrb[0].mxu0 %v1908
        %v2014 = vpop.f32.mrb[0].mxu0
        %v2015 = vadd.f32 0.0, %v2014
        %v2016 = vpop.f32.mrb[0].mxu0
        %v2017 = vpop.f32.mrb[0].mxu0
        %v2018 = vadd.f32 0.0, %v2017
        %v2019 = vpop.f32.mrb[0].mxu0
        %2020 = vmatprep.mubr.bf16.mxu0 0
        %2021 = vmatmul.mubr.bf16.gmra.mrb[0].mxu0 %v1911
        %v2022 = vpop.f32.mrb[0].mxu0
        %v2023 = vadd.f32 0.0, %v2022
        %v2024 = vpop.f32.mrb[0].mxu0
        %v2025 = vpop.f32.mrb[0].mxu0
        %v2026 = vadd.f32 0.0, %v2025
        %v2027 = vpop.f32.mrb[0].mxu0
        %2028 = vmatprep.mubr.bf16.mxu0 0
        %2029 = vmatmul.mubr.bf16.gmra.mrb[0].mxu0 %v1914
        %v2030 = vpop.f32.mrb[0].mxu0
        %v2031 = vadd.f32 0.0, %v2030
        %v2032 = vpop.f32.mrb[0].mxu0
        %v2033 = vpop.f32.mrb[0].mxu0
        %v2034 = vadd.f32 0.0, %v2033
        %v2035 = vpop.f32.mrb[0].mxu0
        %2036 = vmatprep.mubr.bf16.mxu0 0
        %2037 = vmatmul.mubr.bf16.gmra.mrb[0].mxu0 %v1917
        %v2038 = vpop.f32.mrb[0].mxu0
        %v2039 = vadd.f32 0.0, %v2038
        %v2040 = vpop.f32.mrb[0].mxu0
        %v2041 = vpop.f32.mrb[0].mxu0
        %v2042 = vadd.f32 0.0, %v2041
        %v2043 = vpop.f32.mrb[0].mxu0
        %2044 = vmatprep.mubr.bf16.mxu0 0
        %2045 = vmatmul.mubr.bf16.gmra.mrb[0].mxu0 %v1920
        %v2046 = vpop.f32.mrb[0].mxu0
        %v2047 = vadd.f32 0.0, %v2046
        %v2048 = vpop.f32.mrb[0].mxu0
        %v2049 = vpop.f32.mrb[0].mxu0
        %v2050 = vadd.f32 0.0, %v2049
        %v2051 = vpop.f32.mrb[0].mxu0
        %2052 = vmatprep.mubr.bf16.mxu0 0
        %2053 = vmatmul.mubr.bf16.gmra.mrb[0].mxu0 %v1923
        %v2054 = vpop.f32.mrb[0].mxu0
        %v2055 = vadd.f32 0.0, %v2054
        %v2056 = vpop.f32.mrb[0].mxu0
        %v2057 = vpop.f32.mrb[0].mxu0
        %v2058 = vadd.f32 0.0, %v2057
        %v2059 = vpop.f32.mrb[0].mxu0
        %2060 = vmatprep.mubr.bf16.mxu0 0
        %2061 = vmatmul.mubr.bf16.gmra.mrb[0].mxu0 %v1926
        %v2062 = vpop.f32.mrb[0].mxu0
        %v2063 = vadd.f32 0.0, %v2062
        %v2064 = vpop.f32.mrb[0].mxu0
        %v2065 = vpop.f32.mrb[0].mxu0
        %v2066 = vadd.f32 0.0, %v2065
        %v2067 = vpop.f32.mrb[0].mxu0
        %2068 = vmatprep.mubr.bf16.mxu0 0
        %2069 = vmatmul.mubr.bf16.gmra.mrb[0].mxu0 %v1929
        %v2070 = vpop.f32.mrb[0].mxu0
        %v2071 = vadd.f32 0.0, %v2070
        %v2072 = vpop.f32.mrb[0].mxu0
        %v2073 = vpop.f32.mrb[0].mxu0
        %v2074 = vadd.f32 0.0, %v2073
        %v2075 = vpop.f32.mrb[0].mxu0
        %2076 = vmatprep.mubr.bf16.mxu0 0
        %2077 = vmatmul.mubr.bf16.gmra.mrb[0].mxu0 %v1932
        %v2078 = vpop.f32.mrb[0].mxu0
        %v2079 = vadd.f32 0.0, %v2078
        %v2080 = vpop.f32.mrb[0].mxu0
        %v2081 = vpop.f32.mrb[0].mxu0
        %v2082 = vadd.f32 0.0, %v2081
        %v2083 = vpop.f32.mrb[0].mxu0
        %2084 = vmatprep.mubr.bf16.mxu0 0
        %2085 = vmatmul.mubr.bf16.gmra.mrb[0].mxu0 %v1935
        %v2086 = vpop.f32.mrb[0].mxu0
        %v2087 = vadd.f32 0.0, %v2086
        %v2088 = vpop.f32.mrb[0].mxu0
        %v2089 = vpop.f32.mrb[0].mxu0
        %v2090 = vadd.f32 0.0, %v2089
        %v2091 = vpop.f32.mrb[0].mxu0
        %2092 = vmatprep.mubr.bf16.mxu0 0
        %2093 = vmatmul.mubr.bf16.gmra.mrb[0].mxu0 %v1938
        %v2094 = vpop.f32.mrb[0].mxu0
        %v2095 = vadd.f32 0.0, %v2094
        %v2096 = vpop.f32.mrb[0].mxu0
        %v2097 = vpop.f32.mrb[0].mxu0
        %v2098 = vadd.f32 0.0, %v2097
        %v2099 = vpop.f32.mrb[0].mxu0
        %2100 = vdwg.mxu0
        %v2101 = vadd.f32 %v1811, %v1975
        %v2102 = vadd.f32 %v1812, %v1978
        %v2103 = vadd.f32 %v1813, %v1983
        %v2104 = vadd.f32 %v1814, %v1986
        %v2105 = vadd.f32 %v1815, %v1991
        %v2106 = vadd.f32 %v1816, %v1994
        %v2107 = vadd.f32 %v1817, %v1999
        %v2108 = vadd.f32 %v1818, %v2002
        %v2109 = vadd.f32 %v1819, %v2007
        %v2110 = vadd.f32 %v1820, %v2010
        %v2111 = vadd.f32 %v1821, %v2015
        %v2112 = vadd.f32 %v1822, %v2018
        %v2113 = vadd.f32 %v1823, %v2023
        %v2114 = vadd.f32 %v1824, %v2026
        %v2115 = vadd.f32 %v1825, %v2031
        %v2116 = vadd.f32 %v1826, %v2034
        %v2117 = vadd.f32 %v1827, %v2039
        %v2118 = vadd.f32 %v1828, %v2042
        %v2119 = vadd.f32 %v1829, %v2047
        %v2120 = vadd.f32 %v1830, %v2050
        %v2121 = vadd.f32 %v1831, %v2055
        %v2122 = vadd.f32 %v1832, %v2058
        %v2123 = vadd.f32 %v1833, %v2063
        %v2124 = vadd.f32 %v1834, %v2066
        %v2125 = vadd.f32 %v1835, %v2071
        %v2126 = vadd.f32 %v1836, %v2074
        %v2127 = vadd.f32 %v1837, %v2079
        %v2128 = vadd.f32 %v1838, %v2082
        %v2129 = vadd.f32 %v1839, %v2087
        %v2130 = vadd.f32 %v1840, %v2090
        %v2131 = vadd.f32 %v1841, %v2095
        %v2132 = vadd.f32 %v1842, %v2098
        %v2133 = vld [vmem:[%s984] sm:$0xff]
        %v2134 = vld [vmem:[%s984 + $0x8] sm:$0xff]
        %v2135 = vld [vmem:[%s984 + $0x10] sm:$0xff]
        %v2136 = vld [vmem:[%s984 + $0x18] sm:$0xff]
        %v2137 = vld [vmem:[%s984 + $0x20] sm:$0xff]
        %v2138 = vld [vmem:[%s984 + $0x28] sm:$0xff]
        %v2139 = vld [vmem:[%s984 + $0x30] sm:$0xff]
        %v2140 = vld [vmem:[%s984 + $0x38] sm:$0xff]
        %v2141 = vld [vmem:[%s984 + $0x40] sm:$0xff]
        %v2142 = vld [vmem:[%s984 + $0x48] sm:$0xff]
        %v2143 = vld [vmem:[%s984 + $0x50] sm:$0xff]
        %v2144 = vld [vmem:[%s984 + $0x58] sm:$0xff]
        %v2145 = vld [vmem:[%s984 + $0x60] sm:$0xff]
        %v2146 = vld [vmem:[%s984 + $0x68] sm:$0xff]
        %v2147 = vld [vmem:[%s984 + $0x70] sm:$0xff]
        %v2148 = vld [vmem:[%s984 + $0x78] sm:$0xff]
        %s2149 = scalar_lea.vmem [#allocation8], 128
        %v2150 = vld [vmem:[%s2149] sm:$0xf]
        %v2151 = vld [vmem:[%s2149 + $0x4] sm:$0xf]
        %v2152 = vld [vmem:[%s2149 + $0x8] sm:$0xf]
        %v2153 = vld [vmem:[%s2149 + $0xc] sm:$0xf]
        %v2154 = vld [vmem:[%s2149 + $0x10] sm:$0xf]
        %v2155 = vld [vmem:[%s2149 + $0x14] sm:$0xf]
        %v2156 = vld [vmem:[%s2149 + $0x18] sm:$0xf]
        %v2157 = vld [vmem:[%s2149 + $0x1c] sm:$0xf]
        %v2166 = vunpack.c.l.b16 %v2150
        %v2167 = vunpack.c.l.b16 %v2151
        %v2168 = vunpack.c.l.b16 %v2152
        %v2169 = vunpack.c.l.b16 %v2153
        %v2170 = vunpack.c.l.b16 %v2154
        %v2171 = vunpack.c.l.b16 %v2155
        %v2172 = vunpack.c.l.b16 %v2156
        %v2173 = vunpack.c.l.b16 %v2157
        %v2174 = vpack.c.b16 %v2167, %v2166
        %v2175 = vpack.c.b16 %v2169, %v2168
        %v2176 = vpack.c.b16 %v2171, %v2170
        %v2177 = vpack.c.b16 %v2173, %v2172
        %v2183 = vsel %vm407, %v2133, 0
        %v2186 = vsel %vm407, %v2134, 0
        %v2189 = vsel %vm407, %v2135, 0
        %v2192 = vsel %vm407, %v2136, 0
        %v2195 = vsel %vm407, %v2137, 0
        %v2198 = vsel %vm407, %v2138, 0
        %v2201 = vsel %vm407, %v2139, 0
        %v2204 = vsel %vm407, %v2140, 0
        %v2207 = vsel %vm407, %v2141, 0
        %v2210 = vsel %vm407, %v2142, 0
        %v2213 = vsel %vm407, %v2143, 0
        %v2216 = vsel %vm407, %v2144, 0
        %v2219 = vsel %vm407, %v2145, 0
        %v2222 = vsel %vm407, %v2146, 0
        %v2225 = vsel %vm407, %v2147, 0
        %v2228 = vsel %vm407, %v2148, 0
        %2230 = vmatprep.subr.bf16.mxu0 0
        %2231 = vmatpush1.bf16.msra.mxu0 %v2174
        %2232 = vmatprep.subr.bf16.mxu0 0
        %2233 = vmatpush1.bf16.msra.mxu0 %v2175
        %2234 = vmatprep.subr.bf16.mxu0 0
        %2235 = vmatpush1.bf16.msra.mxu0 %v2176
        %2236 = vmatprep.subr.bf16.mxu0 0
        %2237 = vmatpush1.bf16.msra.mxu0 %v2177
        %2238 = vmatprep.subr.bf16.mxu0 0
        %2239 = vmatpush1.bf16.msra.mxu0 0
        %2240 = vmatprep.subr.bf16.mxu0 0
        %2241 = vmatpush1.bf16.msra.mxu0 0
        %2242 = vmatprep.subr.bf16.mxu0 0
        %2243 = vmatpush1.bf16.msra.mxu0 0
        %2244 = vmatprep.subr.bf16.mxu0 0
        %2245 = vmatpush1.bf16.msra.mxu0 0
        %2246 = vmatprep.subr.bf16.mxu0 0
        %2247 = vmatpush1.bf16.msra.mxu0 0
        %2248 = vmatprep.subr.bf16.mxu0 0
        %2249 = vmatpush1.bf16.msra.mxu0 0
        %2250 = vmatprep.subr.bf16.mxu0 0
        %2251 = vmatpush1.bf16.msra.mxu0 0
        %2252 = vmatprep.subr.bf16.mxu0 0
        %2253 = vmatpush1.bf16.msra.mxu0 0
        %2254 = vmatprep.subr.bf16.mxu0 0
        %2255 = vmatpush1.bf16.msra.mxu0 0
        %2256 = vmatprep.subr.bf16.mxu0 0
        %2257 = vmatpush1.bf16.msra.mxu0 0
        %2258 = vmatprep.subr.bf16.mxu0 0
        %2259 = vmatpush1.bf16.msra.mxu0 0
        %2260 = vmatprep.subr.bf16.mxu0 0
        %2261 = vmatpush1.bf16.msra.mxu0 0
        %2262 = vmatprep.mubr.bf16.mxu0 0
        %2263 = vmatmul.mubr.bf16.gmra.mrb[0].mxu0 %v2183
        %v2264 = vpop.f32.mrb[0].mxu0
        %v2265 = vadd.f32 0.0, %v2264
        %v2266 = vpop.f32.mrb[0].mxu0
        %v2267 = vpop.f32.mrb[0].mxu0
        %v2268 = vadd.f32 0.0, %v2267
        %v2269 = vpop.f32.mrb[0].mxu0
        %2270 = vmatprep.mubr.bf16.mxu0 0
        %2271 = vmatmul.mubr.bf16.gmra.mrb[0].mxu0 %v2186
        %v2272 = vpop.f32.mrb[0].mxu0
        %v2273 = vadd.f32 0.0, %v2272
        %v2274 = vpop.f32.mrb[0].mxu0
        %v2275 = vpop.f32.mrb[0].mxu0
        %v2276 = vadd.f32 0.0, %v2275
        %v2277 = vpop.f32.mrb[0].mxu0
        %2278 = vmatprep.mubr.bf16.mxu0 0
        %2279 = vmatmul.mubr.bf16.gmra.mrb[0].mxu0 %v2189
        %v2280 = vpop.f32.mrb[0].mxu0
        %v2281 = vadd.f32 0.0, %v2280
        %v2282 = vpop.f32.mrb[0].mxu0
        %v2283 = vpop.f32.mrb[0].mxu0
        %v2284 = vadd.f32 0.0, %v2283
        %v2285 = vpop.f32.mrb[0].mxu0
        %2286 = vmatprep.mubr.bf16.mxu0 0
        %2287 = vmatmul.mubr.bf16.gmra.mrb[0].mxu0 %v2192
        %v2288 = vpop.f32.mrb[0].mxu0
        %v2289 = vadd.f32 0.0, %v2288
        %v2290 = vpop.f32.mrb[0].mxu0
        %v2291 = vpop.f32.mrb[0].mxu0
        %v2292 = vadd.f32 0.0, %v2291
        %v2293 = vpop.f32.mrb[0].mxu0
        %2294 = vmatprep.mubr.bf16.mxu0 0
        %2295 = vmatmul.mubr.bf16.gmra.mrb[0].mxu0 %v2195
        %v2296 = vpop.f32.mrb[0].mxu0
        %v2297 = vadd.f32 0.0, %v2296
        %v2298 = vpop.f32.mrb[0].mxu0
        %v2299 = vpop.f32.mrb[0].mxu0
        %v2300 = vadd.f32 0.0, %v2299
        %v2301 = vpop.f32.mrb[0].mxu0
        %2302 = vmatprep.mubr.bf16.mxu0 0
        %2303 = vmatmul.mubr.bf16.gmra.mrb[0].mxu0 %v2198
        %v2304 = vpop.f32.mrb[0].mxu0
        %v2305 = vadd.f32 0.0, %v2304
        %v2306 = vpop.f32.mrb[0].mxu0
        %v2307 = vpop.f32.mrb[0].mxu0
        %v2308 = vadd.f32 0.0, %v2307
        %v2309 = vpop.f32.mrb[0].mxu0
        %2310 = vmatprep.mubr.bf16.mxu0 0
        %2311 = vmatmul.mubr.bf16.gmra.mrb[0].mxu0 %v2201
        %v2312 = vpop.f32.mrb[0].mxu0
        %v2313 = vadd.f32 0.0, %v2312
        %v2314 = vpop.f32.mrb[0].mxu0
        %v2315 = vpop.f32.mrb[0].mxu0
        %v2316 = vadd.f32 0.0, %v2315
        %v2317 = vpop.f32.mrb[0].mxu0
        %2318 = vmatprep.mubr.bf16.mxu0 0
        %2319 = vmatmul.mubr.bf16.gmra.mrb[0].mxu0 %v2204
        %v2320 = vpop.f32.mrb[0].mxu0
        %v2321 = vadd.f32 0.0, %v2320
        %v2322 = vpop.f32.mrb[0].mxu0
        %v2323 = vpop.f32.mrb[0].mxu0
        %v2324 = vadd.f32 0.0, %v2323
        %v2325 = vpop.f32.mrb[0].mxu0
        %2326 = vmatprep.mubr.bf16.mxu0 0
        %2327 = vmatmul.mubr.bf16.gmra.mrb[0].mxu0 %v2207
        %v2328 = vpop.f32.mrb[0].mxu0
        %v2329 = vadd.f32 0.0, %v2328
        %v2330 = vpop.f32.mrb[0].mxu0
        %v2331 = vpop.f32.mrb[0].mxu0
        %v2332 = vadd.f32 0.0, %v2331
        %v2333 = vpop.f32.mrb[0].mxu0
        %2334 = vmatprep.mubr.bf16.mxu0 0
        %2335 = vmatmul.mubr.bf16.gmra.mrb[0].mxu0 %v2210
        %v2336 = vpop.f32.mrb[0].mxu0
        %v2337 = vadd.f32 0.0, %v2336
        %v2338 = vpop.f32.mrb[0].mxu0
        %v2339 = vpop.f32.mrb[0].mxu0
        %v2340 = vadd.f32 0.0, %v2339
        %v2341 = vpop.f32.mrb[0].mxu0
        %2342 = vmatprep.mubr.bf16.mxu0 0
        %2343 = vmatmul.mubr.bf16.gmra.mrb[0].mxu0 %v2213
        %v2344 = vpop.f32.mrb[0].mxu0
        %v2345 = vadd.f32 0.0, %v2344
        %v2346 = vpop.f32.mrb[0].mxu0
        %v2347 = vpop.f32.mrb[0].mxu0
        %v2348 = vadd.f32 0.0, %v2347
        %v2349 = vpop.f32.mrb[0].mxu0
        %2350 = vmatprep.mubr.bf16.mxu0 0
        %2351 = vmatmul.mubr.bf16.gmra.mrb[0].mxu0 %v2216
        %v2352 = vpop.f32.mrb[0].mxu0
        %v2353 = vadd.f32 0.0, %v2352
        %v2354 = vpop.f32.mrb[0].mxu0
        %v2355 = vpop.f32.mrb[0].mxu0
        %v2356 = vadd.f32 0.0, %v2355
        %v2357 = vpop.f32.mrb[0].mxu0
        %2358 = vmatprep.mubr.bf16.mxu0 0
        %2359 = vmatmul.mubr.bf16.gmra.mrb[0].mxu0 %v2219
        %v2360 = vpop.f32.mrb[0].mxu0
        %v2361 = vadd.f32 0.0, %v2360
        %v2362 = vpop.f32.mrb[0].mxu0
        %v2363 = vpop.f32.mrb[0].mxu0
        %v2364 = vadd.f32 0.0, %v2363
        %v2365 = vpop.f32.mrb[0].mxu0
        %2366 = vmatprep.mubr.bf16.mxu0 0
        %2367 = vmatmul.mubr.bf16.gmra.mrb[0].mxu0 %v2222
        %v2368 = vpop.f32.mrb[0].mxu0
        %v2369 = vadd.f32 0.0, %v2368
        %v2370 = vpop.f32.mrb[0].mxu0
        %v2371 = vpop.f32.mrb[0].mxu0
        %v2372 = vadd.f32 0.0, %v2371
        %v2373 = vpop.f32.mrb[0].mxu0
        %2374 = vmatprep.mubr.bf16.mxu0 0
        %2375 = vmatmul.mubr.bf16.gmra.mrb[0].mxu0 %v2225
        %v2376 = vpop.f32.mrb[0].mxu0
        %v2377 = vadd.f32 0.0, %v2376
        %v2378 = vpop.f32.mrb[0].mxu0
        %v2379 = vpop.f32.mrb[0].mxu0
        %v2380 = vadd.f32 0.0, %v2379
        %v2381 = vpop.f32.mrb[0].mxu0
        %2382 = vmatprep.mubr.bf16.mxu0 0
        %2383 = vmatmul.mubr.bf16.gmra.mrb[0].mxu0 %v2228
        %v2384 = vpop.f32.mrb[0].mxu0
        %v2385 = vadd.f32 0.0, %v2384
        %v2386 = vpop.f32.mrb[0].mxu0
        %v2387 = vpop.f32.mrb[0].mxu0
        %v2388 = vadd.f32 0.0, %v2387
        %v2389 = vpop.f32.mrb[0].mxu0
        %2390 = vdwg.mxu0
        %v2391 = vadd.f32 %v2101, %v2265
        %v2392 = vadd.f32 %v2102, %v2268
        %v2393 = vadd.f32 %v2103, %v2273
        %v2394 = vadd.f32 %v2104, %v2276
        %v2395 = vadd.f32 %v2105, %v2281
        %v2396 = vadd.f32 %v2106, %v2284
        %v2397 = vadd.f32 %v2107, %v2289
        %v2398 = vadd.f32 %v2108, %v2292
        %v2399 = vadd.f32 %v2109, %v2297
        %v2400 = vadd.f32 %v2110, %v2300
        %v2401 = vadd.f32 %v2111, %v2305
        %v2402 = vadd.f32 %v2112, %v2308
        %v2403 = vadd.f32 %v2113, %v2313
        %v2404 = vadd.f32 %v2114, %v2316
        %v2405 = vadd.f32 %v2115, %v2321
        %v2406 = vadd.f32 %v2116, %v2324
        %v2407 = vadd.f32 %v2117, %v2329
        %v2408 = vadd.f32 %v2118, %v2332
        %v2409 = vadd.f32 %v2119, %v2337
        %v2410 = vadd.f32 %v2120, %v2340
        %v2411 = vadd.f32 %v2121, %v2345
        %v2412 = vadd.f32 %v2122, %v2348
        %v2413 = vadd.f32 %v2123, %v2353
        %v2414 = vadd.f32 %v2124, %v2356
        %v2415 = vadd.f32 %v2125, %v2361
        %v2416 = vadd.f32 %v2126, %v2364
        %v2417 = vadd.f32 %v2127, %v2369
        %v2418 = vadd.f32 %v2128, %v2372
        %v2419 = vadd.f32 %v2129, %v2377
        %v2420 = vadd.f32 %v2130, %v2380
        %v2421 = vadd.f32 %v2131, %v2385
        %v2422 = vadd.f32 %v2132, %v2388
        %v2423 = vld [vmem:[%s1021] sm:$0xff]
        %v2424 = vld [vmem:[%s1021 + $0x8] sm:$0xff]
        %v2425 = vld [vmem:[%s1021 + $0x10] sm:$0xff]
        %v2426 = vld [vmem:[%s1021 + $0x18] sm:$0xff]
        %v2427 = vld [vmem:[%s1021 + $0x20] sm:$0xff]
        %v2428 = vld [vmem:[%s1021 + $0x28] sm:$0xff]
        %v2429 = vld [vmem:[%s1021 + $0x30] sm:$0xff]
        %v2430 = vld [vmem:[%s1021 + $0x38] sm:$0xff]
        %v2431 = vld [vmem:[%s1021 + $0x40] sm:$0xff]
        %v2432 = vld [vmem:[%s1021 + $0x48] sm:$0xff]
        %v2433 = vld [vmem:[%s1021 + $0x50] sm:$0xff]
        %v2434 = vld [vmem:[%s1021 + $0x58] sm:$0xff]
        %v2435 = vld [vmem:[%s1021 + $0x60] sm:$0xff]
        %v2436 = vld [vmem:[%s1021 + $0x68] sm:$0xff]
        %v2437 = vld [vmem:[%s1021 + $0x70] sm:$0xff]
        %v2438 = vld [vmem:[%s1021 + $0x78] sm:$0xff]
        %s2439 = scalar_lea.vmem [#allocation8], 160
        %v2440 = vld [vmem:[%s2439] sm:$0xf]
        %v2441 = vld [vmem:[%s2439 + $0x4] sm:$0xf]
        %v2442 = vld [vmem:[%s2439 + $0x8] sm:$0xf]
        %v2443 = vld [vmem:[%s2439 + $0xc] sm:$0xf]
        %v2444 = vld [vmem:[%s2439 + $0x10] sm:$0xf]
        %v2445 = vld [vmem:[%s2439 + $0x14] sm:$0xf]
        %v2446 = vld [vmem:[%s2439 + $0x18] sm:$0xf]
        %v2447 = vld [vmem:[%s2439 + $0x1c] sm:$0xf]
        %v2456 = vunpack.c.l.b16 %v2440
        %v2457 = vunpack.c.l.b16 %v2441
        %v2458 = vunpack.c.l.b16 %v2442
        %v2459 = vunpack.c.l.b16 %v2443
        %v2460 = vunpack.c.l.b16 %v2444
        %v2461 = vunpack.c.l.b16 %v2445
        %v2462 = vunpack.c.l.b16 %v2446
        %v2463 = vunpack.c.l.b16 %v2447
        %v2464 = vpack.c.b16 %v2457, %v2456
        %v2465 = vpack.c.b16 %v2459, %v2458
        %v2466 = vpack.c.b16 %v2461, %v2460
        %v2467 = vpack.c.b16 %v2463, %v2462
        %v2473 = vsel %vm407, %v2423, 0
        %v2476 = vsel %vm407, %v2424, 0
        %v2479 = vsel %vm407, %v2425, 0
        %v2482 = vsel %vm407, %v2426, 0
        %v2485 = vsel %vm407, %v2427, 0
        %v2488 = vsel %vm407, %v2428, 0
        %v2491 = vsel %vm407, %v2429, 0
        %v2494 = vsel %vm407, %v2430, 0
        %v2497 = vsel %vm407, %v2431, 0
        %v2500 = vsel %vm407, %v2432, 0
        %v2503 = vsel %vm407, %v2433, 0
        %v2506 = vsel %vm407, %v2434, 0
        %v2509 = vsel %vm407, %v2435, 0
        %v2512 = vsel %vm407, %v2436, 0
        %v2515 = vsel %vm407, %v2437, 0
        %v2518 = vsel %vm407, %v2438, 0
        %2520 = vmatprep.subr.bf16.mxu0 0
        %2521 = vmatpush1.bf16.msra.mxu0 %v2464
        %2522 = vmatprep.subr.bf16.mxu0 0
        %2523 = vmatpush1.bf16.msra.mxu0 %v2465
        %2524 = vmatprep.subr.bf16.mxu0 0
        %2525 = vmatpush1.bf16.msra.mxu0 %v2466
        %2526 = vmatprep.subr.bf16.mxu0 0
        %2527 = vmatpush1.bf16.msra.mxu0 %v2467
        %2528 = vmatprep.subr.bf16.mxu0 0
        %2529 = vmatpush1.bf16.msra.mxu0 0
        %2530 = vmatprep.subr.bf16.mxu0 0
        %2531 = vmatpush1.bf16.msra.mxu0 0
        %2532 = vmatprep.subr.bf16.mxu0 0
        %2533 = vmatpush1.bf16.msra.mxu0 0
        %2534 = vmatprep.subr.bf16.mxu0 0
        %2535 = vmatpush1.bf16.msra.mxu0 0
        %2536 = vmatprep.subr.bf16.mxu0 0
        %2537 = vmatpush1.bf16.msra.mxu0 0
        %2538 = vmatprep.subr.bf16.mxu0 0
        %2539 = vmatpush1.bf16.msra.mxu0 0
        %2540 = vmatprep.subr.bf16.mxu0 0
        %2541 = vmatpush1.bf16.msra.mxu0 0
        %2542 = vmatprep.subr.bf16.mxu0 0
        %2543 = vmatpush1.bf16.msra.mxu0 0
        %2544 = vmatprep.subr.bf16.mxu0 0
        %2545 = vmatpush1.bf16.msra.mxu0 0
        %2546 = vmatprep.subr.bf16.mxu0 0
        %2547 = vmatpush1.bf16.msra.mxu0 0
        %2548 = vmatprep.subr.bf16.mxu0 0
        %2549 = vmatpush1.bf16.msra.mxu0 0
        %2550 = vmatprep.subr.bf16.mxu0 0
        %2551 = vmatpush1.bf16.msra.mxu0 0
        %2552 = vmatprep.mubr.bf16.mxu0 0
        %2553 = vmatmul.mubr.bf16.gmra.mrb[0].mxu0 %v2473
        %v2554 = vpop.f32.mrb[0].mxu0
        %v2555 = vadd.f32 0.0, %v2554
        %v2556 = vpop.f32.mrb[0].mxu0
        %v2557 = vpop.f32.mrb[0].mxu0
        %v2558 = vadd.f32 0.0, %v2557
        %v2559 = vpop.f32.mrb[0].mxu0
        %2560 = vmatprep.mubr.bf16.mxu0 0
        %2561 = vmatmul.mubr.bf16.gmra.mrb[0].mxu0 %v2476
        %v2562 = vpop.f32.mrb[0].mxu0
        %v2563 = vadd.f32 0.0, %v2562
        %v2564 = vpop.f32.mrb[0].mxu0
        %v2565 = vpop.f32.mrb[0].mxu0
        %v2566 = vadd.f32 0.0, %v2565
        %v2567 = vpop.f32.mrb[0].mxu0
        %2568 = vmatprep.mubr.bf16.mxu0 0
        %2569 = vmatmul.mubr.bf16.gmra.mrb[0].mxu0 %v2479
        %v2570 = vpop.f32.mrb[0].mxu0
        %v2571 = vadd.f32 0.0, %v2570
        %v2572 = vpop.f32.mrb[0].mxu0
        %v2573 = vpop.f32.mrb[0].mxu0
        %v2574 = vadd.f32 0.0, %v2573
        %v2575 = vpop.f32.mrb[0].mxu0
        %2576 = vmatprep.mubr.bf16.mxu0 0
        %2577 = vmatmul.mubr.bf16.gmra.mrb[0].mxu0 %v2482
        %v2578 = vpop.f32.mrb[0].mxu0
        %v2579 = vadd.f32 0.0, %v2578
        %v2580 = vpop.f32.mrb[0].mxu0
        %v2581 = vpop.f32.mrb[0].mxu0
        %v2582 = vadd.f32 0.0, %v2581
        %v2583 = vpop.f32.mrb[0].mxu0
        %2584 = vmatprep.mubr.bf16.mxu0 0
        %2585 = vmatmul.mubr.bf16.gmra.mrb[0].mxu0 %v2485
        %v2586 = vpop.f32.mrb[0].mxu0
        %v2587 = vadd.f32 0.0, %v2586
        %v2588 = vpop.f32.mrb[0].mxu0
        %v2589 = vpop.f32.mrb[0].mxu0
        %v2590 = vadd.f32 0.0, %v2589
        %v2591 = vpop.f32.mrb[0].mxu0
        %2592 = vmatprep.mubr.bf16.mxu0 0
        %2593 = vmatmul.mubr.bf16.gmra.mrb[0].mxu0 %v2488
        %v2594 = vpop.f32.mrb[0].mxu0
        %v2595 = vadd.f32 0.0, %v2594
        %v2596 = vpop.f32.mrb[0].mxu0
        %v2597 = vpop.f32.mrb[0].mxu0
        %v2598 = vadd.f32 0.0, %v2597
        %v2599 = vpop.f32.mrb[0].mxu0
        %2600 = vmatprep.mubr.bf16.mxu0 0
        %2601 = vmatmul.mubr.bf16.gmra.mrb[0].mxu0 %v2491
        %v2602 = vpop.f32.mrb[0].mxu0
        %v2603 = vadd.f32 0.0, %v2602
        %v2604 = vpop.f32.mrb[0].mxu0
        %v2605 = vpop.f32.mrb[0].mxu0
        %v2606 = vadd.f32 0.0, %v2605
        %v2607 = vpop.f32.mrb[0].mxu0
        %2608 = vmatprep.mubr.bf16.mxu0 0
        %2609 = vmatmul.mubr.bf16.gmra.mrb[0].mxu0 %v2494
        %v2610 = vpop.f32.mrb[0].mxu0
        %v2611 = vadd.f32 0.0, %v2610
        %v2612 = vpop.f32.mrb[0].mxu0
        %v2613 = vpop.f32.mrb[0].mxu0
        %v2614 = vadd.f32 0.0, %v2613
        %v2615 = vpop.f32.mrb[0].mxu0
        %2616 = vmatprep.mubr.bf16.mxu0 0
        %2617 = vmatmul.mubr.bf16.gmra.mrb[0].mxu0 %v2497
        %v2618 = vpop.f32.mrb[0].mxu0
        %v2619 = vadd.f32 0.0, %v2618
        %v2620 = vpop.f32.mrb[0].mxu0
        %v2621 = vpop.f32.mrb[0].mxu0
        %v2622 = vadd.f32 0.0, %v2621
        %v2623 = vpop.f32.mrb[0].mxu0
        %2624 = vmatprep.mubr.bf16.mxu0 0
        %2625 = vmatmul.mubr.bf16.gmra.mrb[0].mxu0 %v2500
        %v2626 = vpop.f32.mrb[0].mxu0
        %v2627 = vadd.f32 0.0, %v2626
        %v2628 = vpop.f32.mrb[0].mxu0
        %v2629 = vpop.f32.mrb[0].mxu0
        %v2630 = vadd.f32 0.0, %v2629
        %v2631 = vpop.f32.mrb[0].mxu0
        %2632 = vmatprep.mubr.bf16.mxu0 0
        %2633 = vmatmul.mubr.bf16.gmra.mrb[0].mxu0 %v2503
        %v2634 = vpop.f32.mrb[0].mxu0
        %v2635 = vadd.f32 0.0, %v2634
        %v2636 = vpop.f32.mrb[0].mxu0
        %v2637 = vpop.f32.mrb[0].mxu0
        %v2638 = vadd.f32 0.0, %v2637
        %v2639 = vpop.f32.mrb[0].mxu0
        %2640 = vmatprep.mubr.bf16.mxu0 0
        %2641 = vmatmul.mubr.bf16.gmra.mrb[0].mxu0 %v2506
        %v2642 = vpop.f32.mrb[0].mxu0
        %v2643 = vadd.f32 0.0, %v2642
        %v2644 = vpop.f32.mrb[0].mxu0
        %v2645 = vpop.f32.mrb[0].mxu0
        %v2646 = vadd.f32 0.0, %v2645
        %v2647 = vpop.f32.mrb[0].mxu0
        %2648 = vmatprep.mubr.bf16.mxu0 0
        %2649 = vmatmul.mubr.bf16.gmra.mrb[0].mxu0 %v2509
        %v2650 = vpop.f32.mrb[0].mxu0
        %v2651 = vadd.f32 0.0, %v2650
        %v2652 = vpop.f32.mrb[0].mxu0
        %v2653 = vpop.f32.mrb[0].mxu0
        %v2654 = vadd.f32 0.0, %v2653
        %v2655 = vpop.f32.mrb[0].mxu0
        %2656 = vmatprep.mubr.bf16.mxu0 0
        %2657 = vmatmul.mubr.bf16.gmra.mrb[0].mxu0 %v2512
        %v2658 = vpop.f32.mrb[0].mxu0
        %v2659 = vadd.f32 0.0, %v2658
        %v2660 = vpop.f32.mrb[0].mxu0
        %v2661 = vpop.f32.mrb[0].mxu0
        %v2662 = vadd.f32 0.0, %v2661
        %v2663 = vpop.f32.mrb[0].mxu0
        %2664 = vmatprep.mubr.bf16.mxu0 0
        %2665 = vmatmul.mubr.bf16.gmra.mrb[0].mxu0 %v2515
        %v2666 = vpop.f32.mrb[0].mxu0
        %v2667 = vadd.f32 0.0, %v2666
        %v2668 = vpop.f32.mrb[0].mxu0
        %v2669 = vpop.f32.mrb[0].mxu0
        %v2670 = vadd.f32 0.0, %v2669
        %v2671 = vpop.f32.mrb[0].mxu0
        %2672 = vmatprep.mubr.bf16.mxu0 0
        %2673 = vmatmul.mubr.bf16.gmra.mrb[0].mxu0 %v2518
        %v2674 = vpop.f32.mrb[0].mxu0
        %v2675 = vadd.f32 0.0, %v2674
        %v2676 = vpop.f32.mrb[0].mxu0
        %v2677 = vpop.f32.mrb[0].mxu0
        %v2678 = vadd.f32 0.0, %v2677
        %v2679 = vpop.f32.mrb[0].mxu0
        %2680 = vdwg.mxu0
        %v2681 = vadd.f32 %v2391, %v2555
        %v2682 = vadd.f32 %v2392, %v2558
        %v2683 = vadd.f32 %v2393, %v2563
        %v2684 = vadd.f32 %v2394, %v2566
        %v2685 = vadd.f32 %v2395, %v2571
        %v2686 = vadd.f32 %v2396, %v2574
        %v2687 = vadd.f32 %v2397, %v2579
        %v2688 = vadd.f32 %v2398, %v2582
        %v2689 = vadd.f32 %v2399, %v2587
        %v2690 = vadd.f32 %v2400, %v2590
        %v2691 = vadd.f32 %v2401, %v2595
        %v2692 = vadd.f32 %v2402, %v2598
        %v2693 = vadd.f32 %v2403, %v2603
        %v2694 = vadd.f32 %v2404, %v2606
        %v2695 = vadd.f32 %v2405, %v2611
        %v2696 = vadd.f32 %v2406, %v2614
        %v2697 = vadd.f32 %v2407, %v2619
        %v2698 = vadd.f32 %v2408, %v2622
        %v2699 = vadd.f32 %v2409, %v2627
        %v2700 = vadd.f32 %v2410, %v2630
        %v2701 = vadd.f32 %v2411, %v2635
        %v2702 = vadd.f32 %v2412, %v2638
        %v2703 = vadd.f32 %v2413, %v2643
        %v2704 = vadd.f32 %v2414, %v2646
        %v2705 = vadd.f32 %v2415, %v2651
        %v2706 = vadd.f32 %v2416, %v2654
        %v2707 = vadd.f32 %v2417, %v2659
        %v2708 = vadd.f32 %v2418, %v2662
        %v2709 = vadd.f32 %v2419, %v2667
        %v2710 = vadd.f32 %v2420, %v2670
        %v2711 = vadd.f32 %v2421, %v2675
        %v2712 = vadd.f32 %v2422, %v2678
        %s2713 = scalar_lea.vmem [#allocation2], 16
        %v2714 = vld [vmem:[%s2713] sm:$0xff]
        %v2715 = vld [vmem:[%s2713 + $0x8] sm:$0xff]
        %v2716 = vld [vmem:[%s2713 + $0x10] sm:$0xff]
        %v2717 = vld [vmem:[%s2713 + $0x18] sm:$0xff]
        %v2718 = vld [vmem:[%s2713 + $0x20] sm:$0xff]
        %v2719 = vld [vmem:[%s2713 + $0x28] sm:$0xff]
        %v2720 = vld [vmem:[%s2713 + $0x30] sm:$0xff]
        %v2721 = vld [vmem:[%s2713 + $0x38] sm:$0xff]
        %v2722 = vld [vmem:[%s2713 + $0x40] sm:$0xff]
        %v2723 = vld [vmem:[%s2713 + $0x48] sm:$0xff]
        %v2724 = vld [vmem:[%s2713 + $0x50] sm:$0xff]
        %v2725 = vld [vmem:[%s2713 + $0x58] sm:$0xff]
        %v2726 = vld [vmem:[%s2713 + $0x60] sm:$0xff]
        %v2727 = vld [vmem:[%s2713 + $0x68] sm:$0xff]
        %v2728 = vld [vmem:[%s2713 + $0x70] sm:$0xff]
        %v2729 = vld [vmem:[%s2713 + $0x78] sm:$0xff]
        %s2730 = scalar_lea.vmem [#allocation8], 192
        %v2731 = vld [vmem:[%s2730] sm:$0xf]
        %v2732 = vld [vmem:[%s2730 + $0x4] sm:$0xf]
        %v2733 = vld [vmem:[%s2730 + $0x8] sm:$0xf]
        %v2734 = vld [vmem:[%s2730 + $0xc] sm:$0xf]
        %v2735 = vld [vmem:[%s2730 + $0x10] sm:$0xf]
        %v2736 = vld [vmem:[%s2730 + $0x14] sm:$0xf]
        %v2737 = vld [vmem:[%s2730 + $0x18] sm:$0xf]
        %v2738 = vld [vmem:[%s2730 + $0x1c] sm:$0xf]
        %v2747 = vunpack.c.l.b16 %v2731
        %v2748 = vunpack.c.l.b16 %v2732
        %v2749 = vunpack.c.l.b16 %v2733
        %v2750 = vunpack.c.l.b16 %v2734
        %v2751 = vunpack.c.l.b16 %v2735
        %v2752 = vunpack.c.l.b16 %v2736
        %v2753 = vunpack.c.l.b16 %v2737
        %v2754 = vunpack.c.l.b16 %v2738
        %v2755 = vpack.c.b16 %v2748, %v2747
        %v2756 = vpack.c.b16 %v2750, %v2749
        %v2757 = vpack.c.b16 %v2752, %v2751
        %v2758 = vpack.c.b16 %v2754, %v2753
        %v2764 = vsel %vm407, %v2714, 0
        %v2767 = vsel %vm407, %v2715, 0
        %v2770 = vsel %vm407, %v2716, 0
        %v2773 = vsel %vm407, %v2717, 0
        %v2776 = vsel %vm407, %v2718, 0
        %v2779 = vsel %vm407, %v2719, 0
        %v2782 = vsel %vm407, %v2720, 0
        %v2785 = vsel %vm407, %v2721, 0
        %v2788 = vsel %vm407, %v2722, 0
        %v2791 = vsel %vm407, %v2723, 0
        %v2794 = vsel %vm407, %v2724, 0
        %v2797 = vsel %vm407, %v2725, 0
        %v2800 = vsel %vm407, %v2726, 0
        %v2803 = vsel %vm407, %v2727, 0
        %v2806 = vsel %vm407, %v2728, 0
        %v2809 = vsel %vm407, %v2729, 0
        %2811 = vmatprep.subr.bf16.mxu0 0
        %2812 = vmatpush1.bf16.msra.mxu0 %v2755
        %2813 = vmatprep.subr.bf16.mxu0 0
        %2814 = vmatpush1.bf16.msra.mxu0 %v2756
        %2815 = vmatprep.subr.bf16.mxu0 0
        %2816 = vmatpush1.bf16.msra.mxu0 %v2757
        %2817 = vmatprep.subr.bf16.mxu0 0
        %2818 = vmatpush1.bf16.msra.mxu0 %v2758
        %2819 = vmatprep.subr.bf16.mxu0 0
        %2820 = vmatpush1.bf16.msra.mxu0 0
        %2821 = vmatprep.subr.bf16.mxu0 0
        %2822 = vmatpush1.bf16.msra.mxu0 0
        %2823 = vmatprep.subr.bf16.mxu0 0
        %2824 = vmatpush1.bf16.msra.mxu0 0
        %2825 = vmatprep.subr.bf16.mxu0 0
        %2826 = vmatpush1.bf16.msra.mxu0 0
        %2827 = vmatprep.subr.bf16.mxu0 0
        %2828 = vmatpush1.bf16.msra.mxu0 0
        %2829 = vmatprep.subr.bf16.mxu0 0
        %2830 = vmatpush1.bf16.msra.mxu0 0
        %2831 = vmatprep.subr.bf16.mxu0 0
        %2832 = vmatpush1.bf16.msra.mxu0 0
        %2833 = vmatprep.subr.bf16.mxu0 0
        %2834 = vmatpush1.bf16.msra.mxu0 0
        %2835 = vmatprep.subr.bf16.mxu0 0
        %2836 = vmatpush1.bf16.msra.mxu0 0
        %2837 = vmatprep.subr.bf16.mxu0 0
        %2838 = vmatpush1.bf16.msra.mxu0 0
        %2839 = vmatprep.subr.bf16.mxu0 0
        %2840 = vmatpush1.bf16.msra.mxu0 0
        %2841 = vmatprep.subr.bf16.mxu0 0
        %2842 = vmatpush1.bf16.msra.mxu0 0
        %2843 = vmatprep.mubr.bf16.mxu0 0
        %2844 = vmatmul.mubr.bf16.gmra.mrb[0].mxu0 %v2764
        %v2845 = vpop.f32.mrb[0].mxu0
        %v2846 = vadd.f32 0.0, %v2845
        %v2847 = vpop.f32.mrb[0].mxu0
        %v2848 = vpop.f32.mrb[0].mxu0
        %v2849 = vadd.f32 0.0, %v2848
        %v2850 = vpop.f32.mrb[0].mxu0
        %2851 = vmatprep.mubr.bf16.mxu0 0
        %2852 = vmatmul.mubr.bf16.gmra.mrb[0].mxu0 %v2767
        %v2853 = vpop.f32.mrb[0].mxu0
        %v2854 = vadd.f32 0.0, %v2853
        %v2855 = vpop.f32.mrb[0].mxu0
        %v2856 = vpop.f32.mrb[0].mxu0
        %v2857 = vadd.f32 0.0, %v2856
        %v2858 = vpop.f32.mrb[0].mxu0
        %2859 = vmatprep.mubr.bf16.mxu0 0
        %2860 = vmatmul.mubr.bf16.gmra.mrb[0].mxu0 %v2770
        %v2861 = vpop.f32.mrb[0].mxu0
        %v2862 = vadd.f32 0.0, %v2861
        %v2863 = vpop.f32.mrb[0].mxu0
        %v2864 = vpop.f32.mrb[0].mxu0
        %v2865 = vadd.f32 0.0, %v2864
        %v2866 = vpop.f32.mrb[0].mxu0
        %2867 = vmatprep.mubr.bf16.mxu0 0
        %2868 = vmatmul.mubr.bf16.gmra.mrb[0].mxu0 %v2773
        %v2869 = vpop.f32.mrb[0].mxu0
        %v2870 = vadd.f32 0.0, %v2869
        %v2871 = vpop.f32.mrb[0].mxu0
        %v2872 = vpop.f32.mrb[0].mxu0
        %v2873 = vadd.f32 0.0, %v2872
        %v2874 = vpop.f32.mrb[0].mxu0
        %2875 = vmatprep.mubr.bf16.mxu0 0
        %2876 = vmatmul.mubr.bf16.gmra.mrb[0].mxu0 %v2776
        %v2877 = vpop.f32.mrb[0].mxu0
        %v2878 = vadd.f32 0.0, %v2877
        %v2879 = vpop.f32.mrb[0].mxu0
        %v2880 = vpop.f32.mrb[0].mxu0
        %v2881 = vadd.f32 0.0, %v2880
        %v2882 = vpop.f32.mrb[0].mxu0
        %2883 = vmatprep.mubr.bf16.mxu0 0
        %2884 = vmatmul.mubr.bf16.gmra.mrb[0].mxu0 %v2779
        %v2885 = vpop.f32.mrb[0].mxu0
        %v2886 = vadd.f32 0.0, %v2885
        %v2887 = vpop.f32.mrb[0].mxu0
        %v2888 = vpop.f32.mrb[0].mxu0
        %v2889 = vadd.f32 0.0, %v2888
        %v2890 = vpop.f32.mrb[0].mxu0
        %2891 = vmatprep.mubr.bf16.mxu0 0
        %2892 = vmatmul.mubr.bf16.gmra.mrb[0].mxu0 %v2782
        %v2893 = vpop.f32.mrb[0].mxu0
        %v2894 = vadd.f32 0.0, %v2893
        %v2895 = vpop.f32.mrb[0].mxu0
        %v2896 = vpop.f32.mrb[0].mxu0
        %v2897 = vadd.f32 0.0, %v2896
        %v2898 = vpop.f32.mrb[0].mxu0
        %2899 = vmatprep.mubr.bf16.mxu0 0
        %2900 = vmatmul.mubr.bf16.gmra.mrb[0].mxu0 %v2785
        %v2901 = vpop.f32.mrb[0].mxu0
        %v2902 = vadd.f32 0.0, %v2901
        %v2903 = vpop.f32.mrb[0].mxu0
        %v2904 = vpop.f32.mrb[0].mxu0
        %v2905 = vadd.f32 0.0, %v2904
        %v2906 = vpop.f32.mrb[0].mxu0
        %2907 = vmatprep.mubr.bf16.mxu0 0
        %2908 = vmatmul.mubr.bf16.gmra.mrb[0].mxu0 %v2788
        %v2909 = vpop.f32.mrb[0].mxu0
        %v2910 = vadd.f32 0.0, %v2909
        %v2911 = vpop.f32.mrb[0].mxu0
        %v2912 = vpop.f32.mrb[0].mxu0
        %v2913 = vadd.f32 0.0, %v2912
        %v2914 = vpop.f32.mrb[0].mxu0
        %2915 = vmatprep.mubr.bf16.mxu0 0
        %2916 = vmatmul.mubr.bf16.gmra.mrb[0].mxu0 %v2791
        %v2917 = vpop.f32.mrb[0].mxu0
        %v2918 = vadd.f32 0.0, %v2917
        %v2919 = vpop.f32.mrb[0].mxu0
        %v2920 = vpop.f32.mrb[0].mxu0
        %v2921 = vadd.f32 0.0, %v2920
        %v2922 = vpop.f32.mrb[0].mxu0
        %2923 = vmatprep.mubr.bf16.mxu0 0
        %2924 = vmatmul.mubr.bf16.gmra.mrb[0].mxu0 %v2794
        %v2925 = vpop.f32.mrb[0].mxu0
        %v2926 = vadd.f32 0.0, %v2925
        %v2927 = vpop.f32.mrb[0].mxu0
        %v2928 = vpop.f32.mrb[0].mxu0
        %v2929 = vadd.f32 0.0, %v2928
        %v2930 = vpop.f32.mrb[0].mxu0
        %2931 = vmatprep.mubr.bf16.mxu0 0
        %2932 = vmatmul.mubr.bf16.gmra.mrb[0].mxu0 %v2797
        %v2933 = vpop.f32.mrb[0].mxu0
        %v2934 = vadd.f32 0.0, %v2933
        %v2935 = vpop.f32.mrb[0].mxu0
        %v2936 = vpop.f32.mrb[0].mxu0
        %v2937 = vadd.f32 0.0, %v2936
        %v2938 = vpop.f32.mrb[0].mxu0
        %2939 = vmatprep.mubr.bf16.mxu0 0
        %2940 = vmatmul.mubr.bf16.gmra.mrb[0].mxu0 %v2800
        %v2941 = vpop.f32.mrb[0].mxu0
        %v2942 = vadd.f32 0.0, %v2941
        %v2943 = vpop.f32.mrb[0].mxu0
        %v2944 = vpop.f32.mrb[0].mxu0
        %v2945 = vadd.f32 0.0, %v2944
        %v2946 = vpop.f32.mrb[0].mxu0
        %2947 = vmatprep.mubr.bf16.mxu0 0
        %2948 = vmatmul.mubr.bf16.gmra.mrb[0].mxu0 %v2803
        %v2949 = vpop.f32.mrb[0].mxu0
        %v2950 = vadd.f32 0.0, %v2949
        %v2951 = vpop.f32.mrb[0].mxu0
        %v2952 = vpop.f32.mrb[0].mxu0
        %v2953 = vadd.f32 0.0, %v2952
        %v2954 = vpop.f32.mrb[0].mxu0
        %2955 = vmatprep.mubr.bf16.mxu0 0
        %2956 = vmatmul.mubr.bf16.gmra.mrb[0].mxu0 %v2806
        %v2957 = vpop.f32.mrb[0].mxu0
        %v2958 = vadd.f32 0.0, %v2957
        %v2959 = vpop.f32.mrb[0].mxu0
        %v2960 = vpop.f32.mrb[0].mxu0
        %v2961 = vadd.f32 0.0, %v2960
        %v2962 = vpop.f32.mrb[0].mxu0
        %2963 = vmatprep.mubr.bf16.mxu0 0
        %2964 = vmatmul.mubr.bf16.gmra.mrb[0].mxu0 %v2809
        %v2965 = vpop.f32.mrb[0].mxu0
        %v2966 = vadd.f32 0.0, %v2965
        %v2967 = vpop.f32.mrb[0].mxu0
        %v2968 = vpop.f32.mrb[0].mxu0
        %v2969 = vadd.f32 0.0, %v2968
        %v2970 = vpop.f32.mrb[0].mxu0
        %2971 = vdwg.mxu0
        %v2972 = vadd.f32 %v2681, %v2846
        %v2973 = vadd.f32 %v2682, %v2849
        %v2974 = vadd.f32 %v2683, %v2854
        %v2975 = vadd.f32 %v2684, %v2857
        %v2976 = vadd.f32 %v2685, %v2862
        %v2977 = vadd.f32 %v2686, %v2865
        %v2978 = vadd.f32 %v2687, %v2870
        %v2979 = vadd.f32 %v2688, %v2873
        %v2980 = vadd.f32 %v2689, %v2878
        %v2981 = vadd.f32 %v2690, %v2881
        %v2982 = vadd.f32 %v2691, %v2886
        %v2983 = vadd.f32 %v2692, %v2889
        %v2984 = vadd.f32 %v2693, %v2894
        %v2985 = vadd.f32 %v2694, %v2897
        %v2986 = vadd.f32 %v2695, %v2902
        %v2987 = vadd.f32 %v2696, %v2905
        %v2988 = vadd.f32 %v2697, %v2910
        %v2989 = vadd.f32 %v2698, %v2913
        %v2990 = vadd.f32 %v2699, %v2918
        %v2991 = vadd.f32 %v2700, %v2921
        %v2992 = vadd.f32 %v2701, %v2926
        %v2993 = vadd.f32 %v2702, %v2929
        %v2994 = vadd.f32 %v2703, %v2934
        %v2995 = vadd.f32 %v2704, %v2937
        %v2996 = vadd.f32 %v2705, %v2942
        %v2997 = vadd.f32 %v2706, %v2945
        %v2998 = vadd.f32 %v2707, %v2950
        %v2999 = vadd.f32 %v2708, %v2953
        %v3000 = vadd.f32 %v2709, %v2958
        %v3001 = vadd.f32 %v2710, %v2961
        %v3002 = vadd.f32 %v2711, %v2966
        %v3003 = vadd.f32 %v2712, %v2969
        %s3004 = scalar_lea.vmem [#allocation2], 160
        %v3005 = vld [vmem:[%s3004] sm:$0xff]
        %v3006 = vld [vmem:[%s3004 + $0x8] sm:$0xff]
        %v3007 = vld [vmem:[%s3004 + $0x10] sm:$0xff]
        %v3008 = vld [vmem:[%s3004 + $0x18] sm:$0xff]
        %v3009 = vld [vmem:[%s3004 + $0x20] sm:$0xff]
        %v3010 = vld [vmem:[%s3004 + $0x28] sm:$0xff]
        %v3011 = vld [vmem:[%s3004 + $0x30] sm:$0xff]
        %v3012 = vld [vmem:[%s3004 + $0x38] sm:$0xff]
        %v3013 = vld [vmem:[%s3004 + $0x40] sm:$0xff]
        %v3014 = vld [vmem:[%s3004 + $0x48] sm:$0xff]
        %v3015 = vld [vmem:[%s3004 + $0x50] sm:$0xff]
        %v3016 = vld [vmem:[%s3004 + $0x58] sm:$0xff]
        %v3017 = vld [vmem:[%s3004 + $0x60] sm:$0xff]
        %v3018 = vld [vmem:[%s3004 + $0x68] sm:$0xff]
        %v3019 = vld [vmem:[%s3004 + $0x70] sm:$0xff]
        %v3020 = vld [vmem:[%s3004 + $0x78] sm:$0xff]
        %s3021 = scalar_lea.vmem [#allocation8], 224
        %v3022 = vld [vmem:[%s3021] sm:$0xf]
        %v3023 = vld [vmem:[%s3021 + $0x4] sm:$0xf]
        %v3024 = vld [vmem:[%s3021 + $0x8] sm:$0xf]
        %v3025 = vld [vmem:[%s3021 + $0xc] sm:$0xf]
        %v3026 = vld [vmem:[%s3021 + $0x10] sm:$0xf]
        %v3027 = vld [vmem:[%s3021 + $0x14] sm:$0xf]
        %v3028 = vld [vmem:[%s3021 + $0x18] sm:$0xf]
        %v3029 = vld [vmem:[%s3021 + $0x1c] sm:$0xf]
        %v3038 = vunpack.c.l.b16 %v3022
        %v3039 = vunpack.c.l.b16 %v3023
        %v3040 = vunpack.c.l.b16 %v3024
        %v3041 = vunpack.c.l.b16 %v3025
        %v3042 = vunpack.c.l.b16 %v3026
        %v3043 = vunpack.c.l.b16 %v3027
        %v3044 = vunpack.c.l.b16 %v3028
        %v3045 = vunpack.c.l.b16 %v3029
        %v3046 = vpack.c.b16 %v3039, %v3038
        %v3047 = vpack.c.b16 %v3041, %v3040
        %v3048 = vpack.c.b16 %v3043, %v3042
        %v3049 = vpack.c.b16 %v3045, %v3044
        %v3055 = vsel %vm407, %v3005, 0
        %v3058 = vsel %vm407, %v3006, 0
        %v3061 = vsel %vm407, %v3007, 0
        %v3064 = vsel %vm407, %v3008, 0
        %v3067 = vsel %vm407, %v3009, 0
        %v3070 = vsel %vm407, %v3010, 0
        %v3073 = vsel %vm407, %v3011, 0
        %v3076 = vsel %vm407, %v3012, 0
        %v3079 = vsel %vm407, %v3013, 0
        %v3082 = vsel %vm407, %v3014, 0
        %v3085 = vsel %vm407, %v3015, 0
        %v3088 = vsel %vm407, %v3016, 0
        %v3091 = vsel %vm407, %v3017, 0
        %v3094 = vsel %vm407, %v3018, 0
        %v3097 = vsel %vm407, %v3019, 0
        %v3100 = vsel %vm407, %v3020, 0
        %3102 = vmatprep.subr.bf16.mxu0 0
        %3103 = vmatpush1.bf16.msra.mxu0 %v3046
        %3104 = vmatprep.subr.bf16.mxu0 0
        %3105 = vmatpush1.bf16.msra.mxu0 %v3047
        %3106 = vmatprep.subr.bf16.mxu0 0
        %3107 = vmatpush1.bf16.msra.mxu0 %v3048
        %3108 = vmatprep.subr.bf16.mxu0 0
        %3109 = vmatpush1.bf16.msra.mxu0 %v3049
        %3110 = vmatprep.subr.bf16.mxu0 0
        %3111 = vmatpush1.bf16.msra.mxu0 0
        %3112 = vmatprep.subr.bf16.mxu0 0
        %3113 = vmatpush1.bf16.msra.mxu0 0
        %3114 = vmatprep.subr.bf16.mxu0 0
        %3115 = vmatpush1.bf16.msra.mxu0 0
        %3116 = vmatprep.subr.bf16.mxu0 0
        %3117 = vmatpush1.bf16.msra.mxu0 0
        %3118 = vmatprep.subr.bf16.mxu0 0
        %3119 = vmatpush1.bf16.msra.mxu0 0
        %3120 = vmatprep.subr.bf16.mxu0 0
        %3121 = vmatpush1.bf16.msra.mxu0 0
        %3122 = vmatprep.subr.bf16.mxu0 0
        %3123 = vmatpush1.bf16.msra.mxu0 0
        %3124 = vmatprep.subr.bf16.mxu0 0
        %3125 = vmatpush1.bf16.msra.mxu0 0
        %3126 = vmatprep.subr.bf16.mxu0 0
        %3127 = vmatpush1.bf16.msra.mxu0 0
        %3128 = vmatprep.subr.bf16.mxu0 0
        %3129 = vmatpush1.bf16.msra.mxu0 0
        %3130 = vmatprep.subr.bf16.mxu0 0
        %3131 = vmatpush1.bf16.msra.mxu0 0
        %3132 = vmatprep.subr.bf16.mxu0 0
        %3133 = vmatpush1.bf16.msra.mxu0 0
        %3134 = vmatprep.mubr.bf16.mxu0 0
        %3135 = vmatmul.mubr.bf16.gmra.mrb[0].mxu0 %v3055
        %v3136 = vpop.f32.mrb[0].mxu0
        %v3137 = vadd.f32 0.0, %v3136
        %v3138 = vpop.f32.mrb[0].mxu0
        %v3139 = vpop.f32.mrb[0].mxu0
        %v3140 = vadd.f32 0.0, %v3139
        %v3141 = vpop.f32.mrb[0].mxu0
        %3142 = vmatprep.mubr.bf16.mxu0 0
        %3143 = vmatmul.mubr.bf16.gmra.mrb[0].mxu0 %v3058
        %v3144 = vpop.f32.mrb[0].mxu0
        %v3145 = vadd.f32 0.0, %v3144
        %v3146 = vpop.f32.mrb[0].mxu0
        %v3147 = vpop.f32.mrb[0].mxu0
        %v3148 = vadd.f32 0.0, %v3147
        %v3149 = vpop.f32.mrb[0].mxu0
        %3150 = vmatprep.mubr.bf16.mxu0 0
        %3151 = vmatmul.mubr.bf16.gmra.mrb[0].mxu0 %v3061
        %v3152 = vpop.f32.mrb[0].mxu0
        %v3153 = vadd.f32 0.0, %v3152
        %v3154 = vpop.f32.mrb[0].mxu0
        %v3155 = vpop.f32.mrb[0].mxu0
        %v3156 = vadd.f32 0.0, %v3155
        %v3157 = vpop.f32.mrb[0].mxu0
        %3158 = vmatprep.mubr.bf16.mxu0 0
        %3159 = vmatmul.mubr.bf16.gmra.mrb[0].mxu0 %v3064
        %v3160 = vpop.f32.mrb[0].mxu0
        %v3161 = vadd.f32 0.0, %v3160
        %v3162 = vpop.f32.mrb[0].mxu0
        %v3163 = vpop.f32.mrb[0].mxu0
        %v3164 = vadd.f32 0.0, %v3163
        %v3165 = vpop.f32.mrb[0].mxu0
        %3166 = vmatprep.mubr.bf16.mxu0 0
        %3167 = vmatmul.mubr.bf16.gmra.mrb[0].mxu0 %v3067
        %v3168 = vpop.f32.mrb[0].mxu0
        %v3169 = vadd.f32 0.0, %v3168
        %v3170 = vpop.f32.mrb[0].mxu0
        %v3171 = vpop.f32.mrb[0].mxu0
        %v3172 = vadd.f32 0.0, %v3171
        %v3173 = vpop.f32.mrb[0].mxu0
        %3174 = vmatprep.mubr.bf16.mxu0 0
        %3175 = vmatmul.mubr.bf16.gmra.mrb[0].mxu0 %v3070
        %v3176 = vpop.f32.mrb[0].mxu0
        %v3177 = vadd.f32 0.0, %v3176
        %v3178 = vpop.f32.mrb[0].mxu0
        %v3179 = vpop.f32.mrb[0].mxu0
        %v3180 = vadd.f32 0.0, %v3179
        %v3181 = vpop.f32.mrb[0].mxu0
        %3182 = vmatprep.mubr.bf16.mxu0 0
        %3183 = vmatmul.mubr.bf16.gmra.mrb[0].mxu0 %v3073
        %v3184 = vpop.f32.mrb[0].mxu0
        %v3185 = vadd.f32 0.0, %v3184
        %v3186 = vpop.f32.mrb[0].mxu0
        %v3187 = vpop.f32.mrb[0].mxu0
        %v3188 = vadd.f32 0.0, %v3187
        %v3189 = vpop.f32.mrb[0].mxu0
        %3190 = vmatprep.mubr.bf16.mxu0 0
        %3191 = vmatmul.mubr.bf16.gmra.mrb[0].mxu0 %v3076
        %v3192 = vpop.f32.mrb[0].mxu0
        %v3193 = vadd.f32 0.0, %v3192
        %v3194 = vpop.f32.mrb[0].mxu0
        %v3195 = vpop.f32.mrb[0].mxu0
        %v3196 = vadd.f32 0.0, %v3195
        %v3197 = vpop.f32.mrb[0].mxu0
        %3198 = vmatprep.mubr.bf16.mxu0 0
        %3199 = vmatmul.mubr.bf16.gmra.mrb[0].mxu0 %v3079
        %v3200 = vpop.f32.mrb[0].mxu0
        %v3201 = vadd.f32 0.0, %v3200
        %v3202 = vpop.f32.mrb[0].mxu0
        %v3203 = vpop.f32.mrb[0].mxu0
        %v3204 = vadd.f32 0.0, %v3203
        %v3205 = vpop.f32.mrb[0].mxu0
        %3206 = vmatprep.mubr.bf16.mxu0 0
        %3207 = vmatmul.mubr.bf16.gmra.mrb[0].mxu0 %v3082
        %v3208 = vpop.f32.mrb[0].mxu0
        %v3209 = vadd.f32 0.0, %v3208
        %v3210 = vpop.f32.mrb[0].mxu0
        %v3211 = vpop.f32.mrb[0].mxu0
        %v3212 = vadd.f32 0.0, %v3211
        %v3213 = vpop.f32.mrb[0].mxu0
        %3214 = vmatprep.mubr.bf16.mxu0 0
        %3215 = vmatmul.mubr.bf16.gmra.mrb[0].mxu0 %v3085
        %v3216 = vpop.f32.mrb[0].mxu0
        %v3217 = vadd.f32 0.0, %v3216
        %v3218 = vpop.f32.mrb[0].mxu0
        %v3219 = vpop.f32.mrb[0].mxu0
        %v3220 = vadd.f32 0.0, %v3219
        %v3221 = vpop.f32.mrb[0].mxu0
        %3222 = vmatprep.mubr.bf16.mxu0 0
        %3223 = vmatmul.mubr.bf16.gmra.mrb[0].mxu0 %v3088
        %v3224 = vpop.f32.mrb[0].mxu0
        %v3225 = vadd.f32 0.0, %v3224
        %v3226 = vpop.f32.mrb[0].mxu0
        %v3227 = vpop.f32.mrb[0].mxu0
        %v3228 = vadd.f32 0.0, %v3227
        %v3229 = vpop.f32.mrb[0].mxu0
        %3230 = vmatprep.mubr.bf16.mxu0 0
        %3231 = vmatmul.mubr.bf16.gmra.mrb[0].mxu0 %v3091
        %v3232 = vpop.f32.mrb[0].mxu0
        %v3233 = vadd.f32 0.0, %v3232
        %v3234 = vpop.f32.mrb[0].mxu0
        %v3235 = vpop.f32.mrb[0].mxu0
        %v3236 = vadd.f32 0.0, %v3235
        %v3237 = vpop.f32.mrb[0].mxu0
        %3238 = vmatprep.mubr.bf16.mxu0 0
        %3239 = vmatmul.mubr.bf16.gmra.mrb[0].mxu0 %v3094
        %v3240 = vpop.f32.mrb[0].mxu0
        %v3241 = vadd.f32 0.0, %v3240
        %v3242 = vpop.f32.mrb[0].mxu0
        %v3243 = vpop.f32.mrb[0].mxu0
        %v3244 = vadd.f32 0.0, %v3243
        %v3245 = vpop.f32.mrb[0].mxu0
        %3246 = vmatprep.mubr.bf16.mxu0 0
        %3247 = vmatmul.mubr.bf16.gmra.mrb[0].mxu0 %v3097
        %v3248 = vpop.f32.mrb[0].mxu0
        %v3249 = vadd.f32 0.0, %v3248
        %v3250 = vpop.f32.mrb[0].mxu0
        %v3251 = vpop.f32.mrb[0].mxu0
        %v3252 = vadd.f32 0.0, %v3251
        %v3253 = vpop.f32.mrb[0].mxu0
        %3254 = vmatprep.mubr.bf16.mxu0 0
        %3255 = vmatmul.mubr.bf16.gmra.mrb[0].mxu0 %v3100
        %v3256 = vpop.f32.mrb[0].mxu0
        %v3257 = vadd.f32 0.0, %v3256
        %v3258 = vpop.f32.mrb[0].mxu0
        %v3259 = vpop.f32.mrb[0].mxu0
        %v3260 = vadd.f32 0.0, %v3259
        %v3261 = vpop.f32.mrb[0].mxu0
        %3262 = vdwg.mxu0
        %v3263 = vadd.f32 %v2972, %v3137
        %v3264 = vadd.f32 %v2973, %v3140
        %v3265 = vadd.f32 %v2974, %v3145
        %v3266 = vadd.f32 %v2975, %v3148
        %v3267 = vadd.f32 %v2976, %v3153
        %v3268 = vadd.f32 %v2977, %v3156
        %v3269 = vadd.f32 %v2978, %v3161
        %v3270 = vadd.f32 %v2979, %v3164
        %v3271 = vadd.f32 %v2980, %v3169
        %v3272 = vadd.f32 %v2981, %v3172
        %v3273 = vadd.f32 %v2982, %v3177
        %v3274 = vadd.f32 %v2983, %v3180
        %v3275 = vadd.f32 %v2984, %v3185
        %v3276 = vadd.f32 %v2985, %v3188
        %v3277 = vadd.f32 %v2986, %v3193
        %v3278 = vadd.f32 %v2987, %v3196
        %v3279 = vadd.f32 %v2988, %v3201
        %v3280 = vadd.f32 %v2989, %v3204
        %v3281 = vadd.f32 %v2990, %v3209
        %v3282 = vadd.f32 %v2991, %v3212
        %v3283 = vadd.f32 %v2992, %v3217
        %v3284 = vadd.f32 %v2993, %v3220
        %v3285 = vadd.f32 %v2994, %v3225
        %v3286 = vadd.f32 %v2995, %v3228
        %v3287 = vadd.f32 %v2996, %v3233
        %v3288 = vadd.f32 %v2997, %v3236
        %v3289 = vadd.f32 %v2998, %v3241
        %v3290 = vadd.f32 %v2999, %v3244
        %v3291 = vadd.f32 %v3000, %v3249
        %v3292 = vadd.f32 %v3001, %v3252
        %v3293 = vadd.f32 %v3002, %v3257
        %v3294 = vadd.f32 %v3003, %v3260
        %s3295 = scalar_lea.vmem [#allocation2], 304
        %v3296 = vld [vmem:[%s3295] sm:$0xff]
        %v3297 = vld [vmem:[%s3295 + $0x8] sm:$0xff]
        %v3298 = vld [vmem:[%s3295 + $0x10] sm:$0xff]
        %v3299 = vld [vmem:[%s3295 + $0x18] sm:$0xff]
        %v3300 = vld [vmem:[%s3295 + $0x20] sm:$0xff]
        %v3301 = vld [vmem:[%s3295 + $0x28] sm:$0xff]
        %v3302 = vld [vmem:[%s3295 + $0x30] sm:$0xff]
        %v3303 = vld [vmem:[%s3295 + $0x38] sm:$0xff]
        %v3304 = vld [vmem:[%s3295 + $0x40] sm:$0xff]
        %v3305 = vld [vmem:[%s3295 + $0x48] sm:$0xff]
        %v3306 = vld [vmem:[%s3295 + $0x50] sm:$0xff]
        %v3307 = vld [vmem:[%s3295 + $0x58] sm:$0xff]
        %v3308 = vld [vmem:[%s3295 + $0x60] sm:$0xff]
        %v3309 = vld [vmem:[%s3295 + $0x68] sm:$0xff]
        %v3310 = vld [vmem:[%s3295 + $0x70] sm:$0xff]
        %v3311 = vld [vmem:[%s3295 + $0x78] sm:$0xff]
        %s3312 = scalar_lea.vmem [#allocation8], 256
        %v3313 = vld [vmem:[%s3312] sm:$0xf]
        %v3314 = vld [vmem:[%s3312 + $0x4] sm:$0xf]
        %v3315 = vld [vmem:[%s3312 + $0x8] sm:$0xf]
        %v3316 = vld [vmem:[%s3312 + $0xc] sm:$0xf]
        %v3317 = vld [vmem:[%s3312 + $0x10] sm:$0xf]
        %v3318 = vld [vmem:[%s3312 + $0x14] sm:$0xf]
        %v3319 = vld [vmem:[%s3312 + $0x18] sm:$0xf]
        %v3320 = vld [vmem:[%s3312 + $0x1c] sm:$0xf]
        %v3329 = vunpack.c.l.b16 %v3313
        %v3330 = vunpack.c.l.b16 %v3314
        %v3331 = vunpack.c.l.b16 %v3315
        %v3332 = vunpack.c.l.b16 %v3316
        %v3333 = vunpack.c.l.b16 %v3317
        %v3334 = vunpack.c.l.b16 %v3318
        %v3335 = vunpack.c.l.b16 %v3319
        %v3336 = vunpack.c.l.b16 %v3320
        %v3337 = vpack.c.b16 %v3330, %v3329
        %v3338 = vpack.c.b16 %v3332, %v3331
        %v3339 = vpack.c.b16 %v3334, %v3333
        %v3340 = vpack.c.b16 %v3336, %v3335
        %v3346 = vsel %vm407, %v3296, 0
        %v3349 = vsel %vm407, %v3297, 0
        %v3352 = vsel %vm407, %v3298, 0
        %v3355 = vsel %vm407, %v3299, 0
        %v3358 = vsel %vm407, %v3300, 0
        %v3361 = vsel %vm407, %v3301, 0
        %v3364 = vsel %vm407, %v3302, 0
        %v3367 = vsel %vm407, %v3303, 0
        %v3370 = vsel %vm407, %v3304, 0
        %v3373 = vsel %vm407, %v3305, 0
        %v3376 = vsel %vm407, %v3306, 0
        %v3379 = vsel %vm407, %v3307, 0
        %v3382 = vsel %vm407, %v3308, 0
        %v3385 = vsel %vm407, %v3309, 0
        %v3388 = vsel %vm407, %v3310, 0
        %v3391 = vsel %vm407, %v3311, 0
        %3393 = vmatprep.subr.bf16.mxu0 0
        %3394 = vmatpush1.bf16.msra.mxu0 %v3337
        %3395 = vmatprep.subr.bf16.mxu0 0
        %3396 = vmatpush1.bf16.msra.mxu0 %v3338
        %3397 = vmatprep.subr.bf16.mxu0 0
        %3398 = vmatpush1.bf16.msra.mxu0 %v3339
        %3399 = vmatprep.subr.bf16.mxu0 0
        %3400 = vmatpush1.bf16.msra.mxu0 %v3340
        %3401 = vmatprep.subr.bf16.mxu0 0
        %3402 = vmatpush1.bf16.msra.mxu0 0
        %3403 = vmatprep.subr.bf16.mxu0 0
        %3404 = vmatpush1.bf16.msra.mxu0 0
        %3405 = vmatprep.subr.bf16.mxu0 0
        %3406 = vmatpush1.bf16.msra.mxu0 0
        %3407 = vmatprep.subr.bf16.mxu0 0
        %3408 = vmatpush1.bf16.msra.mxu0 0
        %3409 = vmatprep.subr.bf16.mxu0 0
        %3410 = vmatpush1.bf16.msra.mxu0 0
        %3411 = vmatprep.subr.bf16.mxu0 0
        %3412 = vmatpush1.bf16.msra.mxu0 0
        %3413 = vmatprep.subr.bf16.mxu0 0
        %3414 = vmatpush1.bf16.msra.mxu0 0
        %3415 = vmatprep.subr.bf16.mxu0 0
        %3416 = vmatpush1.bf16.msra.mxu0 0
        %3417 = vmatprep.subr.bf16.mxu0 0
        %3418 = vmatpush1.bf16.msra.mxu0 0
        %3419 = vmatprep.subr.bf16.mxu0 0
        %3420 = vmatpush1.bf16.msra.mxu0 0
        %3421 = vmatprep.subr.bf16.mxu0 0
        %3422 = vmatpush1.bf16.msra.mxu0 0
        %3423 = vmatprep.subr.bf16.mxu0 0
        %3424 = vmatpush1.bf16.msra.mxu0 0
        %3425 = vmatprep.mubr.bf16.mxu0 0
        %3426 = vmatmul.mubr.bf16.gmra.mrb[0].mxu0 %v3346
        %v3427 = vpop.f32.mrb[0].mxu0
        %v3428 = vadd.f32 0.0, %v3427
        %v3429 = vpop.f32.mrb[0].mxu0
        %v3430 = vpop.f32.mrb[0].mxu0
        %v3431 = vadd.f32 0.0, %v3430
        %v3432 = vpop.f32.mrb[0].mxu0
        %3433 = vmatprep.mubr.bf16.mxu0 0
        %3434 = vmatmul.mubr.bf16.gmra.mrb[0].mxu0 %v3349
        %v3435 = vpop.f32.mrb[0].mxu0
        %v3436 = vadd.f32 0.0, %v3435
        %v3437 = vpop.f32.mrb[0].mxu0
        %v3438 = vpop.f32.mrb[0].mxu0
        %v3439 = vadd.f32 0.0, %v3438
        %v3440 = vpop.f32.mrb[0].mxu0
        %3441 = vmatprep.mubr.bf16.mxu0 0
        %3442 = vmatmul.mubr.bf16.gmra.mrb[0].mxu0 %v3352
        %v3443 = vpop.f32.mrb[0].mxu0
        %v3444 = vadd.f32 0.0, %v3443
        %v3445 = vpop.f32.mrb[0].mxu0
        %v3446 = vpop.f32.mrb[0].mxu0
        %v3447 = vadd.f32 0.0, %v3446
        %v3448 = vpop.f32.mrb[0].mxu0
        %3449 = vmatprep.mubr.bf16.mxu0 0
        %3450 = vmatmul.mubr.bf16.gmra.mrb[0].mxu0 %v3355
        %v3451 = vpop.f32.mrb[0].mxu0
        %v3452 = vadd.f32 0.0, %v3451
        %v3453 = vpop.f32.mrb[0].mxu0
        %v3454 = vpop.f32.mrb[0].mxu0
        %v3455 = vadd.f32 0.0, %v3454
        %v3456 = vpop.f32.mrb[0].mxu0
        %3457 = vmatprep.mubr.bf16.mxu0 0
        %3458 = vmatmul.mubr.bf16.gmra.mrb[0].mxu0 %v3358
        %v3459 = vpop.f32.mrb[0].mxu0
        %v3460 = vadd.f32 0.0, %v3459
        %v3461 = vpop.f32.mrb[0].mxu0
        %v3462 = vpop.f32.mrb[0].mxu0
        %v3463 = vadd.f32 0.0, %v3462
        %v3464 = vpop.f32.mrb[0].mxu0
        %3465 = vmatprep.mubr.bf16.mxu0 0
        %3466 = vmatmul.mubr.bf16.gmra.mrb[0].mxu0 %v3361
        %v3467 = vpop.f32.mrb[0].mxu0
        %v3468 = vadd.f32 0.0, %v3467
        %v3469 = vpop.f32.mrb[0].mxu0
        %v3470 = vpop.f32.mrb[0].mxu0
        %v3471 = vadd.f32 0.0, %v3470
        %v3472 = vpop.f32.mrb[0].mxu0
        %3473 = vmatprep.mubr.bf16.mxu0 0
        %3474 = vmatmul.mubr.bf16.gmra.mrb[0].mxu0 %v3364
        %v3475 = vpop.f32.mrb[0].mxu0
        %v3476 = vadd.f32 0.0, %v3475
        %v3477 = vpop.f32.mrb[0].mxu0
        %v3478 = vpop.f32.mrb[0].mxu0
        %v3479 = vadd.f32 0.0, %v3478
        %v3480 = vpop.f32.mrb[0].mxu0
        %3481 = vmatprep.mubr.bf16.mxu0 0
        %3482 = vmatmul.mubr.bf16.gmra.mrb[0].mxu0 %v3367
        %v3483 = vpop.f32.mrb[0].mxu0
        %v3484 = vadd.f32 0.0, %v3483
        %v3485 = vpop.f32.mrb[0].mxu0
        %v3486 = vpop.f32.mrb[0].mxu0
        %v3487 = vadd.f32 0.0, %v3486
        %v3488 = vpop.f32.mrb[0].mxu0
        %3489 = vmatprep.mubr.bf16.mxu0 0
        %3490 = vmatmul.mubr.bf16.gmra.mrb[0].mxu0 %v3370
        %v3491 = vpop.f32.mrb[0].mxu0
        %v3492 = vadd.f32 0.0, %v3491
        %v3493 = vpop.f32.mrb[0].mxu0
        %v3494 = vpop.f32.mrb[0].mxu0
        %v3495 = vadd.f32 0.0, %v3494
        %v3496 = vpop.f32.mrb[0].mxu0
        %3497 = vmatprep.mubr.bf16.mxu0 0
        %3498 = vmatmul.mubr.bf16.gmra.mrb[0].mxu0 %v3373
        %v3499 = vpop.f32.mrb[0].mxu0
        %v3500 = vadd.f32 0.0, %v3499
        %v3501 = vpop.f32.mrb[0].mxu0
        %v3502 = vpop.f32.mrb[0].mxu0
        %v3503 = vadd.f32 0.0, %v3502
        %v3504 = vpop.f32.mrb[0].mxu0
        %3505 = vmatprep.mubr.bf16.mxu0 0
        %3506 = vmatmul.mubr.bf16.gmra.mrb[0].mxu0 %v3376
        %v3507 = vpop.f32.mrb[0].mxu0
        %v3508 = vadd.f32 0.0, %v3507
        %v3509 = vpop.f32.mrb[0].mxu0
        %v3510 = vpop.f32.mrb[0].mxu0
        %v3511 = vadd.f32 0.0, %v3510
        %v3512 = vpop.f32.mrb[0].mxu0
        %3513 = vmatprep.mubr.bf16.mxu0 0
        %3514 = vmatmul.mubr.bf16.gmra.mrb[0].mxu0 %v3379
        %v3515 = vpop.f32.mrb[0].mxu0
        %v3516 = vadd.f32 0.0, %v3515
        %v3517 = vpop.f32.mrb[0].mxu0
        %v3518 = vpop.f32.mrb[0].mxu0
        %v3519 = vadd.f32 0.0, %v3518
        %v3520 = vpop.f32.mrb[0].mxu0
        %3521 = vmatprep.mubr.bf16.mxu0 0
        %3522 = vmatmul.mubr.bf16.gmra.mrb[0].mxu0 %v3382
        %v3523 = vpop.f32.mrb[0].mxu0
        %v3524 = vadd.f32 0.0, %v3523
        %v3525 = vpop.f32.mrb[0].mxu0
        %v3526 = vpop.f32.mrb[0].mxu0
        %v3527 = vadd.f32 0.0, %v3526
        %v3528 = vpop.f32.mrb[0].mxu0
        %3529 = vmatprep.mubr.bf16.mxu0 0
        %3530 = vmatmul.mubr.bf16.gmra.mrb[0].mxu0 %v3385
        %v3531 = vpop.f32.mrb[0].mxu0
        %v3532 = vadd.f32 0.0, %v3531
        %v3533 = vpop.f32.mrb[0].mxu0
        %v3534 = vpop.f32.mrb[0].mxu0
        %v3535 = vadd.f32 0.0, %v3534
        %v3536 = vpop.f32.mrb[0].mxu0
        %3537 = vmatprep.mubr.bf16.mxu0 0
        %3538 = vmatmul.mubr.bf16.gmra.mrb[0].mxu0 %v3388
        %v3539 = vpop.f32.mrb[0].mxu0
        %v3540 = vadd.f32 0.0, %v3539
        %v3541 = vpop.f32.mrb[0].mxu0
        %v3542 = vpop.f32.mrb[0].mxu0
        %v3543 = vadd.f32 0.0, %v3542
        %v3544 = vpop.f32.mrb[0].mxu0
        %3545 = vmatprep.mubr.bf16.mxu0 0
        %3546 = vmatmul.mubr.bf16.gmra.mrb[0].mxu0 %v3391
        %v3547 = vpop.f32.mrb[0].mxu0
        %v3548 = vadd.f32 0.0, %v3547
        %v3549 = vpop.f32.mrb[0].mxu0
        %v3550 = vpop.f32.mrb[0].mxu0
        %v3551 = vadd.f32 0.0, %v3550
        %v3552 = vpop.f32.mrb[0].mxu0
        %3553 = vdwg.mxu0
        %v3554 = vadd.f32 %v3263, %v3428
        %v3555 = vadd.f32 %v3264, %v3431
        %v3556 = vadd.f32 %v3265, %v3436
        %v3557 = vadd.f32 %v3266, %v3439
        %v3558 = vadd.f32 %v3267, %v3444
        %v3559 = vadd.f32 %v3268, %v3447
        %v3560 = vadd.f32 %v3269, %v3452
        %v3561 = vadd.f32 %v3270, %v3455
        %v3562 = vadd.f32 %v3271, %v3460
        %v3563 = vadd.f32 %v3272, %v3463
        %v3564 = vadd.f32 %v3273, %v3468
        %v3565 = vadd.f32 %v3274, %v3471
        %v3566 = vadd.f32 %v3275, %v3476
        %v3567 = vadd.f32 %v3276, %v3479
        %v3568 = vadd.f32 %v3277, %v3484
        %v3569 = vadd.f32 %v3278, %v3487
        %v3570 = vadd.f32 %v3279, %v3492
        %v3571 = vadd.f32 %v3280, %v3495
        %v3572 = vadd.f32 %v3281, %v3500
        %v3573 = vadd.f32 %v3282, %v3503
        %v3574 = vadd.f32 %v3283, %v3508
        %v3575 = vadd.f32 %v3284, %v3511
        %v3576 = vadd.f32 %v3285, %v3516
        %v3577 = vadd.f32 %v3286, %v3519
        %v3578 = vadd.f32 %v3287, %v3524
        %v3579 = vadd.f32 %v3288, %v3527
        %v3580 = vadd.f32 %v3289, %v3532
        %v3581 = vadd.f32 %v3290, %v3535
        %v3582 = vadd.f32 %v3291, %v3540
        %v3583 = vadd.f32 %v3292, %v3543
        %v3584 = vadd.f32 %v3293, %v3548
        %v3585 = vadd.f32 %v3294, %v3551
        %v3586 = vld [vmem:[%s287] sm:$0xff]
        %v3587 = vld [vmem:[%s287 + $0x8] sm:$0xff]
        %v3588 = vld [vmem:[%s287 + $0x10] sm:$0xff]
        %v3589 = vld [vmem:[%s287 + $0x18] sm:$0xff]
        %v3590 = vld [vmem:[%s287 + $0x20] sm:$0xff]
        %v3591 = vld [vmem:[%s287 + $0x28] sm:$0xff]
        %v3592 = vld [vmem:[%s287 + $0x30] sm:$0xff]
        %v3593 = vld [vmem:[%s287 + $0x38] sm:$0xff]
        %v3594 = vld [vmem:[%s287 + $0x40] sm:$0xff]
        %v3595 = vld [vmem:[%s287 + $0x48] sm:$0xff]
        %v3596 = vld [vmem:[%s287 + $0x50] sm:$0xff]
        %v3597 = vld [vmem:[%s287 + $0x58] sm:$0xff]
        %v3598 = vld [vmem:[%s287 + $0x60] sm:$0xff]
        %v3599 = vld [vmem:[%s287 + $0x68] sm:$0xff]
        %v3600 = vld [vmem:[%s287 + $0x70] sm:$0xff]
        %v3601 = vld [vmem:[%s287 + $0x78] sm:$0xff]
        %v3602 = vld [vmem:[%s287 + $0x80] sm:$0xff]
        %v3603 = vld [vmem:[%s287 + $0x88] sm:$0xff]
        %v3604 = vld [vmem:[%s287 + $0x90] sm:$0xff]
        %v3605 = vld [vmem:[%s287 + $0x98] sm:$0xff]
        %v3606 = vld [vmem:[%s287 + $0xa0] sm:$0xff]
        %v3607 = vld [vmem:[%s287 + $0xa8] sm:$0xff]
        %v3608 = vld [vmem:[%s287 + $0xb0] sm:$0xff]
        %v3609 = vld [vmem:[%s287 + $0xb8] sm:$0xff]
        %v3610 = vld [vmem:[%s287 + $0xc0] sm:$0xff]
        %v3611 = vld [vmem:[%s287 + $0xc8] sm:$0xff]
        %v3612 = vld [vmem:[%s287 + $0xd0] sm:$0xff]
        %v3613 = vld [vmem:[%s287 + $0xd8] sm:$0xff]
        %v3614 = vld [vmem:[%s287 + $0xe0] sm:$0xff]
        %v3615 = vld [vmem:[%s287 + $0xe8] sm:$0xff]
        %v3616 = vld [vmem:[%s287 + $0xf0] sm:$0xff]
        %v3617 = vld [vmem:[%s287 + $0xf8] sm:$0xff]
        %v3618 = vld [vmem:[%s5] sm:$0x1]
        %v3620 = vlaneseq
        %v3621 = vshrl.u32 %v3620, 7
        %v3622 = vsub.s32 0, %v3621
        %v3623 = vrot.slane %v3618, %v3622
        %v3625 = vmul.f32 %v3554, %v3623
        %v3626 = vmul.f32 %v3555, %v3623
        %v3627 = vmul.f32 %v3556, %v3623
        %v3628 = vmul.f32 %v3557, %v3623
        %v3629 = vmul.f32 %v3558, %v3623
        %v3630 = vmul.f32 %v3559, %v3623
        %v3631 = vmul.f32 %v3560, %v3623
        %v3632 = vmul.f32 %v3561, %v3623
        %v3633 = vmul.f32 %v3562, %v3623
        %v3634 = vmul.f32 %v3563, %v3623
        %v3635 = vmul.f32 %v3564, %v3623
        %v3636 = vmul.f32 %v3565, %v3623
        %v3637 = vmul.f32 %v3566, %v3623
        %v3638 = vmul.f32 %v3567, %v3623
        %v3639 = vmul.f32 %v3568, %v3623
        %v3640 = vmul.f32 %v3569, %v3623
        %v3641 = vmul.f32 %v3570, %v3623
        %v3642 = vmul.f32 %v3571, %v3623
        %v3643 = vmul.f32 %v3572, %v3623
        %v3644 = vmul.f32 %v3573, %v3623
        %v3645 = vmul.f32 %v3574, %v3623
        %v3646 = vmul.f32 %v3575, %v3623
        %v3647 = vmul.f32 %v3576, %v3623
        %v3648 = vmul.f32 %v3577, %v3623
        %v3649 = vmul.f32 %v3578, %v3623
        %v3650 = vmul.f32 %v3579, %v3623
        %v3651 = vmul.f32 %v3580, %v3623
        %v3652 = vmul.f32 %v3581, %v3623
        %v3653 = vmul.f32 %v3582, %v3623
        %v3654 = vmul.f32 %v3583, %v3623
        %v3655 = vmul.f32 %v3584, %v3623
        %v3656 = vmul.f32 %v3585, %v3623
        %v3657 = vld [vmem:[%s6] sm:$0x1]
        %v3659 = vlaneseq
        %v3660 = vshrl.u32 %v3659, 7
        %v3661 = vsub.s32 0, %v3660
        %v3662 = vrot.slane %v3657, %v3661
        %v3664 = vadd.f32 %v3625, %v3662
        %v3665 = vadd.f32 %v3626, %v3662
        %v3666 = vadd.f32 %v3627, %v3662
        %v3667 = vadd.f32 %v3628, %v3662
        %v3668 = vadd.f32 %v3629, %v3662
        %v3669 = vadd.f32 %v3630, %v3662
        %v3670 = vadd.f32 %v3631, %v3662
        %v3671 = vadd.f32 %v3632, %v3662
        %v3672 = vadd.f32 %v3633, %v3662
        %v3673 = vadd.f32 %v3634, %v3662
        %v3674 = vadd.f32 %v3635, %v3662
        %v3675 = vadd.f32 %v3636, %v3662
        %v3676 = vadd.f32 %v3637, %v3662
        %v3677 = vadd.f32 %v3638, %v3662
        %v3678 = vadd.f32 %v3639, %v3662
        %v3679 = vadd.f32 %v3640, %v3662
        %v3680 = vadd.f32 %v3641, %v3662
        %v3681 = vadd.f32 %v3642, %v3662
        %v3682 = vadd.f32 %v3643, %v3662
        %v3683 = vadd.f32 %v3644, %v3662
        %v3684 = vadd.f32 %v3645, %v3662
        %v3685 = vadd.f32 %v3646, %v3662
        %v3686 = vadd.f32 %v3647, %v3662
        %v3687 = vadd.f32 %v3648, %v3662
        %v3688 = vadd.f32 %v3649, %v3662
        %v3689 = vadd.f32 %v3650, %v3662
        %v3690 = vadd.f32 %v3651, %v3662
        %v3691 = vadd.f32 %v3652, %v3662
        %v3692 = vadd.f32 %v3653, %v3662
        %v3693 = vadd.f32 %v3654, %v3662
        %v3694 = vadd.f32 %v3655, %v3662
        %v3695 = vadd.f32 %v3656, %v3662
        %v3696 = vadd.f32 %v3664, %v3586
        %v3697 = vadd.f32 %v3665, %v3587
        %v3698 = vadd.f32 %v3666, %v3588
        %v3699 = vadd.f32 %v3667, %v3589
        %v3700 = vadd.f32 %v3668, %v3590
        %v3701 = vadd.f32 %v3669, %v3591
        %v3702 = vadd.f32 %v3670, %v3592
        %v3703 = vadd.f32 %v3671, %v3593
        %v3704 = vadd.f32 %v3672, %v3594
        %v3705 = vadd.f32 %v3673, %v3595
        %v3706 = vadd.f32 %v3674, %v3596
        %v3707 = vadd.f32 %v3675, %v3597
        %v3708 = vadd.f32 %v3676, %v3598
        %v3709 = vadd.f32 %v3677, %v3599
        %v3710 = vadd.f32 %v3678, %v3600
        %v3711 = vadd.f32 %v3679, %v3601
        %v3712 = vadd.f32 %v3680, %v3602
        %v3713 = vadd.f32 %v3681, %v3603
        %v3714 = vadd.f32 %v3682, %v3604
        %v3715 = vadd.f32 %v3683, %v3605
        %v3716 = vadd.f32 %v3684, %v3606
        %v3717 = vadd.f32 %v3685, %v3607
        %v3718 = vadd.f32 %v3686, %v3608
        %v3719 = vadd.f32 %v3687, %v3609
        %v3720 = vadd.f32 %v3688, %v3610
        %v3721 = vadd.f32 %v3689, %v3611
        %v3722 = vadd.f32 %v3690, %v3612
        %v3723 = vadd.f32 %v3691, %v3613
        %v3724 = vadd.f32 %v3692, %v3614
        %v3725 = vadd.f32 %v3693, %v3615
        %v3726 = vadd.f32 %v3694, %v3616
        %v3727 = vadd.f32 %v3695, %v3617
        %v3728 = vmax.f32 %v3696, 0.0
        %v3729 = vmax.f32 %v3697, 0.0
        %v3730 = vmax.f32 %v3698, 0.0
        %v3731 = vmax.f32 %v3699, 0.0
        %v3732 = vmax.f32 %v3700, 0.0
        %v3733 = vmax.f32 %v3701, 0.0
        %v3734 = vmax.f32 %v3702, 0.0
        %v3735 = vmax.f32 %v3703, 0.0
        %v3736 = vmax.f32 %v3704, 0.0
        %v3737 = vmax.f32 %v3705, 0.0
        %v3738 = vmax.f32 %v3706, 0.0
        %v3739 = vmax.f32 %v3707, 0.0
        %v3740 = vmax.f32 %v3708, 0.0
        %v3741 = vmax.f32 %v3709, 0.0
        %v3742 = vmax.f32 %v3710, 0.0
        %v3743 = vmax.f32 %v3711, 0.0
        %v3744 = vmax.f32 %v3712, 0.0
        %v3745 = vmax.f32 %v3713, 0.0
        %v3746 = vmax.f32 %v3714, 0.0
        %v3747 = vmax.f32 %v3715, 0.0
        %v3748 = vmax.f32 %v3716, 0.0
        %v3749 = vmax.f32 %v3717, 0.0
        %v3750 = vmax.f32 %v3718, 0.0
        %v3751 = vmax.f32 %v3719, 0.0
        %v3752 = vmax.f32 %v3720, 0.0
        %v3753 = vmax.f32 %v3721, 0.0
        %v3754 = vmax.f32 %v3722, 0.0
        %v3755 = vmax.f32 %v3723, 0.0
        %v3756 = vmax.f32 %v3724, 0.0
        %v3757 = vmax.f32 %v3725, 0.0
        %v3758 = vmax.f32 %v3726, 0.0
        %v3759 = vmax.f32 %v3727, 0.0
        %3760 = vst.msk [vmem:[%s325] sm:$0xff] %vm407, %v3728
        %3761 = vst.msk [vmem:[%s325 + $0x8] sm:$0xff] %vm407, %v3729
        %3762 = vst.msk [vmem:[%s325 + $0x10] sm:$0xff] %vm407, %v3730
        %3763 = vst.msk [vmem:[%s325 + $0x18] sm:$0xff] %vm407, %v3731
        %3764 = vst.msk [vmem:[%s325 + $0x20] sm:$0xff] %vm407, %v3732
        %3765 = vst.msk [vmem:[%s325 + $0x28] sm:$0xff] %vm407, %v3733
        %3766 = vst.msk [vmem:[%s325 + $0x30] sm:$0xff] %vm407, %v3734
        %3767 = vst.msk [vmem:[%s325 + $0x38] sm:$0xff] %vm407, %v3735
        %3768 = vst.msk [vmem:[%s325 + $0x40] sm:$0xff] %vm407, %v3736
        %3769 = vst.msk [vmem:[%s325 + $0x48] sm:$0xff] %vm407, %v3737
        %3770 = vst.msk [vmem:[%s325 + $0x50] sm:$0xff] %vm407, %v3738
        %3771 = vst.msk [vmem:[%s325 + $0x58] sm:$0xff] %vm407, %v3739
        %3772 = vst.msk [vmem:[%s325 + $0x60] sm:$0xff] %vm407, %v3740
        %3773 = vst.msk [vmem:[%s325 + $0x68] sm:$0xff] %vm407, %v3741
        %3774 = vst.msk [vmem:[%s325 + $0x70] sm:$0xff] %vm407, %v3742
        %3775 = vst.msk [vmem:[%s325 + $0x78] sm:$0xff] %vm407, %v3743
        %3776 = vst.msk [vmem:[%s325 + $0x80] sm:$0xff] %vm407, %v3744
        %3777 = vst.msk [vmem:[%s325 + $0x88] sm:$0xff] %vm407, %v3745
        %3778 = vst.msk [vmem:[%s325 + $0x90] sm:$0xff] %vm407, %v3746
        %3779 = vst.msk [vmem:[%s325 + $0x98] sm:$0xff] %vm407, %v3747
        %3780 = vst.msk [vmem:[%s325 + $0xa0] sm:$0xff] %vm407, %v3748
        %3781 = vst.msk [vmem:[%s325 + $0xa8] sm:$0xff] %vm407, %v3749
        %3782 = vst.msk [vmem:[%s325 + $0xb0] sm:$0xff] %vm407, %v3750
        %3783 = vst.msk [vmem:[%s325 + $0xb8] sm:$0xff] %vm407, %v3751
        %3784 = vst.msk [vmem:[%s325 + $0xc0] sm:$0xff] %vm407, %v3752
        %3785 = vst.msk [vmem:[%s325 + $0xc8] sm:$0xff] %vm407, %v3753
        %3786 = vst.msk [vmem:[%s325 + $0xd0] sm:$0xff] %vm407, %v3754
        %3787 = vst.msk [vmem:[%s325 + $0xd8] sm:$0xff] %vm407, %v3755
        %3788 = vst.msk [vmem:[%s325 + $0xe0] sm:$0xff] %vm407, %v3756
        %3789 = vst.msk [vmem:[%s325 + $0xe8] sm:$0xff] %vm407, %v3757
        %3790 = vst.msk [vmem:[%s325 + $0xf0] sm:$0xff] %vm407, %v3758
        %3791 = vst.msk [vmem:[%s325 + $0xf8] sm:$0xff] %vm407, %v3759
        %s3792 = sand.u32 %s185, 1
        %s3793 = scalar_lea.sflag [#allocation5], %s3792
        %s3794 = sand.u32 %s185, 1
        %s3795 = smul.addr %s3794, 256
        %s3796 = scalar_lea.vmem [#allocation9], %s3795
        // Predicated region
        $region61: #{bottleneck_forward.1} parent=47 // pred_check
          %p3797 = pneg %p195
        $region62: #{bottleneck_forward.1} parent=47 // pred_check_branch
          %3799 = sbr.rel (%p3797) target = $region64
        $region63: #{bottleneck_forward.1} parent=47 // pred_region
          %s3801 = ssub.s32 4096, 4096
          %3802 = vsyncadd %s3793, %s3801
          %s3803 = smul.addr %s25, 32
          %s3804 = smul.addr %s3803, 128
          %s3805 = scalar_lea.hbm %s7, %s3804
          %s3806 = sshll.u32 %s3796, 4
          %s3807 = int_to_ptr.vmem [resolvable:$true] %s3806
          %3812 = dma.vmem_to_hbm [thread:$0]  %s3807, 4096, %s3805, %s3793, 128, 128, 8
        $region64: #{bottleneck_forward.1} parent=47 // pred_fallthru
          _
      $region48: #{bottleneck_forward.1} parent=5 // pred_fallthru
        _
      %p3813 = scmp.le.s32.totalorder 2, %s20
      // Predicated region
      $region65: #{bottleneck_forward.1} parent=5 // pred_check
        %p3814 = pneg %p3813
      $region66: #{bottleneck_forward.1} parent=5 // pred_check_branch
        %3816 = sbr.rel (%p3814) target = $region68
      $region67: #{bottleneck_forward.1} parent=5 // pred_region
        %s3817 = ssub.s32 %s20, 2
        // Predicated region
        $region69: #{bottleneck_forward.1} parent=67 // pred_check
          %p3818 = pneg %p201
        $region70: #{bottleneck_forward.1} parent=67 // pred_check_branch
          %3820 = sbr.rel (%p3818) target = $region72
        $region71: #{bottleneck_forward.1} parent=67 // pred_region
          %s3821 = sand.u32 %s186, 1
          %s3822 = scalar_lea.sflag [#allocation5], %s3821
          %s3823 = sand.u32 %s186, 1
          %s3824 = smul.addr %s3823, 256
          %s3825 = scalar_lea.vmem [#allocation9], %s3824
          %3826 = dma.done %s3822, 4096
        $region72: #{bottleneck_forward.1} parent=67 // pred_fallthru
          _
      $region68: #{bottleneck_forward.1} parent=5 // pred_fallthru
        _
    $region6: #{bottleneck_forward.1} parent=1 // loop_footer
      %s24 = sadd.s32 1, %s20
    $region7: #{bottleneck_forward.1} parent=1 // loop_footer_branch
      %19 = sbr.rel target = $region3
    $region8: #{bottleneck_forward.1} parent=1 // loop_exit
      _
    %3827 = vsyncpa [#allocation4], 1
    %s3828 = scalar_lea.sflag [#allocation4], 1
    %3829 = vsyncpa %s3828, 1
    %3830 = vsyncpa [#allocation7], 1
    %3831 = vsyncpa [#allocation5], 1
    %s3832 = scalar_lea.sflag [#allocation5], 1
    %3833 = vsyncpa %s3832, 1

</llo_original>
